<compile_context>
chip_gen: v7x
topology: tpu7x:2x2x1
jax: 0.10.0
libtpu: 0.0.40
codegen_flags: <defaults>
</compile_context>

<pallas_src>
import jax
import jax.numpy as jnp
from jax import lax
from jax.experimental import pallas as pl
from jax.experimental.pallas import tpu as pltpu

BN_EPS = 1e-5
LANE = 128


def _vmem_limit_bytes():
    """Per-chip scoped-VMEM budget: ~3/4 of physical, capped at 96 MiB."""
    cap = 64 * 1024 * 1024  # conservative default (v7x-sized)
    try:
        info = pltpu.get_tpu_info()
        cap = int(getattr(info, "vmem_capacity_bytes", cap))
    except Exception:
        pass
    return max(16 * 1024 * 1024, min((cap * 3) // 4, 96 * 1024 * 1024))


def _pick_tile_rows(H, W, Cin, Co8, budget_bytes):
    """Largest divisor of H whose double-buffered blocks fit the VMEM budget."""
    def vmem_need(th):
        tm = th * W
        in_blk = (tm + 2 * W) * 3 * Cin * 2      # bf16 dx-folded activation block
        w_blk = 3 * 3 * Cin * LANE * 2           # bf16 weights
        out_blk = Co8 * tm * 4                   # f32 NCHW output block (pass 2)
        acc = tm * LANE * 4                      # f32 accumulator scratch
        return 2 * in_blk + 2 * w_blk + 2 * out_blk + acc + (2 << 20)

    divisors = [t for t in range(H, 0, -1) if H % t == 0]
    lane_ok = [t for t in divisors if (t * W) % LANE == 0 or t == H]
    for t in lane_ok:
        if vmem_need(t) <= budget_bytes:
            return t
    return lane_ok[-1]


def conv_block_forward(x_nchw, w_oihw, gamma, beta, tile_rows=None):
    """ConvBlock forward.

    x_nchw: (N, Cin, H, W) f32  -- PyTorch NCHW activations
    w_oihw: (Cout, Cin, 3, 3) f32 -- Conv2d weight (bias=False)
    gamma, beta: (Cout,) f32     -- BatchNorm2d affine parameters
    returns (N, Cout, H, W) f32
    """
    N, Cin, H, W = map(int, x_nchw.shape)
    Cout = int(w_oihw.shape[0])
    assert tuple(w_oihw.shape) == (Cout, Cin, 3, 3)
    assert W % 8 == 0, "W must be a multiple of 8 (aligned dy*W sublane slices)"
    assert Cout <= LANE, "kernel pads Cout up to a single 128-lane block"

    HW = H * W
    M = N * HW
    Cp = LANE                      # lane-dense padded channel count for the MXU
    Co8 = -(-Cout // 8) * 8        # sublane-aligned output-channel count

    vmem_limit = _vmem_limit_bytes()
    if tile_rows is None:
        th = _pick_tile_rows(H, W, Cin, Co8, int(vmem_limit * 0.8))
    else:
        th = int(tile_rows)
        assert H % th == 0 and ((th * W) % LANE == 0 or th == H)
    n_tiles = H // th
    TM = th * W                    # conv rows per grid step

    # ---------------- XLA-side glue (layout only, no compute) ----------------
    # NCHW -> NHWC, cast to bf16 FIRST, replicate-pad the 1-pixel border.
    x_nhwc = jnp.transpose(x_nchw, (0, 2, 3, 1)).astype(jnp.bfloat16)
    x_pad = jnp.pad(x_nhwc, ((0, 0), (1, 1), (1, 1), (0, 0)), mode="edge")

    # dx-fold (bf16, never materialized in f32):
    #   xcat[n, h', w, dx*Cin+ci] = x_pad[n, h', w+dx, ci]
    xcat = jnp.concatenate([x_pad[:, :, dx:dx + W, :] for dx in range(3)], axis=-1)
    xflat = xcat.reshape(N, (H + 2) * W, 3 * Cin)          # (N, (H+2)W, 3Cin) bf16

    # Halo-duplicated, non-overlapping row tiles: tile r holds padded rows
    # [r*th, r*th + th + 2) -> every in-kernel dy slice is tile-aligned.
    if n_tiles == 1:
        a_tiled = xflat[:, None, :, :]
    else:
        a_tiled = jnp.stack(
            [xflat[:, r * th * W:(r * th + th + 2) * W, :] for r in range(n_tiles)],
            axis=1)                                         # (N, T, (th+2)W, 3Cin)

    # Weights: OIHW -> HWIO -> (dy, dx*Cin+ci, co), pad co to 128 lanes, bf16.
    w_hwio = jnp.transpose(w_oihw, (2, 3, 1, 0)).astype(jnp.float32)  # (3,3,Cin,Cout)
    w_k = w_hwio.reshape(3, 3 * Cin, Cout)
    w_k = jnp.pad(w_k, ((0, 0), (0, 0), (0, Cp - Cout))).astype(jnp.bfloat16)

    x_spec = pl.BlockSpec((None, None, (th + 2) * W, 3 * Cin),
                          lambda n, r: (n, r, 0, 0))
    w_spec = pl.BlockSpec((3, 3 * Cin, Cp), lambda n, r: (0, 0, 0))

    # -------- pass 1: conv (3 shifted bf16 MXU dots) -> BN partial stats -----
    def conv_stats_kernel(x_ref, w_ref, sum_ref, css_ref, acc_ref):
        # x_ref: ((th+2)*W, 3Cin) bf16   w_ref: (3, 3Cin, Cp) bf16
        # sum_ref/css_ref: (1, Cp) f32   acc_ref: (TM, Cp) f32 scratch
        acc_ref[...] = jnp.dot(x_ref[0:TM, :], w_ref[0],
                               preferred_element_type=jnp.float32)
        acc_ref[...] += jnp.dot(x_ref[W:W + TM, :], w_ref[1],
                                preferred_element_type=jnp.float32)
        acc_ref[...] += jnp.dot(x_ref[2 * W:2 * W + TM, :], w_ref[2],
                                preferred_element_type=jnp.float32)
        acc = acc_ref[...]
        s = jnp.sum(acc, axis=0, keepdims=True)             # (1, Cp)
        mu = s * jnp.float32(1.0 / TM)
        d = acc - mu                                        # centered -> stable var
        sum_ref[...] = s
        css_ref[...] = jnp.sum(d * d, axis=0, keepdims=True)

    psum, pcss = pl.pallas_call(
        conv_stats_kernel,
        out_shape=(
            jax.ShapeDtypeStruct((N, n_tiles, 1, Cp), jnp.float32),
            jax.ShapeDtypeStruct((N, n_tiles, 1, Cp), jnp.float32),
        ),
        grid=(N, n_tiles),
        in_specs=[x_spec, w_spec],
        out_specs=(
            pl.BlockSpec((None, None, 1, Cp), lambda n, r: (n, r, 0, 0)),
            pl.BlockSpec((None, None, 1, Cp), lambda n, r: (n, r, 0, 0)),
        ),
        scratch_shapes=[pltpu.VMEM((TM, Cp), jnp.float32)],
        compiler_params=pltpu.CompilerParams(
            dimension_semantics=("parallel", "parallel"),
            vmem_limit_bytes=vmem_limit,
        ),
    )(a_tiled, w_k)

    # ---- tiny XLA finalize: Chan combine of per-tile stats -> scale/shift ---
    tsum = psum.reshape(-1, Cp)                             # (N*T, Cp)
    tcss = pcss.reshape(-1, Cp)
    total = jnp.sum(tsum, axis=0)                           # (Cp,)
    mean = total / jnp.float32(M)
    tmean = tsum / jnp.float32(TM)
    ss = jnp.sum(tcss, axis=0) + jnp.float32(TM) * jnp.sum(
        (tmean - mean[None, :]) ** 2, axis=0)
    var = ss / jnp.float32(M)                               # biased (PyTorch train)
    gamma_p = jnp.pad(gamma.astype(jnp.float32), (0, Cp - Cout))
    beta_p = jnp.pad(beta.astype(jnp.float32), (0, Cp - Cout))
    scale2d = (gamma_p * lax.rsqrt(var + BN_EPS)).reshape(1, Cp)
    shift2d = (beta_p - mean * gamma_p * lax.rsqrt(var + BN_EPS)).reshape(1, Cp)

    # --- pass 2: recompute conv, fuse scale*x+shift + ReLU, store NCHW tiles -
    def conv_bn_relu_kernel(x_ref, w_ref, scale_ref, shift_ref, o_ref, acc_ref):
        acc_ref[...] = jnp.dot(x_ref[0:TM, :], w_ref[0],
                               preferred_element_type=jnp.float32)
        acc_ref[...] += jnp.dot(x_ref[W:W + TM, :], w_ref[1],
                                preferred_element_type=jnp.float32)
        acc_ref[...] += jnp.dot(x_ref[2 * W:2 * W + TM, :], w_ref[2],
                                preferred_element_type=jnp.float32)
        y = jnp.maximum(acc_ref[...] * scale_ref[...] + shift_ref[...], 0.0)
        # XLU transpose (idle slot) -> (Cp, TM); keep the Co8 real channel rows
        # so the HBM store is lane-dense along H*W and the result is NCHW.
        o_ref[...] = y.T[:Co8, :]

    y_p2 = pl.pallas_call(
        conv_bn_relu_kernel,
        out_shape=jax.ShapeDtypeStruct((N, Co8, HW), jnp.float32),
        grid=(N, n_tiles),
        in_specs=[
            x_spec,
            w_spec,
            pl.BlockSpec((1, Cp), lambda n, r: (0, 0)),
            pl.BlockSpec((1, Cp), lambda n, r: (0, 0)),
        ],
        out_specs=pl.BlockSpec((None, Co8, TM), lambda n, r: (n, 0, r)),
        scratch_shapes=[pltpu.VMEM((TM, Cp), jnp.float32)],
        compiler_params=pltpu.CompilerParams(
            dimension_semantics=("parallel", "parallel"),
            vmem_limit_bytes=vmem_limit,
        ),
    )(a_tiled, w_k, scale2d, shift2d)

    out = y_p2.reshape(N, Co8, H, W)        # free reshape, already NCHW
    if Co8 != Cout:
        out = out[:, :Cout]
    return out


def conv_block_reference(x_nchw, w_oihw, gamma, beta, matmul_dtype=jnp.float32):
    """Pure-JAX reference (lax.conv); matmul_dtype lets us mirror the bf16 MXU."""
    N, Cin, H, W = x_nchw.shape
    Cout = w_oihw.shape[0]
    x_nhwc = jnp.transpose(x_nchw, (0, 2, 3, 1)).astype(jnp.float32)
    x_pad = jnp.pad(x_nhwc, ((0, 0), (1, 1), (1, 1), (0, 0)), mode="edge")
    w_hwio = jnp.transpose(w_oihw, (2, 3, 1, 0)).astype(jnp.float32)
    conv = lax.conv_general_dilated(
        x_pad.astype(matmul_dtype), w_hwio.astype(matmul_dtype),
        window_strides=(1, 1), padding="VALID",
        dimension_numbers=("NHWC", "HWIO", "NHWC"),
        preferred_element_type=jnp.float32)
    mean = jnp.mean(conv, axis=(0, 1, 2), keepdims=True)
    var = jnp.mean((conv - mean) ** 2, axis=(0, 1, 2), keepdims=True)
    g = gamma.astype(jnp.float32).reshape(1, 1, 1, Cout)
    b = beta.astype(jnp.float32).reshape(1, 1, 1, Cout)
    y = (conv - mean) * lax.rsqrt(var + BN_EPS) * g + b
    y = jnp.maximum(y, 0.0)
    return jnp.transpose(y, (0, 3, 1, 2))


if __name__ == "__main__":
    # Small shapes consistent with the module: N=2, Cin=4, H=W=16, Cout=8.
    N, Cin, H, W, Cout = 2, 4, 16, 16, 8

    key = jax.random.PRNGKey(0)
    kx, kw, kg, kb = jax.random.split(key, 4)
    x = jax.random.normal(kx, (N, Cin, H, W), dtype=jnp.float32)
    w = jax.random.normal(kw, (Cout, Cin, 3, 3), dtype=jnp.float32) * 0.1
    gamma = 1.0 + 0.1 * jax.random.normal(kg, (Cout,), dtype=jnp.float32)
    beta = 0.1 * jax.random.normal(kb, (Cout,), dtype=jnp.float32)

    fwd = jax.jit(conv_block_forward)
    out = jax.block_until_ready(fwd(x, w, gamma, beta))
    assert out.shape == (N, Cout, H, W)
    assert bool(jnp.all(jnp.isfinite(out)))

    # Structure check vs. an identically-quantized (bf16 matmul-input) reference.
    ref_bf16 = conv_block_reference(x, w, gamma, beta, matmul_dtype=jnp.bfloat16)
    err_bf16 = float(jnp.max(jnp.abs(out - ref_bf16)))
    assert jnp.allclose(out, ref_bf16, atol=1e-3, rtol=1e-3), err_bf16

    # Semantics check vs. the full-f32 PyTorch-equivalent reference (bf16 MXU
    # inputs introduce ~1e-3-level differences; BN math itself is f32).
    ref_f32 = conv_block_reference(x, w, gamma, beta, matmul_dtype=jnp.float32)
    err_f32 = float(jnp.max(jnp.abs(out - ref_f32)))
    assert jnp.allclose(out, ref_f32, atol=3e-2, rtol=3e-2), err_f32

    # Explicitly exercise the spatial row-tiling / halo / Chan-combine path
    # (2 row tiles per image instead of the auto-picked 1).
    fwd_tiled = jax.jit(
        lambda a, b, c, d: conv_block_forward(a, b, c, d, tile_rows=H // 2))
    out_t = jax.block_until_ready(fwd_tiled(x, w, gamma, beta))
    err_t = float(jnp.max(jnp.abs(out_t - ref_bf16)))
    assert jnp.allclose(out_t, ref_bf16, atol=1e-3, rtol=1e-3), err_t

    print("KERNEL_OK")
</pallas_src>

<mosaic_0001>
module attributes {stable_mosaic.version = 11 : i64} {
  func.func @conv_stats_kernel(%arg0: i32, %arg1: i32, %arg2: memref<1x1x288x12xbf16, #tpu.memory_space<vmem>>, %arg3: memref<3x12x128xbf16, #tpu.memory_space<vmem>>, %arg4: memref<1x1x1x128xf32, #tpu.memory_space<vmem>>, %arg5: memref<1x1x1x128xf32, #tpu.memory_space<vmem>>, %arg6: memref<256x128xf32, #tpu.memory_space<vmem>>) attributes {dimension_semantics = [#tpu.dimension_semantics<parallel>, #tpu.dimension_semantics<parallel>], iteration_bounds = array<i64: 2, 1>, scalar_prefetch = 0 : i64, scratch_operands = 1 : i64, tpu.core_type = #tpu.core_type<tc>, window_params = [{transform_indices = @transform_0, window_bounds = array<i64: 1, 1, 288, 12>}, {pipeline_mode = #tpu.pipeline_mode<synchronous>, transform_indices = @transform_1, window_bounds = array<i64: 3, 12, 128>}, {transform_indices = @transform_2, window_bounds = array<i64: 1, 1, 1, 128>}, {transform_indices = @transform_3, window_bounds = array<i64: 1, 1, 1, 128>}]} {
    %c0 = arith.constant 0 : index
    %c0_0 = arith.constant 0 : index
    %c0_1 = arith.constant 0 : index
    %c0_2 = arith.constant 0 : index
    %0 = vector.load %arg2[%c0, %c0_0, %c0_1, %c0_2] : memref<1x1x288x12xbf16, #tpu.memory_space<vmem>>, vector<1x1x256x12xbf16>
    %1 = vector.shape_cast %0 : vector<1x1x256x12xbf16> to vector<256x12xbf16>
    %c0_3 = arith.constant 0 : index
    %c0_4 = arith.constant 0 : index
    %c0_5 = arith.constant 0 : index
    %2 = vector.load %arg3[%c0_3, %c0_4, %c0_5] : memref<3x12x128xbf16, #tpu.memory_space<vmem>>, vector<1x12x128xbf16>
    %3 = vector.shape_cast %2 : vector<1x12x128xbf16> to vector<12x128xbf16>
    %cst = arith.constant dense<0.000000e+00> : vector<256x128xf32>
    %4 = tpu.matmul %1, %3, %cst {dimension_numbers = #tpu.dot_dimension_numbers<[1], [0], [0], [1], [0, 0, 1, 1], [], []>} : vector<256x12xbf16>, vector<12x128xbf16>, vector<256x128xf32> -> vector<256x128xf32>
    %c0_6 = arith.constant 0 : index
    %c0_7 = arith.constant 0 : index
    %5 = vector.load %arg6[%c0_6, %c0_7] : memref<256x128xf32, #tpu.memory_space<vmem>>, vector<256x128xf32>
    tpu.vector_store %arg6[%c0_6, %c0_7], %4 {strides = array<i32>} : memref<256x128xf32, #tpu.memory_space<vmem>>, vector<256x128xf32>,
    %c0_8 = arith.constant 0 : index
    %c0_9 = arith.constant 0 : index
    %6 = vector.load %arg6[%c0_8, %c0_9] : memref<256x128xf32, #tpu.memory_space<vmem>>, vector<256x128xf32>
    %c0_10 = arith.constant 0 : index
    %c0_11 = arith.constant 0 : index
    %c16 = arith.constant 16 : index
    %c0_12 = arith.constant 0 : index
    %7 = vector.load %arg2[%c0_10, %c0_11, %c16, %c0_12] : memref<1x1x288x12xbf16, #tpu.memory_space<vmem>>, vector<1x1x256x12xbf16>
    %8 = vector.shape_cast %7 : vector<1x1x256x12xbf16> to vector<256x12xbf16>
    %c1 = arith.constant 1 : index
    %c0_13 = arith.constant 0 : index
    %c0_14 = arith.constant 0 : index
    %9 = vector.load %arg3[%c1, %c0_13, %c0_14] : memref<3x12x128xbf16, #tpu.memory_space<vmem>>, vector<1x12x128xbf16>
    %10 = vector.shape_cast %9 : vector<1x12x128xbf16> to vector<12x128xbf16>
    %cst_15 = arith.constant dense<0.000000e+00> : vector<256x128xf32>
    %11 = tpu.matmul %8, %10, %cst_15 {dimension_numbers = #tpu.dot_dimension_numbers<[1], [0], [0], [1], [0, 0, 1, 1], [], []>} : vector<256x12xbf16>, vector<12x128xbf16>, vector<256x128xf32> -> vector<256x128xf32>
    %12 = arith.addf %6, %11 : vector<256x128xf32>
    %c0_16 = arith.constant 0 : index
    %c0_17 = arith.constant 0 : index
    %13 = vector.load %arg6[%c0_16, %c0_17] : memref<256x128xf32, #tpu.memory_space<vmem>>, vector<256x128xf32>
    tpu.vector_store %arg6[%c0_16, %c0_17], %12 {strides = array<i32>} : memref<256x128xf32, #tpu.memory_space<vmem>>, vector<256x128xf32>,
    %c0_18 = arith.constant 0 : index
    %c0_19 = arith.constant 0 : index
    %14 = vector.load %arg6[%c0_18, %c0_19] : memref<256x128xf32, #tpu.memory_space<vmem>>, vector<256x128xf32>
    %c0_20 = arith.constant 0 : index
    %c0_21 = arith.constant 0 : index
    %c32 = arith.constant 32 : index
    %c0_22 = arith.constant 0 : index
    %15 = vector.load %arg2[%c0_20, %c0_21, %c32, %c0_22] : memref<1x1x288x12xbf16, #tpu.memory_space<vmem>>, vector<1x1x256x12xbf16>
    %16 = vector.shape_cast %15 : vector<1x1x256x12xbf16> to vector<256x12xbf16>
    %c2 = arith.constant 2 : index
    %c0_23 = arith.constant 0 : index
    %c0_24 = arith.constant 0 : index
    %17 = vector.load %arg3[%c2, %c0_23, %c0_24] : memref<3x12x128xbf16, #tpu.memory_space<vmem>>, vector<1x12x128xbf16>
    %18 = vector.shape_cast %17 : vector<1x12x128xbf16> to vector<12x128xbf16>
    %cst_25 = arith.constant dense<0.000000e+00> : vector<256x128xf32>
    %19 = tpu.matmul %16, %18, %cst_25 {dimension_numbers = #tpu.dot_dimension_numbers<[1], [0], [0], [1], [0, 0, 1, 1], [], []>} : vector<256x12xbf16>, vector<12x128xbf16>, vector<256x128xf32> -> vector<256x128xf32>
    %20 = arith.addf %14, %19 : vector<256x128xf32>
    %c0_26 = arith.constant 0 : index
    %c0_27 = arith.constant 0 : index
    %21 = vector.load %arg6[%c0_26, %c0_27] : memref<256x128xf32, #tpu.memory_space<vmem>>, vector<256x128xf32>
    tpu.vector_store %arg6[%c0_26, %c0_27], %20 {strides = array<i32>} : memref<256x128xf32, #tpu.memory_space<vmem>>, vector<256x128xf32>,
    %c0_28 = arith.constant 0 : index
    %c0_29 = arith.constant 0 : index
    %22 = vector.load %arg6[%c0_28, %c0_29] : memref<256x128xf32, #tpu.memory_space<vmem>>, vector<256x128xf32>
    %cst_30 = arith.constant dense<0.000000e+00> : vector<128xf32>
    %23 = vector.multi_reduction <add>, %22, %cst_30 [0] : vector<256x128xf32> to vector<128xf32>
    %24 = vector.shape_cast %23 : vector<128xf32> to vector<1x128xf32>
    %cst_31 = arith.constant 3.906250e-03 : f32
    %25 = vector.broadcast %cst_31 : f32 to vector<1x128xf32>
    %26 = arith.mulf %24, %25 : vector<1x128xf32>
    %27 = vector.broadcast %26 : vector<1x128xf32> to vector<256x128xf32>
    %28 = arith.subf %22, %27 : vector<256x128xf32>
    %c0_32 = arith.constant 0 : index
    %c0_33 = arith.constant 0 : index
    %c0_34 = arith.constant 0 : index
    %c0_35 = arith.constant 0 : index
    %29 = vector.load %arg4[%c0_32, %c0_33, %c0_34, %c0_35] : memref<1x1x1x128xf32, #tpu.memory_space<vmem>>, vector<1x1x1x128xf32>
    %30 = vector.shape_cast %29 : vector<1x1x1x128xf32> to vector<1x128xf32>
    %31 = vector.shape_cast %24 : vector<1x128xf32> to vector<1x1x1x128xf32>
    tpu.vector_store %arg4[%c0_32, %c0_33, %c0_34, %c0_35], %31 {strides = array<i32>} : memref<1x1x1x128xf32, #tpu.memory_space<vmem>>, vector<1x1x1x128xf32>,
    %32 = arith.mulf %28, %28 : vector<256x128xf32>
    %cst_36 = arith.constant dense<0.000000e+00> : vector<128xf32>
    %33 = vector.multi_reduction <add>, %32, %cst_36 [0] : vector<256x128xf32> to vector<128xf32>
    %34 = vector.shape_cast %33 : vector<128xf32> to vector<1x128xf32>
    %c0_37 = arith.constant 0 : index
    %c0_38 = arith.constant 0 : index
    %c0_39 = arith.constant 0 : index
    %c0_40 = arith.constant 0 : index
    %35 = vector.load %arg5[%c0_37, %c0_38, %c0_39, %c0_40] : memref<1x1x1x128xf32, #tpu.memory_space<vmem>>, vector<1x1x1x128xf32>
    %36 = vector.shape_cast %35 : vector<1x1x1x128xf32> to vector<1x128xf32>
    %37 = vector.shape_cast %34 : vector<1x128xf32> to vector<1x1x1x128xf32>
    tpu.vector_store %arg5[%c0_37, %c0_38, %c0_39, %c0_40], %37 {strides = array<i32>} : memref<1x1x1x128xf32, #tpu.memory_space<vmem>>, vector<1x1x1x128xf32>,
    return
  }
  func.func @transform_0(%arg0: i32, %arg1: i32) -> (i32, i32, i32, i32) {
    %c0_i32 = arith.constant 0 : i32
    %c0_i32_0 = arith.constant 0 : i32
    %c0_i32_1 = arith.constant 0 : i32
    return %arg0, %arg1, %c0_i32, %c0_i32_0 : i32, i32, i32, i32
  }
  func.func @transform_1(%arg0: i32, %arg1: i32) -> (i32, i32, i32) {
    %c0_i32 = arith.constant 0 : i32
    %c0_i32_0 = arith.constant 0 : i32
    %c0_i32_1 = arith.constant 0 : i32
    %c0_i32_2 = arith.constant 0 : i32
    return %c0_i32, %c0_i32_0, %c0_i32_1 : i32, i32, i32
  }
  func.func @transform_2(%arg0: i32, %arg1: i32) -> (i32, i32, i32, i32) {
    %c0_i32 = arith.constant 0 : i32
    %c0_i32_0 = arith.constant 0 : i32
    %c0_i32_1 = arith.constant 0 : i32
    return %arg0, %arg1, %c0_i32, %c0_i32_0 : i32, i32, i32, i32
  }
  func.func @transform_3(%arg0: i32, %arg1: i32) -> (i32, i32, i32, i32) {
    %c0_i32 = arith.constant 0 : i32
    %c0_i32_0 = arith.constant 0 : i32
    %c0_i32_1 = arith.constant 0 : i32
    return %arg0, %arg1, %c0_i32, %c0_i32_0 : i32, i32, i32, i32
  }
}

module attributes {stable_mosaic.version = 11 : i64} {
  func.func @conv_bn_relu_kernel(%arg0: i32, %arg1: i32, %arg2: memref<1x1x288x12xbf16, #tpu.memory_space<vmem>>, %arg3: memref<3x12x128xbf16, #tpu.memory_space<vmem>>, %arg4: memref<1x128xf32, #tpu.memory_space<vmem>>, %arg5: memref<1x128xf32, #tpu.memory_space<vmem>>, %arg6: memref<1x8x256xf32, #tpu.memory_space<vmem>>, %arg7: memref<256x128xf32, #tpu.memory_space<vmem>>) attributes {dimension_semantics = [#tpu.dimension_semantics<parallel>, #tpu.dimension_semantics<parallel>], iteration_bounds = array<i64: 2, 1>, scalar_prefetch = 0 : i64, scratch_operands = 1 : i64, tpu.core_type = #tpu.core_type<tc>, window_params = [{transform_indices = @transform_0, window_bounds = array<i64: 1, 1, 288, 12>}, {pipeline_mode = #tpu.pipeline_mode<synchronous>, transform_indices = @transform_1, window_bounds = array<i64: 3, 12, 128>}, {pipeline_mode = #tpu.pipeline_mode<synchronous>, transform_indices = @transform_2, window_bounds = array<i64: 1, 128>}, {pipeline_mode = #tpu.pipeline_mode<synchronous>, transform_indices = @transform_3, window_bounds = array<i64: 1, 128>}, {transform_indices = @transform_4, window_bounds = array<i64: 1, 8, 256>}]} {
    %c0 = arith.constant 0 : index
    %c0_0 = arith.constant 0 : index
    %c0_1 = arith.constant 0 : index
    %c0_2 = arith.constant 0 : index
    %0 = vector.load %arg2[%c0, %c0_0, %c0_1, %c0_2] : memref<1x1x288x12xbf16, #tpu.memory_space<vmem>>, vector<1x1x256x12xbf16>
    %1 = vector.shape_cast %0 : vector<1x1x256x12xbf16> to vector<256x12xbf16>
    %c0_3 = arith.constant 0 : index
    %c0_4 = arith.constant 0 : index
    %c0_5 = arith.constant 0 : index
    %2 = vector.load %arg3[%c0_3, %c0_4, %c0_5] : memref<3x12x128xbf16, #tpu.memory_space<vmem>>, vector<1x12x128xbf16>
    %3 = vector.shape_cast %2 : vector<1x12x128xbf16> to vector<12x128xbf16>
    %cst = arith.constant dense<0.000000e+00> : vector<256x128xf32>
    %4 = tpu.matmul %1, %3, %cst {dimension_numbers = #tpu.dot_dimension_numbers<[1], [0], [0], [1], [0, 0, 1, 1], [], []>} : vector<256x12xbf16>, vector<12x128xbf16>, vector<256x128xf32> -> vector<256x128xf32>
    %c0_6 = arith.constant 0 : index
    %c0_7 = arith.constant 0 : index
    %5 = vector.load %arg7[%c0_6, %c0_7] : memref<256x128xf32, #tpu.memory_space<vmem>>, vector<256x128xf32>
    tpu.vector_store %arg7[%c0_6, %c0_7], %4 {strides = array<i32>} : memref<256x128xf32, #tpu.memory_space<vmem>>, vector<256x128xf32>,
    %c0_8 = arith.constant 0 : index
    %c0_9 = arith.constant 0 : index
    %6 = vector.load %arg7[%c0_8, %c0_9] : memref<256x128xf32, #tpu.memory_space<vmem>>, vector<256x128xf32>
    %c0_10 = arith.constant 0 : index
    %c0_11 = arith.constant 0 : index
    %c16 = arith.constant 16 : index
    %c0_12 = arith.constant 0 : index
    %7 = vector.load %arg2[%c0_10, %c0_11, %c16, %c0_12] : memref<1x1x288x12xbf16, #tpu.memory_space<vmem>>, vector<1x1x256x12xbf16>
    %8 = vector.shape_cast %7 : vector<1x1x256x12xbf16> to vector<256x12xbf16>
    %c1 = arith.constant 1 : index
    %c0_13 = arith.constant 0 : index
    %c0_14 = arith.constant 0 : index
    %9 = vector.load %arg3[%c1, %c0_13, %c0_14] : memref<3x12x128xbf16, #tpu.memory_space<vmem>>, vector<1x12x128xbf16>
    %10 = vector.shape_cast %9 : vector<1x12x128xbf16> to vector<12x128xbf16>
    %cst_15 = arith.constant dense<0.000000e+00> : vector<256x128xf32>
    %11 = tpu.matmul %8, %10, %cst_15 {dimension_numbers = #tpu.dot_dimension_numbers<[1], [0], [0], [1], [0, 0, 1, 1], [], []>} : vector<256x12xbf16>, vector<12x128xbf16>, vector<256x128xf32> -> vector<256x128xf32>
    %12 = arith.addf %6, %11 : vector<256x128xf32>
    %c0_16 = arith.constant 0 : index
    %c0_17 = arith.constant 0 : index
    %13 = vector.load %arg7[%c0_16, %c0_17] : memref<256x128xf32, #tpu.memory_space<vmem>>, vector<256x128xf32>
    tpu.vector_store %arg7[%c0_16, %c0_17], %12 {strides = array<i32>} : memref<256x128xf32, #tpu.memory_space<vmem>>, vector<256x128xf32>,
    %c0_18 = arith.constant 0 : index
    %c0_19 = arith.constant 0 : index
    %14 = vector.load %arg7[%c0_18, %c0_19] : memref<256x128xf32, #tpu.memory_space<vmem>>, vector<256x128xf32>
    %c0_20 = arith.constant 0 : index
    %c0_21 = arith.constant 0 : index
    %c32 = arith.constant 32 : index
    %c0_22 = arith.constant 0 : index
    %15 = vector.load %arg2[%c0_20, %c0_21, %c32, %c0_22] : memref<1x1x288x12xbf16, #tpu.memory_space<vmem>>, vector<1x1x256x12xbf16>
    %16 = vector.shape_cast %15 : vector<1x1x256x12xbf16> to vector<256x12xbf16>
    %c2 = arith.constant 2 : index
    %c0_23 = arith.constant 0 : index
    %c0_24 = arith.constant 0 : index
    %17 = vector.load %arg3[%c2, %c0_23, %c0_24] : memref<3x12x128xbf16, #tpu.memory_space<vmem>>, vector<1x12x128xbf16>
    %18 = vector.shape_cast %17 : vector<1x12x128xbf16> to vector<12x128xbf16>
    %cst_25 = arith.constant dense<0.000000e+00> : vector<256x128xf32>
    %19 = tpu.matmul %16, %18, %cst_25 {dimension_numbers = #tpu.dot_dimension_numbers<[1], [0], [0], [1], [0, 0, 1, 1], [], []>} : vector<256x12xbf16>, vector<12x128xbf16>, vector<256x128xf32> -> vector<256x128xf32>
    %20 = arith.addf %14, %19 : vector<256x128xf32>
    %c0_26 = arith.constant 0 : index
    %c0_27 = arith.constant 0 : index
    %21 = vector.load %arg7[%c0_26, %c0_27] : memref<256x128xf32, #tpu.memory_space<vmem>>, vector<256x128xf32>
    tpu.vector_store %arg7[%c0_26, %c0_27], %20 {strides = array<i32>} : memref<256x128xf32, #tpu.memory_space<vmem>>, vector<256x128xf32>,
    %c0_28 = arith.constant 0 : index
    %c0_29 = arith.constant 0 : index
    %22 = vector.load %arg7[%c0_28, %c0_29] : memref<256x128xf32, #tpu.memory_space<vmem>>, vector<256x128xf32>
    %c0_30 = arith.constant 0 : index
    %c0_31 = arith.constant 0 : index
    %23 = vector.load %arg4[%c0_30, %c0_31] : memref<1x128xf32, #tpu.memory_space<vmem>>, vector<1x128xf32>
    %24 = vector.broadcast %23 : vector<1x128xf32> to vector<256x128xf32>
    %25 = arith.mulf %22, %24 : vector<256x128xf32>
    %c0_32 = arith.constant 0 : index
    %c0_33 = arith.constant 0 : index
    %26 = vector.load %arg5[%c0_32, %c0_33] : memref<1x128xf32, #tpu.memory_space<vmem>>, vector<1x128xf32>
    %27 = vector.broadcast %26 : vector<1x128xf32> to vector<256x128xf32>
    %28 = arith.addf %25, %27 : vector<256x128xf32>
    %cst_34 = arith.constant 0.000000e+00 : f32
    %29 = vector.broadcast %cst_34 : f32 to vector<256x128xf32>
    %30 = arith.maximumf %28, %29 : vector<256x128xf32>
    %31 = tpu.transpose %30, [1, 0] : vector<256x128xf32> -> vector<128x256xf32>
    %32 = vector.extract_strided_slice %31 {offsets = [0, 0], sizes = [8, 256], strides = [1, 1]} : vector<128x256xf32> to vector<8x256xf32>
    %c0_35 = arith.constant 0 : index
    %c0_36 = arith.constant 0 : index
    %c0_37 = arith.constant 0 : index
    %33 = vector.load %arg6[%c0_35, %c0_36, %c0_37] : memref<1x8x256xf32, #tpu.memory_space<vmem>>, vector<1x8x256xf32>
    %34 = vector.shape_cast %33 : vector<1x8x256xf32> to vector<8x256xf32>
    %35 = vector.shape_cast %32 : vector<8x256xf32> to vector<1x8x256xf32>
    tpu.vector_store %arg6[%c0_35, %c0_36, %c0_37], %35 {strides = array<i32>} : memref<1x8x256xf32, #tpu.memory_space<vmem>>, vector<1x8x256xf32>,
    return
  }
  func.func @transform_0(%arg0: i32, %arg1: i32) -> (i32, i32, i32, i32) {
    %c0_i32 = arith.constant 0 : i32
    %c0_i32_0 = arith.constant 0 : i32
    %c0_i32_1 = arith.constant 0 : i32
    return %arg0, %arg1, %c0_i32, %c0_i32_0 : i32, i32, i32, i32
  }
  func.func @transform_1(%arg0: i32, %arg1: i32) -> (i32, i32, i32) {
    %c0_i32 = arith.constant 0 : i32
    %c0_i32_0 = arith.constant 0 : i32
    %c0_i32_1 = arith.constant 0 : i32
    %c0_i32_2 = arith.constant 0 : i32
    return %c0_i32, %c0_i32_0, %c0_i32_1 : i32, i32, i32
  }
  func.func @transform_2(%arg0: i32, %arg1: i32) -> (i32, i32) {
    %c0_i32 = arith.constant 0 : i32
    %c0_i32_0 = arith.constant 0 : i32
    %c0_i32_1 = arith.constant 0 : i32
    return %c0_i32, %c0_i32_0 : i32, i32
  }
  func.func @transform_3(%arg0: i32, %arg1: i32) -> (i32, i32) {
    %c0_i32 = arith.constant 0 : i32
    %c0_i32_0 = arith.constant 0 : i32
    %c0_i32_1 = arith.constant 0 : i32
    return %c0_i32, %c0_i32_0 : i32, i32
  }
  func.func @transform_4(%arg0: i32, %arg1: i32) -> (i32, i32, i32) {
    %c0_i32 = arith.constant 0 : i32
    %c0_i32_0 = arith.constant 0 : i32
    return %arg0, %c0_i32, %arg1 : i32, i32, i32
  }
}

</mosaic_0001>

<llo_original>
// kernel: conv_block_forward.2
$region0: #{conv_block_forward.2}
  #allocation0 [shape = 'u32[]', space=smem, size = 0x4, offset = 0x4, fixed_abs, tag = 'smem constant byte address 0x4 - core index']
  #allocation1 [shape = 'u32[144,128]{1,0:T(1,128)}', space=vmem, size = 0x12000, scoped, tag = 'internal scratch']
  #allocation2 [shape = 'f32[256,128]{1,0:T(8,128)}', space=vmem, size = 0x20000, scoped, tag = 'scratch operand']
  %s0 = inlined_call_operand.vmem [shape: bf16[2,1,288,12], index: 0, kind: input, shape index: {}]
  %s1 = inlined_call_operand.vmem [shape: bf16[3,12,128], index: 1, kind: input, shape index: {}]
  %s2 = inlined_call_operand.vmem [shape: f32[2,1,1,128], index: 2, kind: output, shape index: {0}]
  %s3 = inlined_call_operand.vmem [shape: f32[2,1,1,128], index: 3, kind: output, shape index: {1}]
  %4 = xla_tuple %s2, %s3
  %s5 = sld [smem:[#allocation0]]
  $region49: #{conv_block_forward.2} parent=0
    _
  %s7 = ssub.s32 1, %s5
  %s8 = scalar_select 0, %s7, %s5
  loop: start=0, step=1, limit=4
  $region2: #{conv_block_forward.2} parent=0 // loop_pre_header
    _
  $region3: #{conv_block_forward.2} parent=0 // loop_header
    %s10 = sphi 0, %s14
    %p11 = scmp.ge.s32.totalorder %s10, 4
    %s17 = sphi 0, %s29
    %s18 = sphi 0, %s25
    %s19 = sphi 0, %s17
    %s20 = sphi 0, %s18
    %s21 = sphi 0, %s19
    %s22 = sphi 0, %s20
    %s34 = sphi 0, %s36
    %s37 = sphi 0, %s34
    %s38 = sphi 0, %s37
    %s54 = sphi 0, %s38
    %s58 = sphi 0, %s58
    %s60 = sphi 0, %s58
    %s61 = sphi 0, %s60
    %s75 = sphi 0, %s61
    %s83 = sphi 0, %s85
    %s86 = sphi 0, %s83
    %s87 = sphi 0, %s86
    %s103 = sphi 0, %s87
    %s111 = sphi 0, %s113
    %s114 = sphi 0, %s111
    %s115 = sphi 0, %s114
    %s131 = sphi 0, %s115
  $region4: #{conv_block_forward.2} parent=0 // loop_header_branch
    %13 = sbr.rel (%p11) target = $region8
  $region5: #{conv_block_forward.2} parent=0 // loop_body
    %s15 = ssub.s32 %s10, 1
    %s16 = ssub.s32 %s10, 2
    %s23 = sadd.s32 1, %s18
    %p24 = scmp.ge.s32.totalorder %s23, 1
    %s25 = scalar_select %p24, 0, %s23
    %s26 = sadd.s32 1, %s17
    %s27 = scalar_select %p24, %s26, %s17
    %p28 = scmp.ge.s32.totalorder %s27, 2
    %s29 = scalar_select %p28, 0, %s27
    %s30 = ssub.s32 %s17, %s29
    %s31 = ssub.s32 %s18, %s25
    %s32 = sor.u32 %s30, %s31
    %p33 = scmp.eq.s32.totalorder %s32, 0
    %s35 = sadd.s32 %s34, 1
    %s36 = scalar_select %p33, %s34, %s35
    %p39 = pneg %p33
    %p40 = scmp.eq.s32.totalorder %s10, 1
    %p41 = por %p39, %p40
    %p42 = scmp.ne.s32.totalorder %s34, %s37
    %p43 = scmp.eq.s32.totalorder %s10, 0
    %p44 = por %p42, %p43
    %p45 = scmp.ne.s32.totalorder %s34, %s37
    %p46 = scmp.eq.s32.totalorder %s15, 1
    %p47 = por %p45, %p46
    %p48 = scmp.ne.s32.totalorder %s37, %s38
    %p49 = scmp.eq.s32.totalorder %s15, 0
    %p50 = por %p48, %p49
    %p51 = scmp.ne.s32.totalorder %s37, %s38
    %p52 = scmp.eq.s32.totalorder %s16, 1
    %p53 = por %p51, %p52
    %p55 = scmp.ne.s32.totalorder %s38, %s54
    %p56 = scmp.eq.s32.totalorder %s16, 0
    %p57 = por %p55, %p56
    %s59 = sadd.s32 %s58, 1
    %p62 = scmp.eq.s32.totalorder %s10, 1
    %p63 = scmp.ne.s32.totalorder %s58, %s60
    %p64 = scmp.eq.s32.totalorder %s10, 0
    %p65 = por %p63, %p64
    %p66 = scmp.ne.s32.totalorder %s58, %s60
    %p67 = scmp.eq.s32.totalorder %s15, 1
    %p68 = por %p66, %p67
    %p69 = scmp.ne.s32.totalorder %s60, %s61
    %p70 = scmp.eq.s32.totalorder %s15, 0
    %p71 = por %p69, %p70
    %p72 = scmp.ne.s32.totalorder %s60, %s61
    %p73 = scmp.eq.s32.totalorder %s16, 1
    %p74 = por %p72, %p73
    %p76 = scmp.ne.s32.totalorder %s61, %s75
    %p77 = scmp.eq.s32.totalorder %s16, 0
    %p78 = por %p76, %p77
    %s79 = ssub.s32 %s17, %s29
    %s80 = ssub.s32 %s18, %s25
    %s81 = sor.u32 %s79, %s80
    %p82 = scmp.eq.s32.totalorder %s81, 0
    %s84 = sadd.s32 %s83, 1
    %s85 = scalar_select %p82, %s83, %s84
    %p88 = pneg %p82
    %p89 = scmp.eq.s32.totalorder %s10, 1
    %p90 = por %p88, %p89
    %p91 = scmp.ne.s32.totalorder %s83, %s86
    %p92 = scmp.eq.s32.totalorder %s10, 0
    %p93 = por %p91, %p92
    %p94 = scmp.ne.s32.totalorder %s83, %s86
    %p95 = scmp.eq.s32.totalorder %s15, 1
    %p96 = por %p94, %p95
    %p97 = scmp.ne.s32.totalorder %s86, %s87
    %p98 = scmp.eq.s32.totalorder %s15, 0
    %p99 = por %p97, %p98
    %p100 = scmp.ne.s32.totalorder %s86, %s87
    %p101 = scmp.eq.s32.totalorder %s16, 1
    %p102 = por %p100, %p101
    %p104 = scmp.ne.s32.totalorder %s87, %s103
    %p105 = scmp.eq.s32.totalorder %s16, 0
    %p106 = por %p104, %p105
    %s107 = ssub.s32 %s17, %s29
    %s108 = ssub.s32 %s18, %s25
    %s109 = sor.u32 %s107, %s108
    %p110 = scmp.eq.s32.totalorder %s109, 0
    %s112 = sadd.s32 %s111, 1
    %s113 = scalar_select %p110, %s111, %s112
    %p116 = pneg %p110
    %p117 = scmp.eq.s32.totalorder %s10, 1
    %p118 = por %p116, %p117
    %p119 = scmp.ne.s32.totalorder %s111, %s114
    %p120 = scmp.eq.s32.totalorder %s10, 0
    %p121 = por %p119, %p120
    %p122 = scmp.ne.s32.totalorder %s111, %s114
    %p123 = scmp.eq.s32.totalorder %s15, 1
    %p124 = por %p122, %p123
    %p125 = scmp.ne.s32.totalorder %s114, %s115
    %p126 = scmp.eq.s32.totalorder %s15, 0
    %p127 = por %p125, %p126
    %p128 = scmp.ne.s32.totalorder %s114, %s115
    %p129 = scmp.eq.s32.totalorder %s16, 1
    %p130 = por %p128, %p129
    %p132 = scmp.ne.s32.totalorder %s115, %s131
    %p133 = scmp.eq.s32.totalorder %s16, 0
    %p134 = por %p132, %p133
    %p135 = scmp.le.s32.totalorder 1, %s10
    %p136 = scmp.lt.s32.totalorder %s10, 3
    %p137 = pnand %p135, %p136
    %p138 = pneg %p137
    // Predicated region
    $region9: #{conv_block_forward.2} parent=5 // pred_check
      _
    $region10: #{conv_block_forward.2} parent=5 // pred_check_branch
      %140 = sbr.rel (%p137) target = $region12
    $region11: #{conv_block_forward.2} parent=5 // pred_region
      %s141 = ssub.s32 %s10, 1
      // Predicated region
      $region13: #{conv_block_forward.2} parent=11 // pred_check
        %p142 = pneg %p71
      $region14: #{conv_block_forward.2} parent=11 // pred_check_branch
        %144 = sbr.rel (%p142) target = $region16
      $region15: #{conv_block_forward.2} parent=11 // pred_region
        _
      $region16: #{conv_block_forward.2} parent=11 // pred_fallthru
        _
    $region12: #{conv_block_forward.2} parent=5 // pred_fallthru
      _
    %p145 = scmp.lt.s32.totalorder %s10, 2
    // Predicated region
    $region17: #{conv_block_forward.2} parent=5 // pred_check
      %p146 = pneg %p145
    $region18: #{conv_block_forward.2} parent=5 // pred_check_branch
      %148 = sbr.rel (%p146) target = $region20
    $region19: #{conv_block_forward.2} parent=5 // pred_region
      // Predicated region
      $region21: #{conv_block_forward.2} parent=19 // pred_check
        %p149 = pneg %p44
      $region22: #{conv_block_forward.2} parent=19 // pred_check_branch
        %151 = sbr.rel (%p149) target = $region24
      $region23: #{conv_block_forward.2} parent=19 // pred_region
        %p152 = scmp.lt.s32.totalorder %s17, 1
        %s153 = scalar_select %p152, %s17, 1
        %p154 = scmp.lt.s32.totalorder %s18, 0
        %s155 = scalar_select %p154, %s18, 0
        %s156 = smul.addr %s155, 36
        %s157 = smul.addr %s153, 36
        %s158 = sadd.s32 %s156, %s157
        %s159 = smul.addr %s158, 4
        %s160 = scalar_lea.vmem %s0, %s159
      $region24: #{conv_block_forward.2} parent=19 // pred_fallthru
        _
    $region20: #{conv_block_forward.2} parent=5 // pred_fallthru
      _
    %p161 = scmp.le.s32.totalorder 1, %s10
    %p162 = scmp.lt.s32.totalorder %s10, 3
    %p163 = pnand %p161, %p162
    %p164 = pneg %p163
    // Predicated region
    $region25: #{conv_block_forward.2} parent=5 // pred_check
      _
    $region26: #{conv_block_forward.2} parent=5 // pred_check_branch
      %166 = sbr.rel (%p163) target = $region28
    $region27: #{conv_block_forward.2} parent=5 // pred_region
      %s167 = ssub.s32 %s10, 1
      %p168 = scmp.lt.s32.totalorder %s19, 1
      %s169 = scalar_select %p168, %s19, 1
      %p170 = scmp.lt.s32.totalorder %s20, 0
      %s171 = scalar_select %p170, %s20, 0
      %s172 = smul.addr %s171, 36
      %s173 = smul.addr %s169, 36
      %s174 = sadd.s32 %s172, %s173
      %s175 = smul.addr %s174, 4
      %s176 = scalar_lea.vmem %s0, %s175
      %p177 = pneg %p50
      %p178 = pneg %p47
      %p179 = pneg %p71
      %p180 = pneg %p68
      %p181 = pneg %p99
      %p182 = pneg %p96
      %p183 = scmp.lt.s32.totalorder %s19, 1
      %s184 = scalar_select %p183, %s19, 1
      %p185 = scmp.lt.s32.totalorder %s20, 0
      %s186 = scalar_select %p185, %s20, 0
      %s187 = sadd.s32 %s186, %s184
      %s188 = scalar_lea.vmem %s2, %s187
      %p189 = pneg %p127
      %p190 = pneg %p124
      %p191 = scmp.lt.s32.totalorder %s19, 1
      %s192 = scalar_select %p191, %s19, 1
      %p193 = scmp.lt.s32.totalorder %s20, 0
      %s194 = scalar_select %p193, %s20, 0
      %s195 = sadd.s32 %s194, %s192
      %s196 = scalar_lea.vmem %s3, %s195
      %p197 = scmp.lt.s32.totalorder %s19, 1
      %s198 = scalar_select %p197, %s19, 1
      %p199 = scmp.lt.s32.totalorder %s20, 0
      %s200 = scalar_select %p199, %s20, 0
      %s201 = smul.addr %s200, 36
      %s202 = smul.addr %s198, 36
      %s203 = sadd.s32 %s201, %s202
      %s204 = smul.addr %s203, 4
      %s205 = scalar_lea.vmem %s0, %s204
      %p206 = scmp.lt.s32.totalorder %s19, 1
      %s207 = scalar_select %p206, %s19, 1
      %p208 = scmp.lt.s32.totalorder %s20, 0
      %s209 = scalar_select %p208, %s20, 0
      %s210 = sadd.s32 %s209, %s207
      %s211 = scalar_lea.vmem %s2, %s210
      %p212 = scmp.lt.s32.totalorder %s19, 1
      %s213 = scalar_select %p212, %s19, 1
      %p214 = scmp.lt.s32.totalorder %s20, 0
      %s215 = scalar_select %p214, %s20, 0
      %s216 = sadd.s32 %s215, %s213
      %s217 = scalar_lea.vmem %s3, %s216
      %v219 = vld [vmem:[%s205] sm:$0xf]
      %v220 = vld [vmem:[%s205 + $0x4] sm:$0xf]
      %v221 = vld [vmem:[%s205 + $0x8] sm:$0xf]
      %v222 = vld [vmem:[%s205 + $0xc] sm:$0xf]
      %v223 = vld [vmem:[%s205 + $0x10] sm:$0xf]
      %v224 = vld [vmem:[%s205 + $0x14] sm:$0xf]
      %v225 = vld [vmem:[%s205 + $0x18] sm:$0xf]
      %v226 = vld [vmem:[%s205 + $0x1c] sm:$0xf]
      %v227 = vld [vmem:[%s205 + $0x20] sm:$0xf]
      %v228 = vld [vmem:[%s205 + $0x24] sm:$0xf]
      %v229 = vld [vmem:[%s205 + $0x28] sm:$0xf]
      %v230 = vld [vmem:[%s205 + $0x2c] sm:$0xf]
      %v231 = vld [vmem:[%s205 + $0x30] sm:$0xf]
      %v232 = vld [vmem:[%s205 + $0x34] sm:$0xf]
      %v233 = vld [vmem:[%s205 + $0x38] sm:$0xf]
      %v234 = vld [vmem:[%s205 + $0x3c] sm:$0xf]
      %v235 = vld [vmem:[%s205 + $0x40] sm:$0xf]
      %v236 = vld [vmem:[%s205 + $0x44] sm:$0xf]
      %v237 = vld [vmem:[%s205 + $0x48] sm:$0xf]
      %v238 = vld [vmem:[%s205 + $0x4c] sm:$0xf]
      %v239 = vld [vmem:[%s205 + $0x50] sm:$0xf]
      %v240 = vld [vmem:[%s205 + $0x54] sm:$0xf]
      %v241 = vld [vmem:[%s205 + $0x58] sm:$0xf]
      %v242 = vld [vmem:[%s205 + $0x5c] sm:$0xf]
      %v243 = vld [vmem:[%s205 + $0x60] sm:$0xf]
      %v244 = vld [vmem:[%s205 + $0x64] sm:$0xf]
      %v245 = vld [vmem:[%s205 + $0x68] sm:$0xf]
      %v246 = vld [vmem:[%s205 + $0x6c] sm:$0xf]
      %v247 = vld [vmem:[%s205 + $0x70] sm:$0xf]
      %v248 = vld [vmem:[%s205 + $0x74] sm:$0xf]
      %v249 = vld [vmem:[%s205 + $0x78] sm:$0xf]
      %v250 = vld [vmem:[%s205 + $0x7c] sm:$0xf]
      %v251 = vld [vmem:[%s1] sm:$0xf]
      %v252 = vld [vmem:[%s1 + $0x4] sm:$0x3]
      %v285 = vunpack.c.l.b16 %v219
      %v286 = vunpack.c.l.b16 %v220
      %v287 = vunpack.c.l.b16 %v221
      %v288 = vunpack.c.l.b16 %v222
      %v289 = vunpack.c.l.b16 %v223
      %v290 = vunpack.c.l.b16 %v224
      %v291 = vunpack.c.l.b16 %v225
      %v292 = vunpack.c.l.b16 %v226
      %v293 = vunpack.c.l.b16 %v227
      %v294 = vunpack.c.l.b16 %v228
      %v295 = vunpack.c.l.b16 %v229
      %v296 = vunpack.c.l.b16 %v230
      %v297 = vunpack.c.l.b16 %v231
      %v298 = vunpack.c.l.b16 %v232
      %v299 = vunpack.c.l.b16 %v233
      %v300 = vunpack.c.l.b16 %v234
      %v301 = vunpack.c.l.b16 %v235
      %v302 = vunpack.c.l.b16 %v236
      %v303 = vunpack.c.l.b16 %v237
      %v304 = vunpack.c.l.b16 %v238
      %v305 = vunpack.c.l.b16 %v239
      %v306 = vunpack.c.l.b16 %v240
      %v307 = vunpack.c.l.b16 %v241
      %v308 = vunpack.c.l.b16 %v242
      %v309 = vunpack.c.l.b16 %v243
      %v310 = vunpack.c.l.b16 %v244
      %v311 = vunpack.c.l.b16 %v245
      %v312 = vunpack.c.l.b16 %v246
      %v313 = vunpack.c.l.b16 %v247
      %v314 = vunpack.c.l.b16 %v248
      %v315 = vunpack.c.l.b16 %v249
      %v316 = vunpack.c.l.b16 %v250
      %v317 = vpack.c.b16 %v286, %v285
      %v318 = vpack.c.b16 %v288, %v287
      %v319 = vpack.c.b16 %v290, %v289
      %v320 = vpack.c.b16 %v292, %v291
      %v321 = vpack.c.b16 %v294, %v293
      %v322 = vpack.c.b16 %v296, %v295
      %v323 = vpack.c.b16 %v298, %v297
      %v324 = vpack.c.b16 %v300, %v299
      %v325 = vpack.c.b16 %v302, %v301
      %v326 = vpack.c.b16 %v304, %v303
      %v327 = vpack.c.b16 %v306, %v305
      %v328 = vpack.c.b16 %v308, %v307
      %v329 = vpack.c.b16 %v310, %v309
      %v330 = vpack.c.b16 %v312, %v311
      %v331 = vpack.c.b16 %v314, %v313
      %v332 = vpack.c.b16 %v316, %v315
      %v335 = vunpack.c.l.b16 %v251
      %v336 = vunpack.c.l.b16 %v252
      %v337 = vpack.c.b16 %v336, %v335
      %vm338 = vcmask 97280
      %v340 = vsel %vm338, %v317, 0
      %v343 = vsel %vm338, %v318, 0
      %v346 = vsel %vm338, %v319, 0
      %v349 = vsel %vm338, %v320, 0
      %v352 = vsel %vm338, %v321, 0
      %v355 = vsel %vm338, %v322, 0
      %v358 = vsel %vm338, %v323, 0
      %v361 = vsel %vm338, %v324, 0
      %v364 = vsel %vm338, %v325, 0
      %v367 = vsel %vm338, %v326, 0
      %v370 = vsel %vm338, %v327, 0
      %v373 = vsel %vm338, %v328, 0
      %v376 = vsel %vm338, %v329, 0
      %v379 = vsel %vm338, %v330, 0
      %v382 = vsel %vm338, %v331, 0
      %v385 = vsel %vm338, %v332, 0
      %vm387 = vcmask 1045504
      %v389 = vsel %vm387, %v337, 0
      %391 = vmatprep.subr.bf16.mxu0 0
      %392 = vmatpush1.bf16.msra.mxu0 %v389
      %393 = vmatprep.subr.bf16.mxu0 0
      %394 = vmatpush1.bf16.msra.mxu0 0
      %395 = vmatprep.subr.bf16.mxu0 0
      %396 = vmatpush1.bf16.msra.mxu0 0
      %397 = vmatprep.subr.bf16.mxu0 0
      %398 = vmatpush1.bf16.msra.mxu0 0
      %399 = vmatprep.subr.bf16.mxu0 0
      %400 = vmatpush1.bf16.msra.mxu0 0
      %401 = vmatprep.subr.bf16.mxu0 0
      %402 = vmatpush1.bf16.msra.mxu0 0
      %403 = vmatprep.subr.bf16.mxu0 0
      %404 = vmatpush1.bf16.msra.mxu0 0
      %405 = vmatprep.subr.bf16.mxu0 0
      %406 = vmatpush1.bf16.msra.mxu0 0
      %407 = vmatprep.subr.bf16.mxu0 0
      %408 = vmatpush1.bf16.msra.mxu0 0
      %409 = vmatprep.subr.bf16.mxu0 0
      %410 = vmatpush1.bf16.msra.mxu0 0
      %411 = vmatprep.subr.bf16.mxu0 0
      %412 = vmatpush1.bf16.msra.mxu0 0
      %413 = vmatprep.subr.bf16.mxu0 0
      %414 = vmatpush1.bf16.msra.mxu0 0
      %415 = vmatprep.subr.bf16.mxu0 0
      %416 = vmatpush1.bf16.msra.mxu0 0
      %417 = vmatprep.subr.bf16.mxu0 0
      %418 = vmatpush1.bf16.msra.mxu0 0
      %419 = vmatprep.subr.bf16.mxu0 0
      %420 = vmatpush1.bf16.msra.mxu0 0
      %421 = vmatprep.subr.bf16.mxu0 0
      %422 = vmatpush1.bf16.msra.mxu0 0
      %423 = vmatprep.mubr.bf16.mxu0 0
      %424 = vmatmul.mubr.bf16.gmra.mrb[0].mxu0 %v340
      %v425 = vpop.f32.mrb[0].mxu0
      %v426 = vadd.f32 0.0, %v425
      %v427 = vpop.f32.mrb[0].mxu0
      %v428 = vpop.f32.mrb[0].mxu0
      %v429 = vadd.f32 0.0, %v428
      %v430 = vpop.f32.mrb[0].mxu0
      %431 = vmatprep.mubr.bf16.mxu0 0
      %432 = vmatmul.mubr.bf16.gmra.mrb[0].mxu0 %v343
      %v433 = vpop.f32.mrb[0].mxu0
      %v434 = vadd.f32 0.0, %v433
      %v435 = vpop.f32.mrb[0].mxu0
      %v436 = vpop.f32.mrb[0].mxu0
      %v437 = vadd.f32 0.0, %v436
      %v438 = vpop.f32.mrb[0].mxu0
      %439 = vmatprep.mubr.bf16.mxu0 0
      %440 = vmatmul.mubr.bf16.gmra.mrb[0].mxu0 %v346
      %v441 = vpop.f32.mrb[0].mxu0
      %v442 = vadd.f32 0.0, %v441
      %v443 = vpop.f32.mrb[0].mxu0
      %v444 = vpop.f32.mrb[0].mxu0
      %v445 = vadd.f32 0.0, %v444
      %v446 = vpop.f32.mrb[0].mxu0
      %447 = vmatprep.mubr.bf16.mxu0 0
      %448 = vmatmul.mubr.bf16.gmra.mrb[0].mxu0 %v349
      %v449 = vpop.f32.mrb[0].mxu0
      %v450 = vadd.f32 0.0, %v449
      %v451 = vpop.f32.mrb[0].mxu0
      %v452 = vpop.f32.mrb[0].mxu0
      %v453 = vadd.f32 0.0, %v452
      %v454 = vpop.f32.mrb[0].mxu0
      %455 = vmatprep.mubr.bf16.mxu0 0
      %456 = vmatmul.mubr.bf16.gmra.mrb[0].mxu0 %v352
      %v457 = vpop.f32.mrb[0].mxu0
      %v458 = vadd.f32 0.0, %v457
      %v459 = vpop.f32.mrb[0].mxu0
      %v460 = vpop.f32.mrb[0].mxu0
      %v461 = vadd.f32 0.0, %v460
      %v462 = vpop.f32.mrb[0].mxu0
      %463 = vmatprep.mubr.bf16.mxu0 0
      %464 = vmatmul.mubr.bf16.gmra.mrb[0].mxu0 %v355
      %v465 = vpop.f32.mrb[0].mxu0
      %v466 = vadd.f32 0.0, %v465
      %v467 = vpop.f32.mrb[0].mxu0
      %v468 = vpop.f32.mrb[0].mxu0
      %v469 = vadd.f32 0.0, %v468
      %v470 = vpop.f32.mrb[0].mxu0
      %471 = vmatprep.mubr.bf16.mxu0 0
      %472 = vmatmul.mubr.bf16.gmra.mrb[0].mxu0 %v358
      %v473 = vpop.f32.mrb[0].mxu0
      %v474 = vadd.f32 0.0, %v473
      %v475 = vpop.f32.mrb[0].mxu0
      %v476 = vpop.f32.mrb[0].mxu0
      %v477 = vadd.f32 0.0, %v476
      %v478 = vpop.f32.mrb[0].mxu0
      %479 = vmatprep.mubr.bf16.mxu0 0
      %480 = vmatmul.mubr.bf16.gmra.mrb[0].mxu0 %v361
      %v481 = vpop.f32.mrb[0].mxu0
      %v482 = vadd.f32 0.0, %v481
      %v483 = vpop.f32.mrb[0].mxu0
      %v484 = vpop.f32.mrb[0].mxu0
      %v485 = vadd.f32 0.0, %v484
      %v486 = vpop.f32.mrb[0].mxu0
      %487 = vmatprep.mubr.bf16.mxu0 0
      %488 = vmatmul.mubr.bf16.gmra.mrb[0].mxu0 %v364
      %v489 = vpop.f32.mrb[0].mxu0
      %v490 = vadd.f32 0.0, %v489
      %v491 = vpop.f32.mrb[0].mxu0
      %v492 = vpop.f32.mrb[0].mxu0
      %v493 = vadd.f32 0.0, %v492
      %v494 = vpop.f32.mrb[0].mxu0
      %495 = vmatprep.mubr.bf16.mxu0 0
      %496 = vmatmul.mubr.bf16.gmra.mrb[0].mxu0 %v367
      %v497 = vpop.f32.mrb[0].mxu0
      %v498 = vadd.f32 0.0, %v497
      %v499 = vpop.f32.mrb[0].mxu0
      %v500 = vpop.f32.mrb[0].mxu0
      %v501 = vadd.f32 0.0, %v500
      %v502 = vpop.f32.mrb[0].mxu0
      %503 = vmatprep.mubr.bf16.mxu0 0
      %504 = vmatmul.mubr.bf16.gmra.mrb[0].mxu0 %v370
      %v505 = vpop.f32.mrb[0].mxu0
      %v506 = vadd.f32 0.0, %v505
      %v507 = vpop.f32.mrb[0].mxu0
      %v508 = vpop.f32.mrb[0].mxu0
      %v509 = vadd.f32 0.0, %v508
      %v510 = vpop.f32.mrb[0].mxu0
      %511 = vmatprep.mubr.bf16.mxu0 0
      %512 = vmatmul.mubr.bf16.gmra.mrb[0].mxu0 %v373
      %v513 = vpop.f32.mrb[0].mxu0
      %v514 = vadd.f32 0.0, %v513
      %v515 = vpop.f32.mrb[0].mxu0
      %v516 = vpop.f32.mrb[0].mxu0
      %v517 = vadd.f32 0.0, %v516
      %v518 = vpop.f32.mrb[0].mxu0
      %519 = vmatprep.mubr.bf16.mxu0 0
      %520 = vmatmul.mubr.bf16.gmra.mrb[0].mxu0 %v376
      %v521 = vpop.f32.mrb[0].mxu0
      %v522 = vadd.f32 0.0, %v521
      %v523 = vpop.f32.mrb[0].mxu0
      %v524 = vpop.f32.mrb[0].mxu0
      %v525 = vadd.f32 0.0, %v524
      %v526 = vpop.f32.mrb[0].mxu0
      %527 = vmatprep.mubr.bf16.mxu0 0
      %528 = vmatmul.mubr.bf16.gmra.mrb[0].mxu0 %v379
      %v529 = vpop.f32.mrb[0].mxu0
      %v530 = vadd.f32 0.0, %v529
      %v531 = vpop.f32.mrb[0].mxu0
      %v532 = vpop.f32.mrb[0].mxu0
      %v533 = vadd.f32 0.0, %v532
      %v534 = vpop.f32.mrb[0].mxu0
      %535 = vmatprep.mubr.bf16.mxu0 0
      %536 = vmatmul.mubr.bf16.gmra.mrb[0].mxu0 %v382
      %v537 = vpop.f32.mrb[0].mxu0
      %v538 = vadd.f32 0.0, %v537
      %v539 = vpop.f32.mrb[0].mxu0
      %v540 = vpop.f32.mrb[0].mxu0
      %v541 = vadd.f32 0.0, %v540
      %v542 = vpop.f32.mrb[0].mxu0
      %543 = vmatprep.mubr.bf16.mxu0 0
      %544 = vmatmul.mubr.bf16.gmra.mrb[0].mxu0 %v385
      %v545 = vpop.f32.mrb[0].mxu0
      %v546 = vadd.f32 0.0, %v545
      %v547 = vpop.f32.mrb[0].mxu0
      %v548 = vpop.f32.mrb[0].mxu0
      %v549 = vadd.f32 0.0, %v548
      %v550 = vpop.f32.mrb[0].mxu0
      %551 = vdwg.mxu0
      %552 = vst [vmem:[#allocation2] sm:$0xff] %v426
      %553 = vst [vmem:[#allocation2 + $0x8] sm:$0xff] %v429
      %554 = vst [vmem:[#allocation2 + $0x10] sm:$0xff] %v434
      %555 = vst [vmem:[#allocation2 + $0x18] sm:$0xff] %v437
      %556 = vst [vmem:[#allocation2 + $0x20] sm:$0xff] %v442
      %557 = vst [vmem:[#allocation2 + $0x28] sm:$0xff] %v445
      %558 = vst [vmem:[#allocation2 + $0x30] sm:$0xff] %v450
      %559 = vst [vmem:[#allocation2 + $0x38] sm:$0xff] %v453
      %560 = vst [vmem:[#allocation2 + $0x40] sm:$0xff] %v458
      %561 = vst [vmem:[#allocation2 + $0x48] sm:$0xff] %v461
      %562 = vst [vmem:[#allocation2 + $0x50] sm:$0xff] %v466
      %563 = vst [vmem:[#allocation2 + $0x58] sm:$0xff] %v469
      %564 = vst [vmem:[#allocation2 + $0x60] sm:$0xff] %v474
      %565 = vst [vmem:[#allocation2 + $0x68] sm:$0xff] %v477
      %566 = vst [vmem:[#allocation2 + $0x70] sm:$0xff] %v482
      %567 = vst [vmem:[#allocation2 + $0x78] sm:$0xff] %v485
      %568 = vst [vmem:[#allocation2 + $0x80] sm:$0xff] %v490
      %569 = vst [vmem:[#allocation2 + $0x88] sm:$0xff] %v493
      %570 = vst [vmem:[#allocation2 + $0x90] sm:$0xff] %v498
      %571 = vst [vmem:[#allocation2 + $0x98] sm:$0xff] %v501
      %572 = vst [vmem:[#allocation2 + $0xa0] sm:$0xff] %v506
      %573 = vst [vmem:[#allocation2 + $0xa8] sm:$0xff] %v509
      %574 = vst [vmem:[#allocation2 + $0xb0] sm:$0xff] %v514
      %575 = vst [vmem:[#allocation2 + $0xb8] sm:$0xff] %v517
      %576 = vst [vmem:[#allocation2 + $0xc0] sm:$0xff] %v522
      %577 = vst [vmem:[#allocation2 + $0xc8] sm:$0xff] %v525
      %578 = vst [vmem:[#allocation2 + $0xd0] sm:$0xff] %v530
      %579 = vst [vmem:[#allocation2 + $0xd8] sm:$0xff] %v533
      %580 = vst [vmem:[#allocation2 + $0xe0] sm:$0xff] %v538
      %581 = vst [vmem:[#allocation2 + $0xe8] sm:$0xff] %v541
      %582 = vst [vmem:[#allocation2 + $0xf0] sm:$0xff] %v546
      %583 = vst [vmem:[#allocation2 + $0xf8] sm:$0xff] %v549
      %v584 = vld [vmem:[#allocation2] sm:$0xff]
      %v585 = vld [vmem:[#allocation2 + $0x8] sm:$0xff]
      %v586 = vld [vmem:[#allocation2 + $0x10] sm:$0xff]
      %v587 = vld [vmem:[#allocation2 + $0x18] sm:$0xff]
      %v588 = vld [vmem:[#allocation2 + $0x20] sm:$0xff]
      %v589 = vld [vmem:[#allocation2 + $0x28] sm:$0xff]
      %v590 = vld [vmem:[#allocation2 + $0x30] sm:$0xff]
      %v591 = vld [vmem:[#allocation2 + $0x38] sm:$0xff]
      %v592 = vld [vmem:[#allocation2 + $0x40] sm:$0xff]
      %v593 = vld [vmem:[#allocation2 + $0x48] sm:$0xff]
      %v594 = vld [vmem:[#allocation2 + $0x50] sm:$0xff]
      %v595 = vld [vmem:[#allocation2 + $0x58] sm:$0xff]
      %v596 = vld [vmem:[#allocation2 + $0x60] sm:$0xff]
      %v597 = vld [vmem:[#allocation2 + $0x68] sm:$0xff]
      %v598 = vld [vmem:[#allocation2 + $0x70] sm:$0xff]
      %v599 = vld [vmem:[#allocation2 + $0x78] sm:$0xff]
      %v600 = vld [vmem:[#allocation2 + $0x80] sm:$0xff]
      %v601 = vld [vmem:[#allocation2 + $0x88] sm:$0xff]
      %v602 = vld [vmem:[#allocation2 + $0x90] sm:$0xff]
      %v603 = vld [vmem:[#allocation2 + $0x98] sm:$0xff]
      %v604 = vld [vmem:[#allocation2 + $0xa0] sm:$0xff]
      %v605 = vld [vmem:[#allocation2 + $0xa8] sm:$0xff]
      %v606 = vld [vmem:[#allocation2 + $0xb0] sm:$0xff]
      %v607 = vld [vmem:[#allocation2 + $0xb8] sm:$0xff]
      %v608 = vld [vmem:[#allocation2 + $0xc0] sm:$0xff]
      %v609 = vld [vmem:[#allocation2 + $0xc8] sm:$0xff]
      %v610 = vld [vmem:[#allocation2 + $0xd0] sm:$0xff]
      %v611 = vld [vmem:[#allocation2 + $0xd8] sm:$0xff]
      %v612 = vld [vmem:[#allocation2 + $0xe0] sm:$0xff]
      %v613 = vld [vmem:[#allocation2 + $0xe8] sm:$0xff]
      %v614 = vld [vmem:[#allocation2 + $0xf0] sm:$0xff]
      %v615 = vld [vmem:[#allocation2 + $0xf8] sm:$0xff]
      %v616 = vld [vmem:[%s205 + $0x8] sm:$0xf]
      %v617 = vld [vmem:[%s205 + $0xc] sm:$0xf]
      %v618 = vld [vmem:[%s205 + $0x10] sm:$0xf]
      %v619 = vld [vmem:[%s205 + $0x14] sm:$0xf]
      %v620 = vld [vmem:[%s205 + $0x18] sm:$0xf]
      %v621 = vld [vmem:[%s205 + $0x1c] sm:$0xf]
      %v622 = vld [vmem:[%s205 + $0x20] sm:$0xf]
      %v623 = vld [vmem:[%s205 + $0x24] sm:$0xf]
      %v624 = vld [vmem:[%s205 + $0x28] sm:$0xf]
      %v625 = vld [vmem:[%s205 + $0x2c] sm:$0xf]
      %v626 = vld [vmem:[%s205 + $0x30] sm:$0xf]
      %v627 = vld [vmem:[%s205 + $0x34] sm:$0xf]
      %v628 = vld [vmem:[%s205 + $0x38] sm:$0xf]
      %v629 = vld [vmem:[%s205 + $0x3c] sm:$0xf]
      %v630 = vld [vmem:[%s205 + $0x40] sm:$0xf]
      %v631 = vld [vmem:[%s205 + $0x44] sm:$0xf]
      %v632 = vld [vmem:[%s205 + $0x48] sm:$0xf]
      %v633 = vld [vmem:[%s205 + $0x4c] sm:$0xf]
      %v634 = vld [vmem:[%s205 + $0x50] sm:$0xf]
      %v635 = vld [vmem:[%s205 + $0x54] sm:$0xf]
      %v636 = vld [vmem:[%s205 + $0x58] sm:$0xf]
      %v637 = vld [vmem:[%s205 + $0x5c] sm:$0xf]
      %v638 = vld [vmem:[%s205 + $0x60] sm:$0xf]
      %v639 = vld [vmem:[%s205 + $0x64] sm:$0xf]
      %v640 = vld [vmem:[%s205 + $0x68] sm:$0xf]
      %v641 = vld [vmem:[%s205 + $0x6c] sm:$0xf]
      %v642 = vld [vmem:[%s205 + $0x70] sm:$0xf]
      %v643 = vld [vmem:[%s205 + $0x74] sm:$0xf]
      %v644 = vld [vmem:[%s205 + $0x78] sm:$0xf]
      %v645 = vld [vmem:[%s205 + $0x7c] sm:$0xf]
      %v646 = vld [vmem:[%s205 + $0x80] sm:$0xf]
      %v647 = vld [vmem:[%s205 + $0x84] sm:$0xf]
      %s648 = scalar_lea.vmem %s1, 8
      %v649 = vld [vmem:[%s648] sm:$0xf]
      %v650 = vld [vmem:[%s648 + $0x4] sm:$0x3]
      %v683 = vunpack.c.l.b16 %v616
      %v684 = vunpack.c.l.b16 %v617
      %v685 = vunpack.c.l.b16 %v618
      %v686 = vunpack.c.l.b16 %v619
      %v687 = vunpack.c.l.b16 %v620
      %v688 = vunpack.c.l.b16 %v621
      %v689 = vunpack.c.l.b16 %v622
      %v690 = vunpack.c.l.b16 %v623
      %v691 = vunpack.c.l.b16 %v624
      %v692 = vunpack.c.l.b16 %v625
      %v693 = vunpack.c.l.b16 %v626
      %v694 = vunpack.c.l.b16 %v627
      %v695 = vunpack.c.l.b16 %v628
      %v696 = vunpack.c.l.b16 %v629
      %v697 = vunpack.c.l.b16 %v630
      %v698 = vunpack.c.l.b16 %v631
      %v699 = vunpack.c.l.b16 %v632
      %v700 = vunpack.c.l.b16 %v633
      %v701 = vunpack.c.l.b16 %v634
      %v702 = vunpack.c.l.b16 %v635
      %v703 = vunpack.c.l.b16 %v636
      %v704 = vunpack.c.l.b16 %v637
      %v705 = vunpack.c.l.b16 %v638
      %v706 = vunpack.c.l.b16 %v639
      %v707 = vunpack.c.l.b16 %v640
      %v708 = vunpack.c.l.b16 %v641
      %v709 = vunpack.c.l.b16 %v642
      %v710 = vunpack.c.l.b16 %v643
      %v711 = vunpack.c.l.b16 %v644
      %v712 = vunpack.c.l.b16 %v645
      %v713 = vunpack.c.l.b16 %v646
      %v714 = vunpack.c.l.b16 %v647
      %v715 = vpack.c.b16 %v684, %v683
      %v716 = vpack.c.b16 %v686, %v685
      %v717 = vpack.c.b16 %v688, %v687
      %v718 = vpack.c.b16 %v690, %v689
      %v719 = vpack.c.b16 %v692, %v691
      %v720 = vpack.c.b16 %v694, %v693
      %v721 = vpack.c.b16 %v696, %v695
      %v722 = vpack.c.b16 %v698, %v697
      %v723 = vpack.c.b16 %v700, %v699
      %v724 = vpack.c.b16 %v702, %v701
      %v725 = vpack.c.b16 %v704, %v703
      %v726 = vpack.c.b16 %v706, %v705
      %v727 = vpack.c.b16 %v708, %v707
      %v728 = vpack.c.b16 %v710, %v709
      %v729 = vpack.c.b16 %v712, %v711
      %v730 = vpack.c.b16 %v714, %v713
      %v733 = vunpack.c.l.b16 %v649
      %v734 = vunpack.c.l.b16 %v650
      %v735 = vpack.c.b16 %v734, %v733
      %v737 = vsel %vm338, %v715, 0
      %v740 = vsel %vm338, %v716, 0
      %v743 = vsel %vm338, %v717, 0
      %v746 = vsel %vm338, %v718, 0
      %v749 = vsel %vm338, %v719, 0
      %v752 = vsel %vm338, %v720, 0
      %v755 = vsel %vm338, %v721, 0
      %v758 = vsel %vm338, %v722, 0
      %v761 = vsel %vm338, %v723, 0
      %v764 = vsel %vm338, %v724, 0
      %v767 = vsel %vm338, %v725, 0
      %v770 = vsel %vm338, %v726, 0
      %v773 = vsel %vm338, %v727, 0
      %v776 = vsel %vm338, %v728, 0
      %v779 = vsel %vm338, %v729, 0
      %v782 = vsel %vm338, %v730, 0
      %v785 = vsel %vm387, %v735, 0
      %787 = vmatprep.subr.bf16.mxu0 0
      %788 = vmatpush1.bf16.msra.mxu0 %v785
      %789 = vmatprep.subr.bf16.mxu0 0
      %790 = vmatpush1.bf16.msra.mxu0 0
      %791 = vmatprep.subr.bf16.mxu0 0
      %792 = vmatpush1.bf16.msra.mxu0 0
      %793 = vmatprep.subr.bf16.mxu0 0
      %794 = vmatpush1.bf16.msra.mxu0 0
      %795 = vmatprep.subr.bf16.mxu0 0
      %796 = vmatpush1.bf16.msra.mxu0 0
      %797 = vmatprep.subr.bf16.mxu0 0
      %798 = vmatpush1.bf16.msra.mxu0 0
      %799 = vmatprep.subr.bf16.mxu0 0
      %800 = vmatpush1.bf16.msra.mxu0 0
      %801 = vmatprep.subr.bf16.mxu0 0
      %802 = vmatpush1.bf16.msra.mxu0 0
      %803 = vmatprep.subr.bf16.mxu0 0
      %804 = vmatpush1.bf16.msra.mxu0 0
      %805 = vmatprep.subr.bf16.mxu0 0
      %806 = vmatpush1.bf16.msra.mxu0 0
      %807 = vmatprep.subr.bf16.mxu0 0
      %808 = vmatpush1.bf16.msra.mxu0 0
      %809 = vmatprep.subr.bf16.mxu0 0
      %810 = vmatpush1.bf16.msra.mxu0 0
      %811 = vmatprep.subr.bf16.mxu0 0
      %812 = vmatpush1.bf16.msra.mxu0 0
      %813 = vmatprep.subr.bf16.mxu0 0
      %814 = vmatpush1.bf16.msra.mxu0 0
      %815 = vmatprep.subr.bf16.mxu0 0
      %816 = vmatpush1.bf16.msra.mxu0 0
      %817 = vmatprep.subr.bf16.mxu0 0
      %818 = vmatpush1.bf16.msra.mxu0 0
      %819 = vmatprep.mubr.bf16.mxu0 0
      %820 = vmatmul.mubr.bf16.gmra.mrb[0].mxu0 %v737
      %v821 = vpop.f32.mrb[0].mxu0
      %v822 = vadd.f32 0.0, %v821
      %v823 = vpop.f32.mrb[0].mxu0
      %v824 = vpop.f32.mrb[0].mxu0
      %v825 = vadd.f32 0.0, %v824
      %v826 = vpop.f32.mrb[0].mxu0
      %827 = vmatprep.mubr.bf16.mxu0 0
      %828 = vmatmul.mubr.bf16.gmra.mrb[0].mxu0 %v740
      %v829 = vpop.f32.mrb[0].mxu0
      %v830 = vadd.f32 0.0, %v829
      %v831 = vpop.f32.mrb[0].mxu0
      %v832 = vpop.f32.mrb[0].mxu0
      %v833 = vadd.f32 0.0, %v832
      %v834 = vpop.f32.mrb[0].mxu0
      %835 = vmatprep.mubr.bf16.mxu0 0
      %836 = vmatmul.mubr.bf16.gmra.mrb[0].mxu0 %v743
      %v837 = vpop.f32.mrb[0].mxu0
      %v838 = vadd.f32 0.0, %v837
      %v839 = vpop.f32.mrb[0].mxu0
      %v840 = vpop.f32.mrb[0].mxu0
      %v841 = vadd.f32 0.0, %v840
      %v842 = vpop.f32.mrb[0].mxu0
      %843 = vmatprep.mubr.bf16.mxu0 0
      %844 = vmatmul.mubr.bf16.gmra.mrb[0].mxu0 %v746
      %v845 = vpop.f32.mrb[0].mxu0
      %v846 = vadd.f32 0.0, %v845
      %v847 = vpop.f32.mrb[0].mxu0
      %v848 = vpop.f32.mrb[0].mxu0
      %v849 = vadd.f32 0.0, %v848
      %v850 = vpop.f32.mrb[0].mxu0
      %851 = vmatprep.mubr.bf16.mxu0 0
      %852 = vmatmul.mubr.bf16.gmra.mrb[0].mxu0 %v749
      %v853 = vpop.f32.mrb[0].mxu0
      %v854 = vadd.f32 0.0, %v853
      %v855 = vpop.f32.mrb[0].mxu0
      %v856 = vpop.f32.mrb[0].mxu0
      %v857 = vadd.f32 0.0, %v856
      %v858 = vpop.f32.mrb[0].mxu0
      %859 = vmatprep.mubr.bf16.mxu0 0
      %860 = vmatmul.mubr.bf16.gmra.mrb[0].mxu0 %v752
      %v861 = vpop.f32.mrb[0].mxu0
      %v862 = vadd.f32 0.0, %v861
      %v863 = vpop.f32.mrb[0].mxu0
      %v864 = vpop.f32.mrb[0].mxu0
      %v865 = vadd.f32 0.0, %v864
      %v866 = vpop.f32.mrb[0].mxu0
      %867 = vmatprep.mubr.bf16.mxu0 0
      %868 = vmatmul.mubr.bf16.gmra.mrb[0].mxu0 %v755
      %v869 = vpop.f32.mrb[0].mxu0
      %v870 = vadd.f32 0.0, %v869
      %v871 = vpop.f32.mrb[0].mxu0
      %v872 = vpop.f32.mrb[0].mxu0
      %v873 = vadd.f32 0.0, %v872
      %v874 = vpop.f32.mrb[0].mxu0
      %875 = vmatprep.mubr.bf16.mxu0 0
      %876 = vmatmul.mubr.bf16.gmra.mrb[0].mxu0 %v758
      %v877 = vpop.f32.mrb[0].mxu0
      %v878 = vadd.f32 0.0, %v877
      %v879 = vpop.f32.mrb[0].mxu0
      %v880 = vpop.f32.mrb[0].mxu0
      %v881 = vadd.f32 0.0, %v880
      %v882 = vpop.f32.mrb[0].mxu0
      %883 = vmatprep.mubr.bf16.mxu0 0
      %884 = vmatmul.mubr.bf16.gmra.mrb[0].mxu0 %v761
      %v885 = vpop.f32.mrb[0].mxu0
      %v886 = vadd.f32 0.0, %v885
      %v887 = vpop.f32.mrb[0].mxu0
      %v888 = vpop.f32.mrb[0].mxu0
      %v889 = vadd.f32 0.0, %v888
      %v890 = vpop.f32.mrb[0].mxu0
      %891 = vmatprep.mubr.bf16.mxu0 0
      %892 = vmatmul.mubr.bf16.gmra.mrb[0].mxu0 %v764
      %v893 = vpop.f32.mrb[0].mxu0
      %v894 = vadd.f32 0.0, %v893
      %v895 = vpop.f32.mrb[0].mxu0
      %v896 = vpop.f32.mrb[0].mxu0
      %v897 = vadd.f32 0.0, %v896
      %v898 = vpop.f32.mrb[0].mxu0
      %899 = vmatprep.mubr.bf16.mxu0 0
      %900 = vmatmul.mubr.bf16.gmra.mrb[0].mxu0 %v767
      %v901 = vpop.f32.mrb[0].mxu0
      %v902 = vadd.f32 0.0, %v901
      %v903 = vpop.f32.mrb[0].mxu0
      %v904 = vpop.f32.mrb[0].mxu0
      %v905 = vadd.f32 0.0, %v904
      %v906 = vpop.f32.mrb[0].mxu0
      %907 = vmatprep.mubr.bf16.mxu0 0
      %908 = vmatmul.mubr.bf16.gmra.mrb[0].mxu0 %v770
      %v909 = vpop.f32.mrb[0].mxu0
      %v910 = vadd.f32 0.0, %v909
      %v911 = vpop.f32.mrb[0].mxu0
      %v912 = vpop.f32.mrb[0].mxu0
      %v913 = vadd.f32 0.0, %v912
      %v914 = vpop.f32.mrb[0].mxu0
      %915 = vmatprep.mubr.bf16.mxu0 0
      %916 = vmatmul.mubr.bf16.gmra.mrb[0].mxu0 %v773
      %v917 = vpop.f32.mrb[0].mxu0
      %v918 = vadd.f32 0.0, %v917
      %v919 = vpop.f32.mrb[0].mxu0
      %v920 = vpop.f32.mrb[0].mxu0
      %v921 = vadd.f32 0.0, %v920
      %v922 = vpop.f32.mrb[0].mxu0
      %923 = vmatprep.mubr.bf16.mxu0 0
      %924 = vmatmul.mubr.bf16.gmra.mrb[0].mxu0 %v776
      %v925 = vpop.f32.mrb[0].mxu0
      %v926 = vadd.f32 0.0, %v925
      %v927 = vpop.f32.mrb[0].mxu0
      %v928 = vpop.f32.mrb[0].mxu0
      %v929 = vadd.f32 0.0, %v928
      %v930 = vpop.f32.mrb[0].mxu0
      %931 = vmatprep.mubr.bf16.mxu0 0
      %932 = vmatmul.mubr.bf16.gmra.mrb[0].mxu0 %v779
      %v933 = vpop.f32.mrb[0].mxu0
      %v934 = vadd.f32 0.0, %v933
      %v935 = vpop.f32.mrb[0].mxu0
      %v936 = vpop.f32.mrb[0].mxu0
      %v937 = vadd.f32 0.0, %v936
      %v938 = vpop.f32.mrb[0].mxu0
      %939 = vmatprep.mubr.bf16.mxu0 0
      %940 = vmatmul.mubr.bf16.gmra.mrb[0].mxu0 %v782
      %v941 = vpop.f32.mrb[0].mxu0
      %v942 = vadd.f32 0.0, %v941
      %v943 = vpop.f32.mrb[0].mxu0
      %v944 = vpop.f32.mrb[0].mxu0
      %v945 = vadd.f32 0.0, %v944
      %v946 = vpop.f32.mrb[0].mxu0
      %947 = vdwg.mxu0
      %v948 = vadd.f32 %v584, %v822
      %v949 = vadd.f32 %v585, %v825
      %v950 = vadd.f32 %v586, %v830
      %v951 = vadd.f32 %v587, %v833
      %v952 = vadd.f32 %v588, %v838
      %v953 = vadd.f32 %v589, %v841
      %v954 = vadd.f32 %v590, %v846
      %v955 = vadd.f32 %v591, %v849
      %v956 = vadd.f32 %v592, %v854
      %v957 = vadd.f32 %v593, %v857
      %v958 = vadd.f32 %v594, %v862
      %v959 = vadd.f32 %v595, %v865
      %v960 = vadd.f32 %v596, %v870
      %v961 = vadd.f32 %v597, %v873
      %v962 = vadd.f32 %v598, %v878
      %v963 = vadd.f32 %v599, %v881
      %v964 = vadd.f32 %v600, %v886
      %v965 = vadd.f32 %v601, %v889
      %v966 = vadd.f32 %v602, %v894
      %v967 = vadd.f32 %v603, %v897
      %v968 = vadd.f32 %v604, %v902
      %v969 = vadd.f32 %v605, %v905
      %v970 = vadd.f32 %v606, %v910
      %v971 = vadd.f32 %v607, %v913
      %v972 = vadd.f32 %v608, %v918
      %v973 = vadd.f32 %v609, %v921
      %v974 = vadd.f32 %v610, %v926
      %v975 = vadd.f32 %v611, %v929
      %v976 = vadd.f32 %v612, %v934
      %v977 = vadd.f32 %v613, %v937
      %v978 = vadd.f32 %v614, %v942
      %v979 = vadd.f32 %v615, %v945
      %980 = vst [vmem:[#allocation2] sm:$0xff] %v948
      %981 = vst [vmem:[#allocation2 + $0x8] sm:$0xff] %v949
      %982 = vst [vmem:[#allocation2 + $0x10] sm:$0xff] %v950
      %983 = vst [vmem:[#allocation2 + $0x18] sm:$0xff] %v951
      %984 = vst [vmem:[#allocation2 + $0x20] sm:$0xff] %v952
      %985 = vst [vmem:[#allocation2 + $0x28] sm:$0xff] %v953
      %986 = vst [vmem:[#allocation2 + $0x30] sm:$0xff] %v954
      %987 = vst [vmem:[#allocation2 + $0x38] sm:$0xff] %v955
      %988 = vst [vmem:[#allocation2 + $0x40] sm:$0xff] %v956
      %989 = vst [vmem:[#allocation2 + $0x48] sm:$0xff] %v957
      %990 = vst [vmem:[#allocation2 + $0x50] sm:$0xff] %v958
      %991 = vst [vmem:[#allocation2 + $0x58] sm:$0xff] %v959
      %992 = vst [vmem:[#allocation2 + $0x60] sm:$0xff] %v960
      %993 = vst [vmem:[#allocation2 + $0x68] sm:$0xff] %v961
      %994 = vst [vmem:[#allocation2 + $0x70] sm:$0xff] %v962
      %995 = vst [vmem:[#allocation2 + $0x78] sm:$0xff] %v963
      %996 = vst [vmem:[#allocation2 + $0x80] sm:$0xff] %v964
      %997 = vst [vmem:[#allocation2 + $0x88] sm:$0xff] %v965
      %998 = vst [vmem:[#allocation2 + $0x90] sm:$0xff] %v966
      %999 = vst [vmem:[#allocation2 + $0x98] sm:$0xff] %v967
      %1000 = vst [vmem:[#allocation2 + $0xa0] sm:$0xff] %v968
      %1001 = vst [vmem:[#allocation2 + $0xa8] sm:$0xff] %v969
      %1002 = vst [vmem:[#allocation2 + $0xb0] sm:$0xff] %v970
      %1003 = vst [vmem:[#allocation2 + $0xb8] sm:$0xff] %v971
      %1004 = vst [vmem:[#allocation2 + $0xc0] sm:$0xff] %v972
      %1005 = vst [vmem:[#allocation2 + $0xc8] sm:$0xff] %v973
      %1006 = vst [vmem:[#allocation2 + $0xd0] sm:$0xff] %v974
      %1007 = vst [vmem:[#allocation2 + $0xd8] sm:$0xff] %v975
      %1008 = vst [vmem:[#allocation2 + $0xe0] sm:$0xff] %v976
      %1009 = vst [vmem:[#allocation2 + $0xe8] sm:$0xff] %v977
      %1010 = vst [vmem:[#allocation2 + $0xf0] sm:$0xff] %v978
      %1011 = vst [vmem:[#allocation2 + $0xf8] sm:$0xff] %v979
      %v1012 = vld [vmem:[#allocation2] sm:$0xff]
      %v1013 = vld [vmem:[#allocation2 + $0x8] sm:$0xff]
      %v1014 = vld [vmem:[#allocation2 + $0x10] sm:$0xff]
      %v1015 = vld [vmem:[#allocation2 + $0x18] sm:$0xff]
      %v1016 = vld [vmem:[#allocation2 + $0x20] sm:$0xff]
      %v1017 = vld [vmem:[#allocation2 + $0x28] sm:$0xff]
      %v1018 = vld [vmem:[#allocation2 + $0x30] sm:$0xff]
      %v1019 = vld [vmem:[#allocation2 + $0x38] sm:$0xff]
      %v1020 = vld [vmem:[#allocation2 + $0x40] sm:$0xff]
      %v1021 = vld [vmem:[#allocation2 + $0x48] sm:$0xff]
      %v1022 = vld [vmem:[#allocation2 + $0x50] sm:$0xff]
      %v1023 = vld [vmem:[#allocation2 + $0x58] sm:$0xff]
      %v1024 = vld [vmem:[#allocation2 + $0x60] sm:$0xff]
      %v1025 = vld [vmem:[#allocation2 + $0x68] sm:$0xff]
      %v1026 = vld [vmem:[#allocation2 + $0x70] sm:$0xff]
      %v1027 = vld [vmem:[#allocation2 + $0x78] sm:$0xff]
      %v1028 = vld [vmem:[#allocation2 + $0x80] sm:$0xff]
      %v1029 = vld [vmem:[#allocation2 + $0x88] sm:$0xff]
      %v1030 = vld [vmem:[#allocation2 + $0x90] sm:$0xff]
      %v1031 = vld [vmem:[#allocation2 + $0x98] sm:$0xff]
      %v1032 = vld [vmem:[#allocation2 + $0xa0] sm:$0xff]
      %v1033 = vld [vmem:[#allocation2 + $0xa8] sm:$0xff]
      %v1034 = vld [vmem:[#allocation2 + $0xb0] sm:$0xff]
      %v1035 = vld [vmem:[#allocation2 + $0xb8] sm:$0xff]
      %v1036 = vld [vmem:[#allocation2 + $0xc0] sm:$0xff]
      %v1037 = vld [vmem:[#allocation2 + $0xc8] sm:$0xff]
      %v1038 = vld [vmem:[#allocation2 + $0xd0] sm:$0xff]
      %v1039 = vld [vmem:[#allocation2 + $0xd8] sm:$0xff]
      %v1040 = vld [vmem:[#allocation2 + $0xe0] sm:$0xff]
      %v1041 = vld [vmem:[#allocation2 + $0xe8] sm:$0xff]
      %v1042 = vld [vmem:[#allocation2 + $0xf0] sm:$0xff]
      %v1043 = vld [vmem:[#allocation2 + $0xf8] sm:$0xff]
      %v1044 = vld [vmem:[%s205 + $0x10] sm:$0xf]
      %v1045 = vld [vmem:[%s205 + $0x14] sm:$0xf]
      %v1046 = vld [vmem:[%s205 + $0x18] sm:$0xf]
      %v1047 = vld [vmem:[%s205 + $0x1c] sm:$0xf]
      %v1048 = vld [vmem:[%s205 + $0x20] sm:$0xf]
      %v1049 = vld [vmem:[%s205 + $0x24] sm:$0xf]
      %v1050 = vld [vmem:[%s205 + $0x28] sm:$0xf]
      %v1051 = vld [vmem:[%s205 + $0x2c] sm:$0xf]
      %v1052 = vld [vmem:[%s205 + $0x30] sm:$0xf]
      %v1053 = vld [vmem:[%s205 + $0x34] sm:$0xf]
      %v1054 = vld [vmem:[%s205 + $0x38] sm:$0xf]
      %v1055 = vld [vmem:[%s205 + $0x3c] sm:$0xf]
      %v1056 = vld [vmem:[%s205 + $0x40] sm:$0xf]
      %v1057 = vld [vmem:[%s205 + $0x44] sm:$0xf]
      %v1058 = vld [vmem:[%s205 + $0x48] sm:$0xf]
      %v1059 = vld [vmem:[%s205 + $0x4c] sm:$0xf]
      %v1060 = vld [vmem:[%s205 + $0x50] sm:$0xf]
      %v1061 = vld [vmem:[%s205 + $0x54] sm:$0xf]
      %v1062 = vld [vmem:[%s205 + $0x58] sm:$0xf]
      %v1063 = vld [vmem:[%s205 + $0x5c] sm:$0xf]
      %v1064 = vld [vmem:[%s205 + $0x60] sm:$0xf]
      %v1065 = vld [vmem:[%s205 + $0x64] sm:$0xf]
      %v1066 = vld [vmem:[%s205 + $0x68] sm:$0xf]
      %v1067 = vld [vmem:[%s205 + $0x6c] sm:$0xf]
      %v1068 = vld [vmem:[%s205 + $0x70] sm:$0xf]
      %v1069 = vld [vmem:[%s205 + $0x74] sm:$0xf]
      %v1070 = vld [vmem:[%s205 + $0x78] sm:$0xf]
      %v1071 = vld [vmem:[%s205 + $0x7c] sm:$0xf]
      %v1072 = vld [vmem:[%s205 + $0x80] sm:$0xf]
      %v1073 = vld [vmem:[%s205 + $0x84] sm:$0xf]
      %v1074 = vld [vmem:[%s205 + $0x88] sm:$0xf]
      %v1075 = vld [vmem:[%s205 + $0x8c] sm:$0xf]
      %s1076 = scalar_lea.vmem %s1, 16
      %v1077 = vld [vmem:[%s1076] sm:$0xf]
      %v1078 = vld [vmem:[%s1076 + $0x4] sm:$0x3]
      %v1111 = vunpack.c.l.b16 %v1044
      %v1112 = vunpack.c.l.b16 %v1045
      %v1113 = vunpack.c.l.b16 %v1046
      %v1114 = vunpack.c.l.b16 %v1047
      %v1115 = vunpack.c.l.b16 %v1048
      %v1116 = vunpack.c.l.b16 %v1049
      %v1117 = vunpack.c.l.b16 %v1050
      %v1118 = vunpack.c.l.b16 %v1051
      %v1119 = vunpack.c.l.b16 %v1052
      %v1120 = vunpack.c.l.b16 %v1053
      %v1121 = vunpack.c.l.b16 %v1054
      %v1122 = vunpack.c.l.b16 %v1055
      %v1123 = vunpack.c.l.b16 %v1056
      %v1124 = vunpack.c.l.b16 %v1057
      %v1125 = vunpack.c.l.b16 %v1058
      %v1126 = vunpack.c.l.b16 %v1059
      %v1127 = vunpack.c.l.b16 %v1060
      %v1128 = vunpack.c.l.b16 %v1061
      %v1129 = vunpack.c.l.b16 %v1062
      %v1130 = vunpack.c.l.b16 %v1063
      %v1131 = vunpack.c.l.b16 %v1064
      %v1132 = vunpack.c.l.b16 %v1065
      %v1133 = vunpack.c.l.b16 %v1066
      %v1134 = vunpack.c.l.b16 %v1067
      %v1135 = vunpack.c.l.b16 %v1068
      %v1136 = vunpack.c.l.b16 %v1069
      %v1137 = vunpack.c.l.b16 %v1070
      %v1138 = vunpack.c.l.b16 %v1071
      %v1139 = vunpack.c.l.b16 %v1072
      %v1140 = vunpack.c.l.b16 %v1073
      %v1141 = vunpack.c.l.b16 %v1074
      %v1142 = vunpack.c.l.b16 %v1075
      %v1143 = vpack.c.b16 %v1112, %v1111
      %v1144 = vpack.c.b16 %v1114, %v1113
      %v1145 = vpack.c.b16 %v1116, %v1115
      %v1146 = vpack.c.b16 %v1118, %v1117
      %v1147 = vpack.c.b16 %v1120, %v1119
      %v1148 = vpack.c.b16 %v1122, %v1121
      %v1149 = vpack.c.b16 %v1124, %v1123
      %v1150 = vpack.c.b16 %v1126, %v1125
      %v1151 = vpack.c.b16 %v1128, %v1127
      %v1152 = vpack.c.b16 %v1130, %v1129
      %v1153 = vpack.c.b16 %v1132, %v1131
      %v1154 = vpack.c.b16 %v1134, %v1133
      %v1155 = vpack.c.b16 %v1136, %v1135
      %v1156 = vpack.c.b16 %v1138, %v1137
      %v1157 = vpack.c.b16 %v1140, %v1139
      %v1158 = vpack.c.b16 %v1142, %v1141
      %v1161 = vunpack.c.l.b16 %v1077
      %v1162 = vunpack.c.l.b16 %v1078
      %v1163 = vpack.c.b16 %v1162, %v1161
      %v1165 = vsel %vm338, %v1143, 0
      %v1168 = vsel %vm338, %v1144, 0
      %v1171 = vsel %vm338, %v1145, 0
      %v1174 = vsel %vm338, %v1146, 0
      %v1177 = vsel %vm338, %v1147, 0
      %v1180 = vsel %vm338, %v1148, 0
      %v1183 = vsel %vm338, %v1149, 0
      %v1186 = vsel %vm338, %v1150, 0
      %v1189 = vsel %vm338, %v1151, 0
      %v1192 = vsel %vm338, %v1152, 0
      %v1195 = vsel %vm338, %v1153, 0
      %v1198 = vsel %vm338, %v1154, 0
      %v1201 = vsel %vm338, %v1155, 0
      %v1204 = vsel %vm338, %v1156, 0
      %v1207 = vsel %vm338, %v1157, 0
      %v1210 = vsel %vm338, %v1158, 0
      %v1213 = vsel %vm387, %v1163, 0
      %1215 = vmatprep.subr.bf16.mxu0 0
      %1216 = vmatpush1.bf16.msra.mxu0 %v1213
      %1217 = vmatprep.subr.bf16.mxu0 0
      %1218 = vmatpush1.bf16.msra.mxu0 0
      %1219 = vmatprep.subr.bf16.mxu0 0
      %1220 = vmatpush1.bf16.msra.mxu0 0
      %1221 = vmatprep.subr.bf16.mxu0 0
      %1222 = vmatpush1.bf16.msra.mxu0 0
      %1223 = vmatprep.subr.bf16.mxu0 0
      %1224 = vmatpush1.bf16.msra.mxu0 0
      %1225 = vmatprep.subr.bf16.mxu0 0
      %1226 = vmatpush1.bf16.msra.mxu0 0
      %1227 = vmatprep.subr.bf16.mxu0 0
      %1228 = vmatpush1.bf16.msra.mxu0 0
      %1229 = vmatprep.subr.bf16.mxu0 0
      %1230 = vmatpush1.bf16.msra.mxu0 0
      %1231 = vmatprep.subr.bf16.mxu0 0
      %1232 = vmatpush1.bf16.msra.mxu0 0
      %1233 = vmatprep.subr.bf16.mxu0 0
      %1234 = vmatpush1.bf16.msra.mxu0 0
      %1235 = vmatprep.subr.bf16.mxu0 0
      %1236 = vmatpush1.bf16.msra.mxu0 0
      %1237 = vmatprep.subr.bf16.mxu0 0
      %1238 = vmatpush1.bf16.msra.mxu0 0
      %1239 = vmatprep.subr.bf16.mxu0 0
      %1240 = vmatpush1.bf16.msra.mxu0 0
      %1241 = vmatprep.subr.bf16.mxu0 0
      %1242 = vmatpush1.bf16.msra.mxu0 0
      %1243 = vmatprep.subr.bf16.mxu0 0
      %1244 = vmatpush1.bf16.msra.mxu0 0
      %1245 = vmatprep.subr.bf16.mxu0 0
      %1246 = vmatpush1.bf16.msra.mxu0 0
      %1247 = vmatprep.mubr.bf16.mxu0 0
      %1248 = vmatmul.mubr.bf16.gmra.mrb[0].mxu0 %v1165
      %v1249 = vpop.f32.mrb[0].mxu0
      %v1250 = vadd.f32 0.0, %v1249
      %v1251 = vpop.f32.mrb[0].mxu0
      %v1252 = vpop.f32.mrb[0].mxu0
      %v1253 = vadd.f32 0.0, %v1252
      %v1254 = vpop.f32.mrb[0].mxu0
      %1255 = vmatprep.mubr.bf16.mxu0 0
      %1256 = vmatmul.mubr.bf16.gmra.mrb[0].mxu0 %v1168
      %v1257 = vpop.f32.mrb[0].mxu0
      %v1258 = vadd.f32 0.0, %v1257
      %v1259 = vpop.f32.mrb[0].mxu0
      %v1260 = vpop.f32.mrb[0].mxu0
      %v1261 = vadd.f32 0.0, %v1260
      %v1262 = vpop.f32.mrb[0].mxu0
      %1263 = vmatprep.mubr.bf16.mxu0 0
      %1264 = vmatmul.mubr.bf16.gmra.mrb[0].mxu0 %v1171
      %v1265 = vpop.f32.mrb[0].mxu0
      %v1266 = vadd.f32 0.0, %v1265
      %v1267 = vpop.f32.mrb[0].mxu0
      %v1268 = vpop.f32.mrb[0].mxu0
      %v1269 = vadd.f32 0.0, %v1268
      %v1270 = vpop.f32.mrb[0].mxu0
      %1271 = vmatprep.mubr.bf16.mxu0 0
      %1272 = vmatmul.mubr.bf16.gmra.mrb[0].mxu0 %v1174
      %v1273 = vpop.f32.mrb[0].mxu0
      %v1274 = vadd.f32 0.0, %v1273
      %v1275 = vpop.f32.mrb[0].mxu0
      %v1276 = vpop.f32.mrb[0].mxu0
      %v1277 = vadd.f32 0.0, %v1276
      %v1278 = vpop.f32.mrb[0].mxu0
      %1279 = vmatprep.mubr.bf16.mxu0 0
      %1280 = vmatmul.mubr.bf16.gmra.mrb[0].mxu0 %v1177
      %v1281 = vpop.f32.mrb[0].mxu0
      %v1282 = vadd.f32 0.0, %v1281
      %v1283 = vpop.f32.mrb[0].mxu0
      %v1284 = vpop.f32.mrb[0].mxu0
      %v1285 = vadd.f32 0.0, %v1284
      %v1286 = vpop.f32.mrb[0].mxu0
      %1287 = vmatprep.mubr.bf16.mxu0 0
      %1288 = vmatmul.mubr.bf16.gmra.mrb[0].mxu0 %v1180
      %v1289 = vpop.f32.mrb[0].mxu0
      %v1290 = vadd.f32 0.0, %v1289
      %v1291 = vpop.f32.mrb[0].mxu0
      %v1292 = vpop.f32.mrb[0].mxu0
      %v1293 = vadd.f32 0.0, %v1292
      %v1294 = vpop.f32.mrb[0].mxu0
      %1295 = vmatprep.mubr.bf16.mxu0 0
      %1296 = vmatmul.mubr.bf16.gmra.mrb[0].mxu0 %v1183
      %v1297 = vpop.f32.mrb[0].mxu0
      %v1298 = vadd.f32 0.0, %v1297
      %v1299 = vpop.f32.mrb[0].mxu0
      %v1300 = vpop.f32.mrb[0].mxu0
      %v1301 = vadd.f32 0.0, %v1300
      %v1302 = vpop.f32.mrb[0].mxu0
      %1303 = vmatprep.mubr.bf16.mxu0 0
      %1304 = vmatmul.mubr.bf16.gmra.mrb[0].mxu0 %v1186
      %v1305 = vpop.f32.mrb[0].mxu0
      %v1306 = vadd.f32 0.0, %v1305
      %v1307 = vpop.f32.mrb[0].mxu0
      %v1308 = vpop.f32.mrb[0].mxu0
      %v1309 = vadd.f32 0.0, %v1308
      %v1310 = vpop.f32.mrb[0].mxu0
      %1311 = vmatprep.mubr.bf16.mxu0 0
      %1312 = vmatmul.mubr.bf16.gmra.mrb[0].mxu0 %v1189
      %v1313 = vpop.f32.mrb[0].mxu0
      %v1314 = vadd.f32 0.0, %v1313
      %v1315 = vpop.f32.mrb[0].mxu0
      %v1316 = vpop.f32.mrb[0].mxu0
      %v1317 = vadd.f32 0.0, %v1316
      %v1318 = vpop.f32.mrb[0].mxu0
      %1319 = vmatprep.mubr.bf16.mxu0 0
      %1320 = vmatmul.mubr.bf16.gmra.mrb[0].mxu0 %v1192
      %v1321 = vpop.f32.mrb[0].mxu0
      %v1322 = vadd.f32 0.0, %v1321
      %v1323 = vpop.f32.mrb[0].mxu0
      %v1324 = vpop.f32.mrb[0].mxu0
      %v1325 = vadd.f32 0.0, %v1324
      %v1326 = vpop.f32.mrb[0].mxu0
      %1327 = vmatprep.mubr.bf16.mxu0 0
      %1328 = vmatmul.mubr.bf16.gmra.mrb[0].mxu0 %v1195
      %v1329 = vpop.f32.mrb[0].mxu0
      %v1330 = vadd.f32 0.0, %v1329
      %v1331 = vpop.f32.mrb[0].mxu0
      %v1332 = vpop.f32.mrb[0].mxu0
      %v1333 = vadd.f32 0.0, %v1332
      %v1334 = vpop.f32.mrb[0].mxu0
      %1335 = vmatprep.mubr.bf16.mxu0 0
      %1336 = vmatmul.mubr.bf16.gmra.mrb[0].mxu0 %v1198
      %v1337 = vpop.f32.mrb[0].mxu0
      %v1338 = vadd.f32 0.0, %v1337
      %v1339 = vpop.f32.mrb[0].mxu0
      %v1340 = vpop.f32.mrb[0].mxu0
      %v1341 = vadd.f32 0.0, %v1340
      %v1342 = vpop.f32.mrb[0].mxu0
      %1343 = vmatprep.mubr.bf16.mxu0 0
      %1344 = vmatmul.mubr.bf16.gmra.mrb[0].mxu0 %v1201
      %v1345 = vpop.f32.mrb[0].mxu0
      %v1346 = vadd.f32 0.0, %v1345
      %v1347 = vpop.f32.mrb[0].mxu0
      %v1348 = vpop.f32.mrb[0].mxu0
      %v1349 = vadd.f32 0.0, %v1348
      %v1350 = vpop.f32.mrb[0].mxu0
      %1351 = vmatprep.mubr.bf16.mxu0 0
      %1352 = vmatmul.mubr.bf16.gmra.mrb[0].mxu0 %v1204
      %v1353 = vpop.f32.mrb[0].mxu0
      %v1354 = vadd.f32 0.0, %v1353
      %v1355 = vpop.f32.mrb[0].mxu0
      %v1356 = vpop.f32.mrb[0].mxu0
      %v1357 = vadd.f32 0.0, %v1356
      %v1358 = vpop.f32.mrb[0].mxu0
      %1359 = vmatprep.mubr.bf16.mxu0 0
      %1360 = vmatmul.mubr.bf16.gmra.mrb[0].mxu0 %v1207
      %v1361 = vpop.f32.mrb[0].mxu0
      %v1362 = vadd.f32 0.0, %v1361
      %v1363 = vpop.f32.mrb[0].mxu0
      %v1364 = vpop.f32.mrb[0].mxu0
      %v1365 = vadd.f32 0.0, %v1364
      %v1366 = vpop.f32.mrb[0].mxu0
      %1367 = vmatprep.mubr.bf16.mxu0 0
      %1368 = vmatmul.mubr.bf16.gmra.mrb[0].mxu0 %v1210
      %v1369 = vpop.f32.mrb[0].mxu0
      %v1370 = vadd.f32 0.0, %v1369
      %v1371 = vpop.f32.mrb[0].mxu0
      %v1372 = vpop.f32.mrb[0].mxu0
      %v1373 = vadd.f32 0.0, %v1372
      %v1374 = vpop.f32.mrb[0].mxu0
      %1375 = vdwg.mxu0
      %v1376 = vadd.f32 %v1012, %v1250
      %v1377 = vadd.f32 %v1013, %v1253
      %v1378 = vadd.f32 %v1014, %v1258
      %v1379 = vadd.f32 %v1015, %v1261
      %v1380 = vadd.f32 %v1016, %v1266
      %v1381 = vadd.f32 %v1017, %v1269
      %v1382 = vadd.f32 %v1018, %v1274
      %v1383 = vadd.f32 %v1019, %v1277
      %v1384 = vadd.f32 %v1020, %v1282
      %v1385 = vadd.f32 %v1021, %v1285
      %v1386 = vadd.f32 %v1022, %v1290
      %v1387 = vadd.f32 %v1023, %v1293
      %v1388 = vadd.f32 %v1024, %v1298
      %v1389 = vadd.f32 %v1025, %v1301
      %v1390 = vadd.f32 %v1026, %v1306
      %v1391 = vadd.f32 %v1027, %v1309
      %v1392 = vadd.f32 %v1028, %v1314
      %v1393 = vadd.f32 %v1029, %v1317
      %v1394 = vadd.f32 %v1030, %v1322
      %v1395 = vadd.f32 %v1031, %v1325
      %v1396 = vadd.f32 %v1032, %v1330
      %v1397 = vadd.f32 %v1033, %v1333
      %v1398 = vadd.f32 %v1034, %v1338
      %v1399 = vadd.f32 %v1035, %v1341
      %v1400 = vadd.f32 %v1036, %v1346
      %v1401 = vadd.f32 %v1037, %v1349
      %v1402 = vadd.f32 %v1038, %v1354
      %v1403 = vadd.f32 %v1039, %v1357
      %v1404 = vadd.f32 %v1040, %v1362
      %v1405 = vadd.f32 %v1041, %v1365
      %v1406 = vadd.f32 %v1042, %v1370
      %v1407 = vadd.f32 %v1043, %v1373
      %1408 = vst [vmem:[#allocation2] sm:$0xff] %v1376
      %1409 = vst [vmem:[#allocation2 + $0x8] sm:$0xff] %v1377
      %1410 = vst [vmem:[#allocation2 + $0x10] sm:$0xff] %v1378
      %1411 = vst [vmem:[#allocation2 + $0x18] sm:$0xff] %v1379
      %1412 = vst [vmem:[#allocation2 + $0x20] sm:$0xff] %v1380
      %1413 = vst [vmem:[#allocation2 + $0x28] sm:$0xff] %v1381
      %1414 = vst [vmem:[#allocation2 + $0x30] sm:$0xff] %v1382
      %1415 = vst [vmem:[#allocation2 + $0x38] sm:$0xff] %v1383
      %1416 = vst [vmem:[#allocation2 + $0x40] sm:$0xff] %v1384
      %1417 = vst [vmem:[#allocation2 + $0x48] sm:$0xff] %v1385
      %1418 = vst [vmem:[#allocation2 + $0x50] sm:$0xff] %v1386
      %1419 = vst [vmem:[#allocation2 + $0x58] sm:$0xff] %v1387
      %1420 = vst [vmem:[#allocation2 + $0x60] sm:$0xff] %v1388
      %1421 = vst [vmem:[#allocation2 + $0x68] sm:$0xff] %v1389
      %1422 = vst [vmem:[#allocation2 + $0x70] sm:$0xff] %v1390
      %1423 = vst [vmem:[#allocation2 + $0x78] sm:$0xff] %v1391
      %1424 = vst [vmem:[#allocation2 + $0x80] sm:$0xff] %v1392
      %1425 = vst [vmem:[#allocation2 + $0x88] sm:$0xff] %v1393
      %1426 = vst [vmem:[#allocation2 + $0x90] sm:$0xff] %v1394
      %1427 = vst [vmem:[#allocation2 + $0x98] sm:$0xff] %v1395
      %1428 = vst [vmem:[#allocation2 + $0xa0] sm:$0xff] %v1396
      %1429 = vst [vmem:[#allocation2 + $0xa8] sm:$0xff] %v1397
      %1430 = vst [vmem:[#allocation2 + $0xb0] sm:$0xff] %v1398
      %1431 = vst [vmem:[#allocation2 + $0xb8] sm:$0xff] %v1399
      %1432 = vst [vmem:[#allocation2 + $0xc0] sm:$0xff] %v1400
      %1433 = vst [vmem:[#allocation2 + $0xc8] sm:$0xff] %v1401
      %1434 = vst [vmem:[#allocation2 + $0xd0] sm:$0xff] %v1402
      %1435 = vst [vmem:[#allocation2 + $0xd8] sm:$0xff] %v1403
      %1436 = vst [vmem:[#allocation2 + $0xe0] sm:$0xff] %v1404
      %1437 = vst [vmem:[#allocation2 + $0xe8] sm:$0xff] %v1405
      %1438 = vst [vmem:[#allocation2 + $0xf0] sm:$0xff] %v1406
      %1439 = vst [vmem:[#allocation2 + $0xf8] sm:$0xff] %v1407
      %v1440 = vld [vmem:[#allocation2] sm:$0xff]
      %v1441 = vld [vmem:[#allocation2 + $0x8] sm:$0xff]
      %v1442 = vld [vmem:[#allocation2 + $0x10] sm:$0xff]
      %v1443 = vld [vmem:[#allocation2 + $0x18] sm:$0xff]
      %v1444 = vld [vmem:[#allocation2 + $0x20] sm:$0xff]
      %v1445 = vld [vmem:[#allocation2 + $0x28] sm:$0xff]
      %v1446 = vld [vmem:[#allocation2 + $0x30] sm:$0xff]
      %v1447 = vld [vmem:[#allocation2 + $0x38] sm:$0xff]
      %v1448 = vld [vmem:[#allocation2 + $0x40] sm:$0xff]
      %v1449 = vld [vmem:[#allocation2 + $0x48] sm:$0xff]
      %v1450 = vld [vmem:[#allocation2 + $0x50] sm:$0xff]
      %v1451 = vld [vmem:[#allocation2 + $0x58] sm:$0xff]
      %v1452 = vld [vmem:[#allocation2 + $0x60] sm:$0xff]
      %v1453 = vld [vmem:[#allocation2 + $0x68] sm:$0xff]
      %v1454 = vld [vmem:[#allocation2 + $0x70] sm:$0xff]
      %v1455 = vld [vmem:[#allocation2 + $0x78] sm:$0xff]
      %v1456 = vld [vmem:[#allocation2 + $0x80] sm:$0xff]
      %v1457 = vld [vmem:[#allocation2 + $0x88] sm:$0xff]
      %v1458 = vld [vmem:[#allocation2 + $0x90] sm:$0xff]
      %v1459 = vld [vmem:[#allocation2 + $0x98] sm:$0xff]
      %v1460 = vld [vmem:[#allocation2 + $0xa0] sm:$0xff]
      %v1461 = vld [vmem:[#allocation2 + $0xa8] sm:$0xff]
      %v1462 = vld [vmem:[#allocation2 + $0xb0] sm:$0xff]
      %v1463 = vld [vmem:[#allocation2 + $0xb8] sm:$0xff]
      %v1464 = vld [vmem:[#allocation2 + $0xc0] sm:$0xff]
      %v1465 = vld [vmem:[#allocation2 + $0xc8] sm:$0xff]
      %v1466 = vld [vmem:[#allocation2 + $0xd0] sm:$0xff]
      %v1467 = vld [vmem:[#allocation2 + $0xd8] sm:$0xff]
      %v1468 = vld [vmem:[#allocation2 + $0xe0] sm:$0xff]
      %v1469 = vld [vmem:[#allocation2 + $0xe8] sm:$0xff]
      %v1470 = vld [vmem:[#allocation2 + $0xf0] sm:$0xff]
      %v1471 = vld [vmem:[#allocation2 + $0xf8] sm:$0xff]
      %v1472 = vadd.f32 %v1440, %v1441
      %v1473 = vadd.f32 %v1472, %v1442
      %v1474 = vadd.f32 %v1473, %v1443
      %v1475 = vadd.f32 %v1474, %v1444
      %v1476 = vadd.f32 %v1475, %v1445
      %v1477 = vadd.f32 %v1476, %v1446
      %v1478 = vadd.f32 %v1477, %v1447
      %v1479 = vadd.f32 %v1478, %v1448
      %v1480 = vadd.f32 %v1479, %v1449
      %v1481 = vadd.f32 %v1480, %v1450
      %v1482 = vadd.f32 %v1481, %v1451
      %v1483 = vadd.f32 %v1482, %v1452
      %v1484 = vadd.f32 %v1483, %v1453
      %v1485 = vadd.f32 %v1484, %v1454
      %v1486 = vadd.f32 %v1485, %v1455
      %v1487 = vadd.f32 %v1486, %v1456
      %v1488 = vadd.f32 %v1487, %v1457
      %v1489 = vadd.f32 %v1488, %v1458
      %v1490 = vadd.f32 %v1489, %v1459
      %v1491 = vadd.f32 %v1490, %v1460
      %v1492 = vadd.f32 %v1491, %v1461
      %v1493 = vadd.f32 %v1492, %v1462
      %v1494 = vadd.f32 %v1493, %v1463
      %v1495 = vadd.f32 %v1494, %v1464
      %v1496 = vadd.f32 %v1495, %v1465
      %v1497 = vadd.f32 %v1496, %v1466
      %v1498 = vadd.f32 %v1497, %v1467
      %v1499 = vadd.f32 %v1498, %v1468
      %v1500 = vadd.f32 %v1499, %v1469
      %v1501 = vadd.f32 %v1500, %v1470
      %v1502 = vadd.f32 %v1501, %v1471
      %v1503 = vrot.slane %v1502, 4
      %v1504 = vadd.f32 %v1502, %v1503
      %v1505 = vrot.slane %v1504, 2
      %v1506 = vadd.f32 %v1504, %v1505
      %v1507 = vrot.slane %v1506, 1
      %v1508 = vadd.f32 %v1506, %v1507
      %v1509 = vmul.f32 %v1508, 0.00390625
      %v1510 = vsub.f32 %v1440, %v1509
      %v1511 = vsub.f32 %v1441, %v1509
      %v1512 = vsub.f32 %v1442, %v1509
      %v1513 = vsub.f32 %v1443, %v1509
      %v1514 = vsub.f32 %v1444, %v1509
      %v1515 = vsub.f32 %v1445, %v1509
      %v1516 = vsub.f32 %v1446, %v1509
      %v1517 = vsub.f32 %v1447, %v1509
      %v1518 = vsub.f32 %v1448, %v1509
      %v1519 = vsub.f32 %v1449, %v1509
      %v1520 = vsub.f32 %v1450, %v1509
      %v1521 = vsub.f32 %v1451, %v1509
      %v1522 = vsub.f32 %v1452, %v1509
      %v1523 = vsub.f32 %v1453, %v1509
      %v1524 = vsub.f32 %v1454, %v1509
      %v1525 = vsub.f32 %v1455, %v1509
      %v1526 = vsub.f32 %v1456, %v1509
      %v1527 = vsub.f32 %v1457, %v1509
      %v1528 = vsub.f32 %v1458, %v1509
      %v1529 = vsub.f32 %v1459, %v1509
      %v1530 = vsub.f32 %v1460, %v1509
      %v1531 = vsub.f32 %v1461, %v1509
      %v1532 = vsub.f32 %v1462, %v1509
      %v1533 = vsub.f32 %v1463, %v1509
      %v1534 = vsub.f32 %v1464, %v1509
      %v1535 = vsub.f32 %v1465, %v1509
      %v1536 = vsub.f32 %v1466, %v1509
      %v1537 = vsub.f32 %v1467, %v1509
      %v1538 = vsub.f32 %v1468, %v1509
      %v1539 = vsub.f32 %v1469, %v1509
      %v1540 = vsub.f32 %v1470, %v1509
      %v1541 = vsub.f32 %v1471, %v1509
      %1542 = vst [vmem:[%s211] sm:$0x1] %v1508
      %v1543 = vmul.f32 %v1510, %v1510
      %v1544 = vmul.f32 %v1511, %v1511
      %v1545 = vmul.f32 %v1512, %v1512
      %v1546 = vmul.f32 %v1513, %v1513
      %v1547 = vmul.f32 %v1514, %v1514
      %v1548 = vmul.f32 %v1515, %v1515
      %v1549 = vmul.f32 %v1516, %v1516
      %v1550 = vmul.f32 %v1517, %v1517
      %v1551 = vmul.f32 %v1518, %v1518
      %v1552 = vmul.f32 %v1519, %v1519
      %v1553 = vmul.f32 %v1520, %v1520
      %v1554 = vmul.f32 %v1521, %v1521
      %v1555 = vmul.f32 %v1522, %v1522
      %v1556 = vmul.f32 %v1523, %v1523
      %v1557 = vmul.f32 %v1524, %v1524
      %v1558 = vmul.f32 %v1525, %v1525
      %v1559 = vmul.f32 %v1526, %v1526
      %v1560 = vmul.f32 %v1527, %v1527
      %v1561 = vmul.f32 %v1528, %v1528
      %v1562 = vmul.f32 %v1529, %v1529
      %v1563 = vmul.f32 %v1530, %v1530
      %v1564 = vmul.f32 %v1531, %v1531
      %v1565 = vmul.f32 %v1532, %v1532
      %v1566 = vmul.f32 %v1533, %v1533
      %v1567 = vmul.f32 %v1534, %v1534
      %v1568 = vmul.f32 %v1535, %v1535
      %v1569 = vmul.f32 %v1536, %v1536
      %v1570 = vmul.f32 %v1537, %v1537
      %v1571 = vmul.f32 %v1538, %v1538
      %v1572 = vmul.f32 %v1539, %v1539
      %v1573 = vmul.f32 %v1540, %v1540
      %v1574 = vmul.f32 %v1541, %v1541
      %v1575 = vadd.f32 %v1543, %v1544
      %v1576 = vadd.f32 %v1575, %v1545
      %v1577 = vadd.f32 %v1576, %v1546
      %v1578 = vadd.f32 %v1577, %v1547
      %v1579 = vadd.f32 %v1578, %v1548
      %v1580 = vadd.f32 %v1579, %v1549
      %v1581 = vadd.f32 %v1580, %v1550
      %v1582 = vadd.f32 %v1581, %v1551
      %v1583 = vadd.f32 %v1582, %v1552
      %v1584 = vadd.f32 %v1583, %v1553
      %v1585 = vadd.f32 %v1584, %v1554
      %v1586 = vadd.f32 %v1585, %v1555
      %v1587 = vadd.f32 %v1586, %v1556
      %v1588 = vadd.f32 %v1587, %v1557
      %v1589 = vadd.f32 %v1588, %v1558
      %v1590 = vadd.f32 %v1589, %v1559
      %v1591 = vadd.f32 %v1590, %v1560
      %v1592 = vadd.f32 %v1591, %v1561
      %v1593 = vadd.f32 %v1592, %v1562
      %v1594 = vadd.f32 %v1593, %v1563
      %v1595 = vadd.f32 %v1594, %v1564
      %v1596 = vadd.f32 %v1595, %v1565
      %v1597 = vadd.f32 %v1596, %v1566
      %v1598 = vadd.f32 %v1597, %v1567
      %v1599 = vadd.f32 %v1598, %v1568
      %v1600 = vadd.f32 %v1599, %v1569
      %v1601 = vadd.f32 %v1600, %v1570
      %v1602 = vadd.f32 %v1601, %v1571
      %v1603 = vadd.f32 %v1602, %v1572
      %v1604 = vadd.f32 %v1603, %v1573
      %v1605 = vadd.f32 %v1604, %v1574
      %v1606 = vrot.slane %v1605, 4
      %v1607 = vadd.f32 %v1605, %v1606
      %v1608 = vrot.slane %v1607, 2
      %v1609 = vadd.f32 %v1607, %v1608
      %v1610 = vrot.slane %v1609, 1
      %v1611 = vadd.f32 %v1609, %v1610
      %1612 = vst [vmem:[%s217] sm:$0x1] %v1611
      %p1613 = scmp.lt.s32.totalorder %s19, 1
      %s1614 = scalar_select %p1613, %s19, 1
      %p1615 = scmp.lt.s32.totalorder %s20, 0
      %s1616 = scalar_select %p1615, %s20, 0
      %s1617 = sadd.s32 %s1616, %s1614
      %s1618 = scalar_lea.vmem %s2, %s1617
      %p1619 = scmp.lt.s32.totalorder %s19, 1
      %s1620 = scalar_select %p1619, %s19, 1
      %p1621 = scmp.lt.s32.totalorder %s20, 0
      %s1622 = scalar_select %p1621, %s20, 0
      %s1623 = sadd.s32 %s1622, %s1620
      %s1624 = scalar_lea.vmem %s3, %s1623
      // Predicated region
      $region29: #{conv_block_forward.2} parent=27 // pred_check
        %p1625 = pneg %p96
      $region30: #{conv_block_forward.2} parent=27 // pred_check_branch
        %1627 = sbr.rel (%p1625) target = $region32
      $region31: #{conv_block_forward.2} parent=27 // pred_region
        _
      $region32: #{conv_block_forward.2} parent=27 // pred_fallthru
        _
      // Predicated region
      $region33: #{conv_block_forward.2} parent=27 // pred_check
        %p1628 = pneg %p124
      $region34: #{conv_block_forward.2} parent=27 // pred_check_branch
        %1630 = sbr.rel (%p1628) target = $region36
      $region35: #{conv_block_forward.2} parent=27 // pred_region
        _
      $region36: #{conv_block_forward.2} parent=27 // pred_fallthru
        _
    $region28: #{conv_block_forward.2} parent=5 // pred_fallthru
      _
    %p1631 = scmp.le.s32.totalorder 2, %s10
    // Predicated region
    $region37: #{conv_block_forward.2} parent=5 // pred_check
      %p1632 = pneg %p1631
    $region38: #{conv_block_forward.2} parent=5 // pred_check_branch
      %1634 = sbr.rel (%p1632) target = $region40
    $region39: #{conv_block_forward.2} parent=5 // pred_region
      %s1635 = ssub.s32 %s10, 2
      // Predicated region
      $region41: #{conv_block_forward.2} parent=39 // pred_check
        %p1636 = pneg %p102
      $region42: #{conv_block_forward.2} parent=39 // pred_check_branch
        %1638 = sbr.rel (%p1636) target = $region44
      $region43: #{conv_block_forward.2} parent=39 // pred_region
        %p1639 = scmp.lt.s32.totalorder %s21, 1
        %s1640 = scalar_select %p1639, %s21, 1
        %p1641 = scmp.lt.s32.totalorder %s22, 0
        %s1642 = scalar_select %p1641, %s22, 0
        %s1643 = sadd.s32 %s1642, %s1640
        %s1644 = scalar_lea.vmem %s2, %s1643
      $region44: #{conv_block_forward.2} parent=39 // pred_fallthru
        _
      // Predicated region
      $region45: #{conv_block_forward.2} parent=39 // pred_check
        %p1645 = pneg %p130
      $region46: #{conv_block_forward.2} parent=39 // pred_check_branch
        %1647 = sbr.rel (%p1645) target = $region48
      $region47: #{conv_block_forward.2} parent=39 // pred_region
        %p1648 = scmp.lt.s32.totalorder %s21, 1
        %s1649 = scalar_select %p1648, %s21, 1
        %p1650 = scmp.lt.s32.totalorder %s22, 0
        %s1651 = scalar_select %p1650, %s22, 0
        %s1652 = sadd.s32 %s1651, %s1649
        %s1653 = scalar_lea.vmem %s3, %s1652
      $region48: #{conv_block_forward.2} parent=39 // pred_fallthru
        _
    $region40: #{conv_block_forward.2} parent=5 // pred_fallthru
      _
  $region6: #{conv_block_forward.2} parent=0 // loop_footer
    %s14 = sadd.s32 1, %s10
  $region7: #{conv_block_forward.2} parent=0 // loop_footer_branch
    %9 = sbr.rel target = $region3
  $region8: #{conv_block_forward.2} parent=0 // loop_exit
    _

// kernel: conv_block_forward.3
$region0: #{conv_block_forward.3}
  #allocation0 [shape = 'u32[]', space=smem, size = 0x4, offset = 0x4, fixed_abs, tag = 'smem constant byte address 0x4 - core index']
  #allocation1 [shape = 'u32[144,128]{1,0:T(1,128)}', space=vmem, size = 0x12000, scoped, tag = 'internal scratch']
  #allocation2 [shape = 'f32[256,128]{1,0:T(8,128)}', space=vmem, size = 0x20000, scoped, tag = 'scratch operand']
  %s0 = inlined_call_operand.vmem [shape: bf16[2,1,288,12], index: 0, kind: input, shape index: {}]
  %s1 = inlined_call_operand.vmem [shape: bf16[3,12,128], index: 1, kind: input, shape index: {}]
  %s2 = inlined_call_operand.vmem [shape: f32[1,128], index: 2, kind: input, shape index: {}]
  %s3 = inlined_call_operand.vmem [shape: f32[1,128], index: 3, kind: input, shape index: {}]
  %s4 = inlined_call_operand.vmem [shape: f32[2,8,256], index: 4, kind: output, shape index: {}]
  %s5 = sld [smem:[#allocation0]]
  $region49: #{conv_block_forward.3} parent=0
    _
  %s7 = ssub.s32 1, %s5
  %s8 = scalar_select 0, %s7, %s5
  loop: start=0, step=1, limit=4
  $region2: #{conv_block_forward.3} parent=0 // loop_pre_header
    _
  $region3: #{conv_block_forward.3} parent=0 // loop_header
    %s10 = sphi 0, %s14
    %p11 = scmp.ge.s32.totalorder %s10, 4
    %s17 = sphi 0, %s29
    %s18 = sphi 0, %s25
    %s19 = sphi 0, %s17
    %s20 = sphi 0, %s18
    %s21 = sphi 0, %s19
    %s22 = sphi 0, %s20
    %s34 = sphi 0, %s36
    %s37 = sphi 0, %s34
    %s38 = sphi 0, %s37
    %s54 = sphi 0, %s38
    %s58 = sphi 0, %s58
    %s60 = sphi 0, %s58
    %s61 = sphi 0, %s60
    %s75 = sphi 0, %s61
    %s79 = sphi 0, %s79
    %s81 = sphi 0, %s79
    %s82 = sphi 0, %s81
    %s96 = sphi 0, %s82
    %s100 = sphi 0, %s100
    %s102 = sphi 0, %s100
    %s103 = sphi 0, %s102
    %s117 = sphi 0, %s103
    %s125 = sphi 0, %s127
    %s128 = sphi 0, %s125
    %s129 = sphi 0, %s128
    %s145 = sphi 0, %s129
  $region4: #{conv_block_forward.3} parent=0 // loop_header_branch
    %13 = sbr.rel (%p11) target = $region8
  $region5: #{conv_block_forward.3} parent=0 // loop_body
    %s15 = ssub.s32 %s10, 1
    %s16 = ssub.s32 %s10, 2
    %s23 = sadd.s32 1, %s18
    %p24 = scmp.ge.s32.totalorder %s23, 1
    %s25 = scalar_select %p24, 0, %s23
    %s26 = sadd.s32 1, %s17
    %s27 = scalar_select %p24, %s26, %s17
    %p28 = scmp.ge.s32.totalorder %s27, 2
    %s29 = scalar_select %p28, 0, %s27
    %s30 = ssub.s32 %s17, %s29
    %s31 = ssub.s32 %s18, %s25
    %s32 = sor.u32 %s30, %s31
    %p33 = scmp.eq.s32.totalorder %s32, 0
    %s35 = sadd.s32 %s34, 1
    %s36 = scalar_select %p33, %s34, %s35
    %p39 = pneg %p33
    %p40 = scmp.eq.s32.totalorder %s10, 1
    %p41 = por %p39, %p40
    %p42 = scmp.ne.s32.totalorder %s34, %s37
    %p43 = scmp.eq.s32.totalorder %s10, 0
    %p44 = por %p42, %p43
    %p45 = scmp.ne.s32.totalorder %s34, %s37
    %p46 = scmp.eq.s32.totalorder %s15, 1
    %p47 = por %p45, %p46
    %p48 = scmp.ne.s32.totalorder %s37, %s38
    %p49 = scmp.eq.s32.totalorder %s15, 0
    %p50 = por %p48, %p49
    %p51 = scmp.ne.s32.totalorder %s37, %s38
    %p52 = scmp.eq.s32.totalorder %s16, 1
    %p53 = por %p51, %p52
    %p55 = scmp.ne.s32.totalorder %s38, %s54
    %p56 = scmp.eq.s32.totalorder %s16, 0
    %p57 = por %p55, %p56
    %s59 = sadd.s32 %s58, 1
    %p62 = scmp.eq.s32.totalorder %s10, 1
    %p63 = scmp.ne.s32.totalorder %s58, %s60
    %p64 = scmp.eq.s32.totalorder %s10, 0
    %p65 = por %p63, %p64
    %p66 = scmp.ne.s32.totalorder %s58, %s60
    %p67 = scmp.eq.s32.totalorder %s15, 1
    %p68 = por %p66, %p67
    %p69 = scmp.ne.s32.totalorder %s60, %s61
    %p70 = scmp.eq.s32.totalorder %s15, 0
    %p71 = por %p69, %p70
    %p72 = scmp.ne.s32.totalorder %s60, %s61
    %p73 = scmp.eq.s32.totalorder %s16, 1
    %p74 = por %p72, %p73
    %p76 = scmp.ne.s32.totalorder %s61, %s75
    %p77 = scmp.eq.s32.totalorder %s16, 0
    %p78 = por %p76, %p77
    %s80 = sadd.s32 %s79, 1
    %p83 = scmp.eq.s32.totalorder %s10, 1
    %p84 = scmp.ne.s32.totalorder %s79, %s81
    %p85 = scmp.eq.s32.totalorder %s10, 0
    %p86 = por %p84, %p85
    %p87 = scmp.ne.s32.totalorder %s79, %s81
    %p88 = scmp.eq.s32.totalorder %s15, 1
    %p89 = por %p87, %p88
    %p90 = scmp.ne.s32.totalorder %s81, %s82
    %p91 = scmp.eq.s32.totalorder %s15, 0
    %p92 = por %p90, %p91
    %p93 = scmp.ne.s32.totalorder %s81, %s82
    %p94 = scmp.eq.s32.totalorder %s16, 1
    %p95 = por %p93, %p94
    %p97 = scmp.ne.s32.totalorder %s82, %s96
    %p98 = scmp.eq.s32.totalorder %s16, 0
    %p99 = por %p97, %p98
    %s101 = sadd.s32 %s100, 1
    %p104 = scmp.eq.s32.totalorder %s10, 1
    %p105 = scmp.ne.s32.totalorder %s100, %s102
    %p106 = scmp.eq.s32.totalorder %s10, 0
    %p107 = por %p105, %p106
    %p108 = scmp.ne.s32.totalorder %s100, %s102
    %p109 = scmp.eq.s32.totalorder %s15, 1
    %p110 = por %p108, %p109
    %p111 = scmp.ne.s32.totalorder %s102, %s103
    %p112 = scmp.eq.s32.totalorder %s15, 0
    %p113 = por %p111, %p112
    %p114 = scmp.ne.s32.totalorder %s102, %s103
    %p115 = scmp.eq.s32.totalorder %s16, 1
    %p116 = por %p114, %p115
    %p118 = scmp.ne.s32.totalorder %s103, %s117
    %p119 = scmp.eq.s32.totalorder %s16, 0
    %p120 = por %p118, %p119
    %s121 = ssub.s32 %s17, %s29
    %s122 = ssub.s32 %s18, %s25
    %s123 = sor.u32 %s121, %s122
    %p124 = scmp.eq.s32.totalorder %s123, 0
    %s126 = sadd.s32 %s125, 1
    %s127 = scalar_select %p124, %s125, %s126
    %p130 = pneg %p124
    %p131 = scmp.eq.s32.totalorder %s10, 1
    %p132 = por %p130, %p131
    %p133 = scmp.ne.s32.totalorder %s125, %s128
    %p134 = scmp.eq.s32.totalorder %s10, 0
    %p135 = por %p133, %p134
    %p136 = scmp.ne.s32.totalorder %s125, %s128
    %p137 = scmp.eq.s32.totalorder %s15, 1
    %p138 = por %p136, %p137
    %p139 = scmp.ne.s32.totalorder %s128, %s129
    %p140 = scmp.eq.s32.totalorder %s15, 0
    %p141 = por %p139, %p140
    %p142 = scmp.ne.s32.totalorder %s128, %s129
    %p143 = scmp.eq.s32.totalorder %s16, 1
    %p144 = por %p142, %p143
    %p146 = scmp.ne.s32.totalorder %s129, %s145
    %p147 = scmp.eq.s32.totalorder %s16, 0
    %p148 = por %p146, %p147
    %p149 = scmp.le.s32.totalorder 1, %s10
    %p150 = scmp.lt.s32.totalorder %s10, 3
    %p151 = pnand %p149, %p150
    %p152 = pneg %p151
    // Predicated region
    $region9: #{conv_block_forward.3} parent=5 // pred_check
      _
    $region10: #{conv_block_forward.3} parent=5 // pred_check_branch
      %154 = sbr.rel (%p151) target = $region12
    $region11: #{conv_block_forward.3} parent=5 // pred_region
      %s155 = ssub.s32 %s10, 1
      // Predicated region
      $region13: #{conv_block_forward.3} parent=11 // pred_check
        %p156 = pneg %p71
      $region14: #{conv_block_forward.3} parent=11 // pred_check_branch
        %158 = sbr.rel (%p156) target = $region16
      $region15: #{conv_block_forward.3} parent=11 // pred_region
        _
      $region16: #{conv_block_forward.3} parent=11 // pred_fallthru
        _
      // Predicated region
      $region17: #{conv_block_forward.3} parent=11 // pred_check
        %p159 = pneg %p92
      $region18: #{conv_block_forward.3} parent=11 // pred_check_branch
        %161 = sbr.rel (%p159) target = $region20
      $region19: #{conv_block_forward.3} parent=11 // pred_region
        _
      $region20: #{conv_block_forward.3} parent=11 // pred_fallthru
        _
      // Predicated region
      $region21: #{conv_block_forward.3} parent=11 // pred_check
        %p162 = pneg %p113
      $region22: #{conv_block_forward.3} parent=11 // pred_check_branch
        %164 = sbr.rel (%p162) target = $region24
      $region23: #{conv_block_forward.3} parent=11 // pred_region
        _
      $region24: #{conv_block_forward.3} parent=11 // pred_fallthru
        _
    $region12: #{conv_block_forward.3} parent=5 // pred_fallthru
      _
    %p165 = scmp.lt.s32.totalorder %s10, 2
    // Predicated region
    $region25: #{conv_block_forward.3} parent=5 // pred_check
      %p166 = pneg %p165
    $region26: #{conv_block_forward.3} parent=5 // pred_check_branch
      %168 = sbr.rel (%p166) target = $region28
    $region27: #{conv_block_forward.3} parent=5 // pred_region
      // Predicated region
      $region29: #{conv_block_forward.3} parent=27 // pred_check
        %p169 = pneg %p44
      $region30: #{conv_block_forward.3} parent=27 // pred_check_branch
        %171 = sbr.rel (%p169) target = $region32
      $region31: #{conv_block_forward.3} parent=27 // pred_region
        %p172 = scmp.lt.s32.totalorder %s17, 1
        %s173 = scalar_select %p172, %s17, 1
        %p174 = scmp.lt.s32.totalorder %s18, 0
        %s175 = scalar_select %p174, %s18, 0
        %s176 = smul.addr %s175, 36
        %s177 = smul.addr %s173, 36
        %s178 = sadd.s32 %s176, %s177
        %s179 = smul.addr %s178, 4
        %s180 = scalar_lea.vmem %s0, %s179
      $region32: #{conv_block_forward.3} parent=27 // pred_fallthru
        _
    $region28: #{conv_block_forward.3} parent=5 // pred_fallthru
      _
    %p181 = scmp.le.s32.totalorder 1, %s10
    %p182 = scmp.lt.s32.totalorder %s10, 3
    %p183 = pnand %p181, %p182
    %p184 = pneg %p183
    // Predicated region
    $region33: #{conv_block_forward.3} parent=5 // pred_check
      _
    $region34: #{conv_block_forward.3} parent=5 // pred_check_branch
      %186 = sbr.rel (%p183) target = $region36
    $region35: #{conv_block_forward.3} parent=5 // pred_region
      %s187 = ssub.s32 %s10, 1
      %p188 = scmp.lt.s32.totalorder %s19, 1
      %s189 = scalar_select %p188, %s19, 1
      %p190 = scmp.lt.s32.totalorder %s20, 0
      %s191 = scalar_select %p190, %s20, 0
      %s192 = smul.addr %s191, 36
      %s193 = smul.addr %s189, 36
      %s194 = sadd.s32 %s192, %s193
      %s195 = smul.addr %s194, 4
      %s196 = scalar_lea.vmem %s0, %s195
      %p197 = pneg %p50
      %p198 = pneg %p47
      %p199 = pneg %p71
      %p200 = pneg %p68
      %p201 = pneg %p92
      %p202 = pneg %p89
      %p203 = pneg %p113
      %p204 = pneg %p110
      %p205 = pneg %p141
      %p206 = pneg %p138
      %s207 = smul.u32 2, %s20
      %p208 = scmp.lt.s32.totalorder %s19, 1
      %s209 = scalar_select %p208, %s19, 1
      %p210 = scmp.lt.s32.totalorder %s207, 1
      %s211 = scalar_select %p210, %s207, 1
      %s212 = smul.addr %s209, 2
      %s213 = sadd.s32 %s211, %s212
      %s214 = smul.addr %s213, 8
      %s215 = scalar_lea.vmem %s4, %s214
      %p216 = scmp.lt.s32.totalorder %s19, 1
      %s217 = scalar_select %p216, %s19, 1
      %p218 = scmp.lt.s32.totalorder %s20, 0
      %s219 = scalar_select %p218, %s20, 0
      %s220 = smul.addr %s219, 36
      %s221 = smul.addr %s217, 36
      %s222 = sadd.s32 %s220, %s221
      %s223 = smul.addr %s222, 4
      %s224 = scalar_lea.vmem %s0, %s223
      %s225 = smul.u32 2, %s20
      %p226 = scmp.lt.s32.totalorder %s19, 1
      %s227 = scalar_select %p226, %s19, 1
      %p228 = scmp.lt.s32.totalorder %s225, 1
      %s229 = scalar_select %p228, %s225, 1
      %s230 = smul.addr %s227, 2
      %s231 = sadd.s32 %s229, %s230
      %s232 = smul.addr %s231, 8
      %s233 = scalar_lea.vmem %s4, %s232
      %s234 = smul.u32 2, %s20
      %v236 = vld [vmem:[%s224] sm:$0xf]
      %v237 = vld [vmem:[%s224 + $0x4] sm:$0xf]
      %v238 = vld [vmem:[%s224 + $0x8] sm:$0xf]
      %v239 = vld [vmem:[%s224 + $0xc] sm:$0xf]
      %v240 = vld [vmem:[%s224 + $0x10] sm:$0xf]
      %v241 = vld [vmem:[%s224 + $0x14] sm:$0xf]
      %v242 = vld [vmem:[%s224 + $0x18] sm:$0xf]
      %v243 = vld [vmem:[%s224 + $0x1c] sm:$0xf]
      %v244 = vld [vmem:[%s224 + $0x20] sm:$0xf]
      %v245 = vld [vmem:[%s224 + $0x24] sm:$0xf]
      %v246 = vld [vmem:[%s224 + $0x28] sm:$0xf]
      %v247 = vld [vmem:[%s224 + $0x2c] sm:$0xf]
      %v248 = vld [vmem:[%s224 + $0x30] sm:$0xf]
      %v249 = vld [vmem:[%s224 + $0x34] sm:$0xf]
      %v250 = vld [vmem:[%s224 + $0x38] sm:$0xf]
      %v251 = vld [vmem:[%s224 + $0x3c] sm:$0xf]
      %v252 = vld [vmem:[%s224 + $0x40] sm:$0xf]
      %v253 = vld [vmem:[%s224 + $0x44] sm:$0xf]
      %v254 = vld [vmem:[%s224 + $0x48] sm:$0xf]
      %v255 = vld [vmem:[%s224 + $0x4c] sm:$0xf]
      %v256 = vld [vmem:[%s224 + $0x50] sm:$0xf]
      %v257 = vld [vmem:[%s224 + $0x54] sm:$0xf]
      %v258 = vld [vmem:[%s224 + $0x58] sm:$0xf]
      %v259 = vld [vmem:[%s224 + $0x5c] sm:$0xf]
      %v260 = vld [vmem:[%s224 + $0x60] sm:$0xf]
      %v261 = vld [vmem:[%s224 + $0x64] sm:$0xf]
      %v262 = vld [vmem:[%s224 + $0x68] sm:$0xf]
      %v263 = vld [vmem:[%s224 + $0x6c] sm:$0xf]
      %v264 = vld [vmem:[%s224 + $0x70] sm:$0xf]
      %v265 = vld [vmem:[%s224 + $0x74] sm:$0xf]
      %v266 = vld [vmem:[%s224 + $0x78] sm:$0xf]
      %v267 = vld [vmem:[%s224 + $0x7c] sm:$0xf]
      %v268 = vld [vmem:[%s1] sm:$0xf]
      %v269 = vld [vmem:[%s1 + $0x4] sm:$0x3]
      %v302 = vunpack.c.l.b16 %v236
      %v303 = vunpack.c.l.b16 %v237
      %v304 = vunpack.c.l.b16 %v238
      %v305 = vunpack.c.l.b16 %v239
      %v306 = vunpack.c.l.b16 %v240
      %v307 = vunpack.c.l.b16 %v241
      %v308 = vunpack.c.l.b16 %v242
      %v309 = vunpack.c.l.b16 %v243
      %v310 = vunpack.c.l.b16 %v244
      %v311 = vunpack.c.l.b16 %v245
      %v312 = vunpack.c.l.b16 %v246
      %v313 = vunpack.c.l.b16 %v247
      %v314 = vunpack.c.l.b16 %v248
      %v315 = vunpack.c.l.b16 %v249
      %v316 = vunpack.c.l.b16 %v250
      %v317 = vunpack.c.l.b16 %v251
      %v318 = vunpack.c.l.b16 %v252
      %v319 = vunpack.c.l.b16 %v253
      %v320 = vunpack.c.l.b16 %v254
      %v321 = vunpack.c.l.b16 %v255
      %v322 = vunpack.c.l.b16 %v256
      %v323 = vunpack.c.l.b16 %v257
      %v324 = vunpack.c.l.b16 %v258
      %v325 = vunpack.c.l.b16 %v259
      %v326 = vunpack.c.l.b16 %v260
      %v327 = vunpack.c.l.b16 %v261
      %v328 = vunpack.c.l.b16 %v262
      %v329 = vunpack.c.l.b16 %v263
      %v330 = vunpack.c.l.b16 %v264
      %v331 = vunpack.c.l.b16 %v265
      %v332 = vunpack.c.l.b16 %v266
      %v333 = vunpack.c.l.b16 %v267
      %v334 = vpack.c.b16 %v303, %v302
      %v335 = vpack.c.b16 %v305, %v304
      %v336 = vpack.c.b16 %v307, %v306
      %v337 = vpack.c.b16 %v309, %v308
      %v338 = vpack.c.b16 %v311, %v310
      %v339 = vpack.c.b16 %v313, %v312
      %v340 = vpack.c.b16 %v315, %v314
      %v341 = vpack.c.b16 %v317, %v316
      %v342 = vpack.c.b16 %v319, %v318
      %v343 = vpack.c.b16 %v321, %v320
      %v344 = vpack.c.b16 %v323, %v322
      %v345 = vpack.c.b16 %v325, %v324
      %v346 = vpack.c.b16 %v327, %v326
      %v347 = vpack.c.b16 %v329, %v328
      %v348 = vpack.c.b16 %v331, %v330
      %v349 = vpack.c.b16 %v333, %v332
      %v352 = vunpack.c.l.b16 %v268
      %v353 = vunpack.c.l.b16 %v269
      %v354 = vpack.c.b16 %v353, %v352
      %vm355 = vcmask 97280
      %v357 = vsel %vm355, %v334, 0
      %v360 = vsel %vm355, %v335, 0
      %v363 = vsel %vm355, %v336, 0
      %v366 = vsel %vm355, %v337, 0
      %v369 = vsel %vm355, %v338, 0
      %v372 = vsel %vm355, %v339, 0
      %v375 = vsel %vm355, %v340, 0
      %v378 = vsel %vm355, %v341, 0
      %v381 = vsel %vm355, %v342, 0
      %v384 = vsel %vm355, %v343, 0
      %v387 = vsel %vm355, %v344, 0
      %v390 = vsel %vm355, %v345, 0
      %v393 = vsel %vm355, %v346, 0
      %v396 = vsel %vm355, %v347, 0
      %v399 = vsel %vm355, %v348, 0
      %v402 = vsel %vm355, %v349, 0
      %vm404 = vcmask 1045504
      %v406 = vsel %vm404, %v354, 0
      %408 = vmatprep.subr.bf16.mxu0 0
      %409 = vmatpush1.bf16.msra.mxu0 %v406
      %410 = vmatprep.subr.bf16.mxu0 0
      %411 = vmatpush1.bf16.msra.mxu0 0
      %412 = vmatprep.subr.bf16.mxu0 0
      %413 = vmatpush1.bf16.msra.mxu0 0
      %414 = vmatprep.subr.bf16.mxu0 0
      %415 = vmatpush1.bf16.msra.mxu0 0
      %416 = vmatprep.subr.bf16.mxu0 0
      %417 = vmatpush1.bf16.msra.mxu0 0
      %418 = vmatprep.subr.bf16.mxu0 0
      %419 = vmatpush1.bf16.msra.mxu0 0
      %420 = vmatprep.subr.bf16.mxu0 0
      %421 = vmatpush1.bf16.msra.mxu0 0
      %422 = vmatprep.subr.bf16.mxu0 0
      %423 = vmatpush1.bf16.msra.mxu0 0
      %424 = vmatprep.subr.bf16.mxu0 0
      %425 = vmatpush1.bf16.msra.mxu0 0
      %426 = vmatprep.subr.bf16.mxu0 0
      %427 = vmatpush1.bf16.msra.mxu0 0
      %428 = vmatprep.subr.bf16.mxu0 0
      %429 = vmatpush1.bf16.msra.mxu0 0
      %430 = vmatprep.subr.bf16.mxu0 0
      %431 = vmatpush1.bf16.msra.mxu0 0
      %432 = vmatprep.subr.bf16.mxu0 0
      %433 = vmatpush1.bf16.msra.mxu0 0
      %434 = vmatprep.subr.bf16.mxu0 0
      %435 = vmatpush1.bf16.msra.mxu0 0
      %436 = vmatprep.subr.bf16.mxu0 0
      %437 = vmatpush1.bf16.msra.mxu0 0
      %438 = vmatprep.subr.bf16.mxu0 0
      %439 = vmatpush1.bf16.msra.mxu0 0
      %440 = vmatprep.mubr.bf16.mxu0 0
      %441 = vmatmul.mubr.bf16.gmra.mrb[0].mxu0 %v357
      %v442 = vpop.f32.mrb[0].mxu0
      %v443 = vadd.f32 0.0, %v442
      %v444 = vpop.f32.mrb[0].mxu0
      %v445 = vpop.f32.mrb[0].mxu0
      %v446 = vadd.f32 0.0, %v445
      %v447 = vpop.f32.mrb[0].mxu0
      %448 = vmatprep.mubr.bf16.mxu0 0
      %449 = vmatmul.mubr.bf16.gmra.mrb[0].mxu0 %v360
      %v450 = vpop.f32.mrb[0].mxu0
      %v451 = vadd.f32 0.0, %v450
      %v452 = vpop.f32.mrb[0].mxu0
      %v453 = vpop.f32.mrb[0].mxu0
      %v454 = vadd.f32 0.0, %v453
      %v455 = vpop.f32.mrb[0].mxu0
      %456 = vmatprep.mubr.bf16.mxu0 0
      %457 = vmatmul.mubr.bf16.gmra.mrb[0].mxu0 %v363
      %v458 = vpop.f32.mrb[0].mxu0
      %v459 = vadd.f32 0.0, %v458
      %v460 = vpop.f32.mrb[0].mxu0
      %v461 = vpop.f32.mrb[0].mxu0
      %v462 = vadd.f32 0.0, %v461
      %v463 = vpop.f32.mrb[0].mxu0
      %464 = vmatprep.mubr.bf16.mxu0 0
      %465 = vmatmul.mubr.bf16.gmra.mrb[0].mxu0 %v366
      %v466 = vpop.f32.mrb[0].mxu0
      %v467 = vadd.f32 0.0, %v466
      %v468 = vpop.f32.mrb[0].mxu0
      %v469 = vpop.f32.mrb[0].mxu0
      %v470 = vadd.f32 0.0, %v469
      %v471 = vpop.f32.mrb[0].mxu0
      %472 = vmatprep.mubr.bf16.mxu0 0
      %473 = vmatmul.mubr.bf16.gmra.mrb[0].mxu0 %v369
      %v474 = vpop.f32.mrb[0].mxu0
      %v475 = vadd.f32 0.0, %v474
      %v476 = vpop.f32.mrb[0].mxu0
      %v477 = vpop.f32.mrb[0].mxu0
      %v478 = vadd.f32 0.0, %v477
      %v479 = vpop.f32.mrb[0].mxu0
      %480 = vmatprep.mubr.bf16.mxu0 0
      %481 = vmatmul.mubr.bf16.gmra.mrb[0].mxu0 %v372
      %v482 = vpop.f32.mrb[0].mxu0
      %v483 = vadd.f32 0.0, %v482
      %v484 = vpop.f32.mrb[0].mxu0
      %v485 = vpop.f32.mrb[0].mxu0
      %v486 = vadd.f32 0.0, %v485
      %v487 = vpop.f32.mrb[0].mxu0
      %488 = vmatprep.mubr.bf16.mxu0 0
      %489 = vmatmul.mubr.bf16.gmra.mrb[0].mxu0 %v375
      %v490 = vpop.f32.mrb[0].mxu0
      %v491 = vadd.f32 0.0, %v490
      %v492 = vpop.f32.mrb[0].mxu0
      %v493 = vpop.f32.mrb[0].mxu0
      %v494 = vadd.f32 0.0, %v493
      %v495 = vpop.f32.mrb[0].mxu0
      %496 = vmatprep.mubr.bf16.mxu0 0
      %497 = vmatmul.mubr.bf16.gmra.mrb[0].mxu0 %v378
      %v498 = vpop.f32.mrb[0].mxu0
      %v499 = vadd.f32 0.0, %v498
      %v500 = vpop.f32.mrb[0].mxu0
      %v501 = vpop.f32.mrb[0].mxu0
      %v502 = vadd.f32 0.0, %v501
      %v503 = vpop.f32.mrb[0].mxu0
      %504 = vmatprep.mubr.bf16.mxu0 0
      %505 = vmatmul.mubr.bf16.gmra.mrb[0].mxu0 %v381
      %v506 = vpop.f32.mrb[0].mxu0
      %v507 = vadd.f32 0.0, %v506
      %v508 = vpop.f32.mrb[0].mxu0
      %v509 = vpop.f32.mrb[0].mxu0
      %v510 = vadd.f32 0.0, %v509
      %v511 = vpop.f32.mrb[0].mxu0
      %512 = vmatprep.mubr.bf16.mxu0 0
      %513 = vmatmul.mubr.bf16.gmra.mrb[0].mxu0 %v384
      %v514 = vpop.f32.mrb[0].mxu0
      %v515 = vadd.f32 0.0, %v514
      %v516 = vpop.f32.mrb[0].mxu0
      %v517 = vpop.f32.mrb[0].mxu0
      %v518 = vadd.f32 0.0, %v517
      %v519 = vpop.f32.mrb[0].mxu0
      %520 = vmatprep.mubr.bf16.mxu0 0
      %521 = vmatmul.mubr.bf16.gmra.mrb[0].mxu0 %v387
      %v522 = vpop.f32.mrb[0].mxu0
      %v523 = vadd.f32 0.0, %v522
      %v524 = vpop.f32.mrb[0].mxu0
      %v525 = vpop.f32.mrb[0].mxu0
      %v526 = vadd.f32 0.0, %v525
      %v527 = vpop.f32.mrb[0].mxu0
      %528 = vmatprep.mubr.bf16.mxu0 0
      %529 = vmatmul.mubr.bf16.gmra.mrb[0].mxu0 %v390
      %v530 = vpop.f32.mrb[0].mxu0
      %v531 = vadd.f32 0.0, %v530
      %v532 = vpop.f32.mrb[0].mxu0
      %v533 = vpop.f32.mrb[0].mxu0
      %v534 = vadd.f32 0.0, %v533
      %v535 = vpop.f32.mrb[0].mxu0
      %536 = vmatprep.mubr.bf16.mxu0 0
      %537 = vmatmul.mubr.bf16.gmra.mrb[0].mxu0 %v393
      %v538 = vpop.f32.mrb[0].mxu0
      %v539 = vadd.f32 0.0, %v538
      %v540 = vpop.f32.mrb[0].mxu0
      %v541 = vpop.f32.mrb[0].mxu0
      %v542 = vadd.f32 0.0, %v541
      %v543 = vpop.f32.mrb[0].mxu0
      %544 = vmatprep.mubr.bf16.mxu0 0
      %545 = vmatmul.mubr.bf16.gmra.mrb[0].mxu0 %v396
      %v546 = vpop.f32.mrb[0].mxu0
      %v547 = vadd.f32 0.0, %v546
      %v548 = vpop.f32.mrb[0].mxu0
      %v549 = vpop.f32.mrb[0].mxu0
      %v550 = vadd.f32 0.0, %v549
      %v551 = vpop.f32.mrb[0].mxu0
      %552 = vmatprep.mubr.bf16.mxu0 0
      %553 = vmatmul.mubr.bf16.gmra.mrb[0].mxu0 %v399
      %v554 = vpop.f32.mrb[0].mxu0
      %v555 = vadd.f32 0.0, %v554
      %v556 = vpop.f32.mrb[0].mxu0
      %v557 = vpop.f32.mrb[0].mxu0
      %v558 = vadd.f32 0.0, %v557
      %v559 = vpop.f32.mrb[0].mxu0
      %560 = vmatprep.mubr.bf16.mxu0 0
      %561 = vmatmul.mubr.bf16.gmra.mrb[0].mxu0 %v402
      %v562 = vpop.f32.mrb[0].mxu0
      %v563 = vadd.f32 0.0, %v562
      %v564 = vpop.f32.mrb[0].mxu0
      %v565 = vpop.f32.mrb[0].mxu0
      %v566 = vadd.f32 0.0, %v565
      %v567 = vpop.f32.mrb[0].mxu0
      %568 = vdwg.mxu0
      %569 = vst [vmem:[#allocation2] sm:$0xff] %v443
      %570 = vst [vmem:[#allocation2 + $0x8] sm:$0xff] %v446
      %571 = vst [vmem:[#allocation2 + $0x10] sm:$0xff] %v451
      %572 = vst [vmem:[#allocation2 + $0x18] sm:$0xff] %v454
      %573 = vst [vmem:[#allocation2 + $0x20] sm:$0xff] %v459
      %574 = vst [vmem:[#allocation2 + $0x28] sm:$0xff] %v462
      %575 = vst [vmem:[#allocation2 + $0x30] sm:$0xff] %v467
      %576 = vst [vmem:[#allocation2 + $0x38] sm:$0xff] %v470
      %577 = vst [vmem:[#allocation2 + $0x40] sm:$0xff] %v475
      %578 = vst [vmem:[#allocation2 + $0x48] sm:$0xff] %v478
      %579 = vst [vmem:[#allocation2 + $0x50] sm:$0xff] %v483
      %580 = vst [vmem:[#allocation2 + $0x58] sm:$0xff] %v486
      %581 = vst [vmem:[#allocation2 + $0x60] sm:$0xff] %v491
      %582 = vst [vmem:[#allocation2 + $0x68] sm:$0xff] %v494
      %583 = vst [vmem:[#allocation2 + $0x70] sm:$0xff] %v499
      %584 = vst [vmem:[#allocation2 + $0x78] sm:$0xff] %v502
      %585 = vst [vmem:[#allocation2 + $0x80] sm:$0xff] %v507
      %586 = vst [vmem:[#allocation2 + $0x88] sm:$0xff] %v510
      %587 = vst [vmem:[#allocation2 + $0x90] sm:$0xff] %v515
      %588 = vst [vmem:[#allocation2 + $0x98] sm:$0xff] %v518
      %589 = vst [vmem:[#allocation2 + $0xa0] sm:$0xff] %v523
      %590 = vst [vmem:[#allocation2 + $0xa8] sm:$0xff] %v526
      %591 = vst [vmem:[#allocation2 + $0xb0] sm:$0xff] %v531
      %592 = vst [vmem:[#allocation2 + $0xb8] sm:$0xff] %v534
      %593 = vst [vmem:[#allocation2 + $0xc0] sm:$0xff] %v539
      %594 = vst [vmem:[#allocation2 + $0xc8] sm:$0xff] %v542
      %595 = vst [vmem:[#allocation2 + $0xd0] sm:$0xff] %v547
      %596 = vst [vmem:[#allocation2 + $0xd8] sm:$0xff] %v550
      %597 = vst [vmem:[#allocation2 + $0xe0] sm:$0xff] %v555
      %598 = vst [vmem:[#allocation2 + $0xe8] sm:$0xff] %v558
      %599 = vst [vmem:[#allocation2 + $0xf0] sm:$0xff] %v563
      %600 = vst [vmem:[#allocation2 + $0xf8] sm:$0xff] %v566
      %v601 = vld [vmem:[#allocation2] sm:$0xff]
      %v602 = vld [vmem:[#allocation2 + $0x8] sm:$0xff]
      %v603 = vld [vmem:[#allocation2 + $0x10] sm:$0xff]
      %v604 = vld [vmem:[#allocation2 + $0x18] sm:$0xff]
      %v605 = vld [vmem:[#allocation2 + $0x20] sm:$0xff]
      %v606 = vld [vmem:[#allocation2 + $0x28] sm:$0xff]
      %v607 = vld [vmem:[#allocation2 + $0x30] sm:$0xff]
      %v608 = vld [vmem:[#allocation2 + $0x38] sm:$0xff]
      %v609 = vld [vmem:[#allocation2 + $0x40] sm:$0xff]
      %v610 = vld [vmem:[#allocation2 + $0x48] sm:$0xff]
      %v611 = vld [vmem:[#allocation2 + $0x50] sm:$0xff]
      %v612 = vld [vmem:[#allocation2 + $0x58] sm:$0xff]
      %v613 = vld [vmem:[#allocation2 + $0x60] sm:$0xff]
      %v614 = vld [vmem:[#allocation2 + $0x68] sm:$0xff]
      %v615 = vld [vmem:[#allocation2 + $0x70] sm:$0xff]
      %v616 = vld [vmem:[#allocation2 + $0x78] sm:$0xff]
      %v617 = vld [vmem:[#allocation2 + $0x80] sm:$0xff]
      %v618 = vld [vmem:[#allocation2 + $0x88] sm:$0xff]
      %v619 = vld [vmem:[#allocation2 + $0x90] sm:$0xff]
      %v620 = vld [vmem:[#allocation2 + $0x98] sm:$0xff]
      %v621 = vld [vmem:[#allocation2 + $0xa0] sm:$0xff]
      %v622 = vld [vmem:[#allocation2 + $0xa8] sm:$0xff]
      %v623 = vld [vmem:[#allocation2 + $0xb0] sm:$0xff]
      %v624 = vld [vmem:[#allocation2 + $0xb8] sm:$0xff]
      %v625 = vld [vmem:[#allocation2 + $0xc0] sm:$0xff]
      %v626 = vld [vmem:[#allocation2 + $0xc8] sm:$0xff]
      %v627 = vld [vmem:[#allocation2 + $0xd0] sm:$0xff]
      %v628 = vld [vmem:[#allocation2 + $0xd8] sm:$0xff]
      %v629 = vld [vmem:[#allocation2 + $0xe0] sm:$0xff]
      %v630 = vld [vmem:[#allocation2 + $0xe8] sm:$0xff]
      %v631 = vld [vmem:[#allocation2 + $0xf0] sm:$0xff]
      %v632 = vld [vmem:[#allocation2 + $0xf8] sm:$0xff]
      %v633 = vld [vmem:[%s224 + $0x8] sm:$0xf]
      %v634 = vld [vmem:[%s224 + $0xc] sm:$0xf]
      %v635 = vld [vmem:[%s224 + $0x10] sm:$0xf]
      %v636 = vld [vmem:[%s224 + $0x14] sm:$0xf]
      %v637 = vld [vmem:[%s224 + $0x18] sm:$0xf]
      %v638 = vld [vmem:[%s224 + $0x1c] sm:$0xf]
      %v639 = vld [vmem:[%s224 + $0x20] sm:$0xf]
      %v640 = vld [vmem:[%s224 + $0x24] sm:$0xf]
      %v641 = vld [vmem:[%s224 + $0x28] sm:$0xf]
      %v642 = vld [vmem:[%s224 + $0x2c] sm:$0xf]
      %v643 = vld [vmem:[%s224 + $0x30] sm:$0xf]
      %v644 = vld [vmem:[%s224 + $0x34] sm:$0xf]
      %v645 = vld [vmem:[%s224 + $0x38] sm:$0xf]
      %v646 = vld [vmem:[%s224 + $0x3c] sm:$0xf]
      %v647 = vld [vmem:[%s224 + $0x40] sm:$0xf]
      %v648 = vld [vmem:[%s224 + $0x44] sm:$0xf]
      %v649 = vld [vmem:[%s224 + $0x48] sm:$0xf]
      %v650 = vld [vmem:[%s224 + $0x4c] sm:$0xf]
      %v651 = vld [vmem:[%s224 + $0x50] sm:$0xf]
      %v652 = vld [vmem:[%s224 + $0x54] sm:$0xf]
      %v653 = vld [vmem:[%s224 + $0x58] sm:$0xf]
      %v654 = vld [vmem:[%s224 + $0x5c] sm:$0xf]
      %v655 = vld [vmem:[%s224 + $0x60] sm:$0xf]
      %v656 = vld [vmem:[%s224 + $0x64] sm:$0xf]
      %v657 = vld [vmem:[%s224 + $0x68] sm:$0xf]
      %v658 = vld [vmem:[%s224 + $0x6c] sm:$0xf]
      %v659 = vld [vmem:[%s224 + $0x70] sm:$0xf]
      %v660 = vld [vmem:[%s224 + $0x74] sm:$0xf]
      %v661 = vld [vmem:[%s224 + $0x78] sm:$0xf]
      %v662 = vld [vmem:[%s224 + $0x7c] sm:$0xf]
      %v663 = vld [vmem:[%s224 + $0x80] sm:$0xf]
      %v664 = vld [vmem:[%s224 + $0x84] sm:$0xf]
      %s665 = scalar_lea.vmem %s1, 8
      %v666 = vld [vmem:[%s665] sm:$0xf]
      %v667 = vld [vmem:[%s665 + $0x4] sm:$0x3]
      %v700 = vunpack.c.l.b16 %v633
      %v701 = vunpack.c.l.b16 %v634
      %v702 = vunpack.c.l.b16 %v635
      %v703 = vunpack.c.l.b16 %v636
      %v704 = vunpack.c.l.b16 %v637
      %v705 = vunpack.c.l.b16 %v638
      %v706 = vunpack.c.l.b16 %v639
      %v707 = vunpack.c.l.b16 %v640
      %v708 = vunpack.c.l.b16 %v641
      %v709 = vunpack.c.l.b16 %v642
      %v710 = vunpack.c.l.b16 %v643
      %v711 = vunpack.c.l.b16 %v644
      %v712 = vunpack.c.l.b16 %v645
      %v713 = vunpack.c.l.b16 %v646
      %v714 = vunpack.c.l.b16 %v647
      %v715 = vunpack.c.l.b16 %v648
      %v716 = vunpack.c.l.b16 %v649
      %v717 = vunpack.c.l.b16 %v650
      %v718 = vunpack.c.l.b16 %v651
      %v719 = vunpack.c.l.b16 %v652
      %v720 = vunpack.c.l.b16 %v653
      %v721 = vunpack.c.l.b16 %v654
      %v722 = vunpack.c.l.b16 %v655
      %v723 = vunpack.c.l.b16 %v656
      %v724 = vunpack.c.l.b16 %v657
      %v725 = vunpack.c.l.b16 %v658
      %v726 = vunpack.c.l.b16 %v659
      %v727 = vunpack.c.l.b16 %v660
      %v728 = vunpack.c.l.b16 %v661
      %v729 = vunpack.c.l.b16 %v662
      %v730 = vunpack.c.l.b16 %v663
      %v731 = vunpack.c.l.b16 %v664
      %v732 = vpack.c.b16 %v701, %v700
      %v733 = vpack.c.b16 %v703, %v702
      %v734 = vpack.c.b16 %v705, %v704
      %v735 = vpack.c.b16 %v707, %v706
      %v736 = vpack.c.b16 %v709, %v708
      %v737 = vpack.c.b16 %v711, %v710
      %v738 = vpack.c.b16 %v713, %v712
      %v739 = vpack.c.b16 %v715, %v714
      %v740 = vpack.c.b16 %v717, %v716
      %v741 = vpack.c.b16 %v719, %v718
      %v742 = vpack.c.b16 %v721, %v720
      %v743 = vpack.c.b16 %v723, %v722
      %v744 = vpack.c.b16 %v725, %v724
      %v745 = vpack.c.b16 %v727, %v726
      %v746 = vpack.c.b16 %v729, %v728
      %v747 = vpack.c.b16 %v731, %v730
      %v750 = vunpack.c.l.b16 %v666
      %v751 = vunpack.c.l.b16 %v667
      %v752 = vpack.c.b16 %v751, %v750
      %v754 = vsel %vm355, %v732, 0
      %v757 = vsel %vm355, %v733, 0
      %v760 = vsel %vm355, %v734, 0
      %v763 = vsel %vm355, %v735, 0
      %v766 = vsel %vm355, %v736, 0
      %v769 = vsel %vm355, %v737, 0
      %v772 = vsel %vm355, %v738, 0
      %v775 = vsel %vm355, %v739, 0
      %v778 = vsel %vm355, %v740, 0
      %v781 = vsel %vm355, %v741, 0
      %v784 = vsel %vm355, %v742, 0
      %v787 = vsel %vm355, %v743, 0
      %v790 = vsel %vm355, %v744, 0
      %v793 = vsel %vm355, %v745, 0
      %v796 = vsel %vm355, %v746, 0
      %v799 = vsel %vm355, %v747, 0
      %v802 = vsel %vm404, %v752, 0
      %804 = vmatprep.subr.bf16.mxu0 0
      %805 = vmatpush1.bf16.msra.mxu0 %v802
      %806 = vmatprep.subr.bf16.mxu0 0
      %807 = vmatpush1.bf16.msra.mxu0 0
      %808 = vmatprep.subr.bf16.mxu0 0
      %809 = vmatpush1.bf16.msra.mxu0 0
      %810 = vmatprep.subr.bf16.mxu0 0
      %811 = vmatpush1.bf16.msra.mxu0 0
      %812 = vmatprep.subr.bf16.mxu0 0
      %813 = vmatpush1.bf16.msra.mxu0 0
      %814 = vmatprep.subr.bf16.mxu0 0
      %815 = vmatpush1.bf16.msra.mxu0 0
      %816 = vmatprep.subr.bf16.mxu0 0
      %817 = vmatpush1.bf16.msra.mxu0 0
      %818 = vmatprep.subr.bf16.mxu0 0
      %819 = vmatpush1.bf16.msra.mxu0 0
      %820 = vmatprep.subr.bf16.mxu0 0
      %821 = vmatpush1.bf16.msra.mxu0 0
      %822 = vmatprep.subr.bf16.mxu0 0
      %823 = vmatpush1.bf16.msra.mxu0 0
      %824 = vmatprep.subr.bf16.mxu0 0
      %825 = vmatpush1.bf16.msra.mxu0 0
      %826 = vmatprep.subr.bf16.mxu0 0
      %827 = vmatpush1.bf16.msra.mxu0 0
      %828 = vmatprep.subr.bf16.mxu0 0
      %829 = vmatpush1.bf16.msra.mxu0 0
      %830 = vmatprep.subr.bf16.mxu0 0
      %831 = vmatpush1.bf16.msra.mxu0 0
      %832 = vmatprep.subr.bf16.mxu0 0
      %833 = vmatpush1.bf16.msra.mxu0 0
      %834 = vmatprep.subr.bf16.mxu0 0
      %835 = vmatpush1.bf16.msra.mxu0 0
      %836 = vmatprep.mubr.bf16.mxu0 0
      %837 = vmatmul.mubr.bf16.gmra.mrb[0].mxu0 %v754
      %v838 = vpop.f32.mrb[0].mxu0
      %v839 = vadd.f32 0.0, %v838
      %v840 = vpop.f32.mrb[0].mxu0
      %v841 = vpop.f32.mrb[0].mxu0
      %v842 = vadd.f32 0.0, %v841
      %v843 = vpop.f32.mrb[0].mxu0
      %844 = vmatprep.mubr.bf16.mxu0 0
      %845 = vmatmul.mubr.bf16.gmra.mrb[0].mxu0 %v757
      %v846 = vpop.f32.mrb[0].mxu0
      %v847 = vadd.f32 0.0, %v846
      %v848 = vpop.f32.mrb[0].mxu0
      %v849 = vpop.f32.mrb[0].mxu0
      %v850 = vadd.f32 0.0, %v849
      %v851 = vpop.f32.mrb[0].mxu0
      %852 = vmatprep.mubr.bf16.mxu0 0
      %853 = vmatmul.mubr.bf16.gmra.mrb[0].mxu0 %v760
      %v854 = vpop.f32.mrb[0].mxu0
      %v855 = vadd.f32 0.0, %v854
      %v856 = vpop.f32.mrb[0].mxu0
      %v857 = vpop.f32.mrb[0].mxu0
      %v858 = vadd.f32 0.0, %v857
      %v859 = vpop.f32.mrb[0].mxu0
      %860 = vmatprep.mubr.bf16.mxu0 0
      %861 = vmatmul.mubr.bf16.gmra.mrb[0].mxu0 %v763
      %v862 = vpop.f32.mrb[0].mxu0
      %v863 = vadd.f32 0.0, %v862
      %v864 = vpop.f32.mrb[0].mxu0
      %v865 = vpop.f32.mrb[0].mxu0
      %v866 = vadd.f32 0.0, %v865
      %v867 = vpop.f32.mrb[0].mxu0
      %868 = vmatprep.mubr.bf16.mxu0 0
      %869 = vmatmul.mubr.bf16.gmra.mrb[0].mxu0 %v766
      %v870 = vpop.f32.mrb[0].mxu0
      %v871 = vadd.f32 0.0, %v870
      %v872 = vpop.f32.mrb[0].mxu0
      %v873 = vpop.f32.mrb[0].mxu0
      %v874 = vadd.f32 0.0, %v873
      %v875 = vpop.f32.mrb[0].mxu0
      %876 = vmatprep.mubr.bf16.mxu0 0
      %877 = vmatmul.mubr.bf16.gmra.mrb[0].mxu0 %v769
      %v878 = vpop.f32.mrb[0].mxu0
      %v879 = vadd.f32 0.0, %v878
      %v880 = vpop.f32.mrb[0].mxu0
      %v881 = vpop.f32.mrb[0].mxu0
      %v882 = vadd.f32 0.0, %v881
      %v883 = vpop.f32.mrb[0].mxu0
      %884 = vmatprep.mubr.bf16.mxu0 0
      %885 = vmatmul.mubr.bf16.gmra.mrb[0].mxu0 %v772
      %v886 = vpop.f32.mrb[0].mxu0
      %v887 = vadd.f32 0.0, %v886
      %v888 = vpop.f32.mrb[0].mxu0
      %v889 = vpop.f32.mrb[0].mxu0
      %v890 = vadd.f32 0.0, %v889
      %v891 = vpop.f32.mrb[0].mxu0
      %892 = vmatprep.mubr.bf16.mxu0 0
      %893 = vmatmul.mubr.bf16.gmra.mrb[0].mxu0 %v775
      %v894 = vpop.f32.mrb[0].mxu0
      %v895 = vadd.f32 0.0, %v894
      %v896 = vpop.f32.mrb[0].mxu0
      %v897 = vpop.f32.mrb[0].mxu0
      %v898 = vadd.f32 0.0, %v897
      %v899 = vpop.f32.mrb[0].mxu0
      %900 = vmatprep.mubr.bf16.mxu0 0
      %901 = vmatmul.mubr.bf16.gmra.mrb[0].mxu0 %v778
      %v902 = vpop.f32.mrb[0].mxu0
      %v903 = vadd.f32 0.0, %v902
      %v904 = vpop.f32.mrb[0].mxu0
      %v905 = vpop.f32.mrb[0].mxu0
      %v906 = vadd.f32 0.0, %v905
      %v907 = vpop.f32.mrb[0].mxu0
      %908 = vmatprep.mubr.bf16.mxu0 0
      %909 = vmatmul.mubr.bf16.gmra.mrb[0].mxu0 %v781
      %v910 = vpop.f32.mrb[0].mxu0
      %v911 = vadd.f32 0.0, %v910
      %v912 = vpop.f32.mrb[0].mxu0
      %v913 = vpop.f32.mrb[0].mxu0
      %v914 = vadd.f32 0.0, %v913
      %v915 = vpop.f32.mrb[0].mxu0
      %916 = vmatprep.mubr.bf16.mxu0 0
      %917 = vmatmul.mubr.bf16.gmra.mrb[0].mxu0 %v784
      %v918 = vpop.f32.mrb[0].mxu0
      %v919 = vadd.f32 0.0, %v918
      %v920 = vpop.f32.mrb[0].mxu0
      %v921 = vpop.f32.mrb[0].mxu0
      %v922 = vadd.f32 0.0, %v921
      %v923 = vpop.f32.mrb[0].mxu0
      %924 = vmatprep.mubr.bf16.mxu0 0
      %925 = vmatmul.mubr.bf16.gmra.mrb[0].mxu0 %v787
      %v926 = vpop.f32.mrb[0].mxu0
      %v927 = vadd.f32 0.0, %v926
      %v928 = vpop.f32.mrb[0].mxu0
      %v929 = vpop.f32.mrb[0].mxu0
      %v930 = vadd.f32 0.0, %v929
      %v931 = vpop.f32.mrb[0].mxu0
      %932 = vmatprep.mubr.bf16.mxu0 0
      %933 = vmatmul.mubr.bf16.gmra.mrb[0].mxu0 %v790
      %v934 = vpop.f32.mrb[0].mxu0
      %v935 = vadd.f32 0.0, %v934
      %v936 = vpop.f32.mrb[0].mxu0
      %v937 = vpop.f32.mrb[0].mxu0
      %v938 = vadd.f32 0.0, %v937
      %v939 = vpop.f32.mrb[0].mxu0
      %940 = vmatprep.mubr.bf16.mxu0 0
      %941 = vmatmul.mubr.bf16.gmra.mrb[0].mxu0 %v793
      %v942 = vpop.f32.mrb[0].mxu0
      %v943 = vadd.f32 0.0, %v942
      %v944 = vpop.f32.mrb[0].mxu0
      %v945 = vpop.f32.mrb[0].mxu0
      %v946 = vadd.f32 0.0, %v945
      %v947 = vpop.f32.mrb[0].mxu0
      %948 = vmatprep.mubr.bf16.mxu0 0
      %949 = vmatmul.mubr.bf16.gmra.mrb[0].mxu0 %v796
      %v950 = vpop.f32.mrb[0].mxu0
      %v951 = vadd.f32 0.0, %v950
      %v952 = vpop.f32.mrb[0].mxu0
      %v953 = vpop.f32.mrb[0].mxu0
      %v954 = vadd.f32 0.0, %v953
      %v955 = vpop.f32.mrb[0].mxu0
      %956 = vmatprep.mubr.bf16.mxu0 0
      %957 = vmatmul.mubr.bf16.gmra.mrb[0].mxu0 %v799
      %v958 = vpop.f32.mrb[0].mxu0
      %v959 = vadd.f32 0.0, %v958
      %v960 = vpop.f32.mrb[0].mxu0
      %v961 = vpop.f32.mrb[0].mxu0
      %v962 = vadd.f32 0.0, %v961
      %v963 = vpop.f32.mrb[0].mxu0
      %964 = vdwg.mxu0
      %v965 = vadd.f32 %v601, %v839
      %v966 = vadd.f32 %v602, %v842
      %v967 = vadd.f32 %v603, %v847
      %v968 = vadd.f32 %v604, %v850
      %v969 = vadd.f32 %v605, %v855
      %v970 = vadd.f32 %v606, %v858
      %v971 = vadd.f32 %v607, %v863
      %v972 = vadd.f32 %v608, %v866
      %v973 = vadd.f32 %v609, %v871
      %v974 = vadd.f32 %v610, %v874
      %v975 = vadd.f32 %v611, %v879
      %v976 = vadd.f32 %v612, %v882
      %v977 = vadd.f32 %v613, %v887
      %v978 = vadd.f32 %v614, %v890
      %v979 = vadd.f32 %v615, %v895
      %v980 = vadd.f32 %v616, %v898
      %v981 = vadd.f32 %v617, %v903
      %v982 = vadd.f32 %v618, %v906
      %v983 = vadd.f32 %v619, %v911
      %v984 = vadd.f32 %v620, %v914
      %v985 = vadd.f32 %v621, %v919
      %v986 = vadd.f32 %v622, %v922
      %v987 = vadd.f32 %v623, %v927
      %v988 = vadd.f32 %v624, %v930
      %v989 = vadd.f32 %v625, %v935
      %v990 = vadd.f32 %v626, %v938
      %v991 = vadd.f32 %v627, %v943
      %v992 = vadd.f32 %v628, %v946
      %v993 = vadd.f32 %v629, %v951
      %v994 = vadd.f32 %v630, %v954
      %v995 = vadd.f32 %v631, %v959
      %v996 = vadd.f32 %v632, %v962
      %997 = vst [vmem:[#allocation2] sm:$0xff] %v965
      %998 = vst [vmem:[#allocation2 + $0x8] sm:$0xff] %v966
      %999 = vst [vmem:[#allocation2 + $0x10] sm:$0xff] %v967
      %1000 = vst [vmem:[#allocation2 + $0x18] sm:$0xff] %v968
      %1001 = vst [vmem:[#allocation2 + $0x20] sm:$0xff] %v969
      %1002 = vst [vmem:[#allocation2 + $0x28] sm:$0xff] %v970
      %1003 = vst [vmem:[#allocation2 + $0x30] sm:$0xff] %v971
      %1004 = vst [vmem:[#allocation2 + $0x38] sm:$0xff] %v972
      %1005 = vst [vmem:[#allocation2 + $0x40] sm:$0xff] %v973
      %1006 = vst [vmem:[#allocation2 + $0x48] sm:$0xff] %v974
      %1007 = vst [vmem:[#allocation2 + $0x50] sm:$0xff] %v975
      %1008 = vst [vmem:[#allocation2 + $0x58] sm:$0xff] %v976
      %1009 = vst [vmem:[#allocation2 + $0x60] sm:$0xff] %v977
      %1010 = vst [vmem:[#allocation2 + $0x68] sm:$0xff] %v978
      %1011 = vst [vmem:[#allocation2 + $0x70] sm:$0xff] %v979
      %1012 = vst [vmem:[#allocation2 + $0x78] sm:$0xff] %v980
      %1013 = vst [vmem:[#allocation2 + $0x80] sm:$0xff] %v981
      %1014 = vst [vmem:[#allocation2 + $0x88] sm:$0xff] %v982
      %1015 = vst [vmem:[#allocation2 + $0x90] sm:$0xff] %v983
      %1016 = vst [vmem:[#allocation2 + $0x98] sm:$0xff] %v984
      %1017 = vst [vmem:[#allocation2 + $0xa0] sm:$0xff] %v985
      %1018 = vst [vmem:[#allocation2 + $0xa8] sm:$0xff] %v986
      %1019 = vst [vmem:[#allocation2 + $0xb0] sm:$0xff] %v987
      %1020 = vst [vmem:[#allocation2 + $0xb8] sm:$0xff] %v988
      %1021 = vst [vmem:[#allocation2 + $0xc0] sm:$0xff] %v989
      %1022 = vst [vmem:[#allocation2 + $0xc8] sm:$0xff] %v990
      %1023 = vst [vmem:[#allocation2 + $0xd0] sm:$0xff] %v991
      %1024 = vst [vmem:[#allocation2 + $0xd8] sm:$0xff] %v992
      %1025 = vst [vmem:[#allocation2 + $0xe0] sm:$0xff] %v993
      %1026 = vst [vmem:[#allocation2 + $0xe8] sm:$0xff] %v994
      %1027 = vst [vmem:[#allocation2 + $0xf0] sm:$0xff] %v995
      %1028 = vst [vmem:[#allocation2 + $0xf8] sm:$0xff] %v996
      %v1029 = vld [vmem:[#allocation2] sm:$0xff]
      %v1030 = vld [vmem:[#allocation2 + $0x8] sm:$0xff]
      %v1031 = vld [vmem:[#allocation2 + $0x10] sm:$0xff]
      %v1032 = vld [vmem:[#allocation2 + $0x18] sm:$0xff]
      %v1033 = vld [vmem:[#allocation2 + $0x20] sm:$0xff]
      %v1034 = vld [vmem:[#allocation2 + $0x28] sm:$0xff]
      %v1035 = vld [vmem:[#allocation2 + $0x30] sm:$0xff]
      %v1036 = vld [vmem:[#allocation2 + $0x38] sm:$0xff]
      %v1037 = vld [vmem:[#allocation2 + $0x40] sm:$0xff]
      %v1038 = vld [vmem:[#allocation2 + $0x48] sm:$0xff]
      %v1039 = vld [vmem:[#allocation2 + $0x50] sm:$0xff]
      %v1040 = vld [vmem:[#allocation2 + $0x58] sm:$0xff]
      %v1041 = vld [vmem:[#allocation2 + $0x60] sm:$0xff]
      %v1042 = vld [vmem:[#allocation2 + $0x68] sm:$0xff]
      %v1043 = vld [vmem:[#allocation2 + $0x70] sm:$0xff]
      %v1044 = vld [vmem:[#allocation2 + $0x78] sm:$0xff]
      %v1045 = vld [vmem:[#allocation2 + $0x80] sm:$0xff]
      %v1046 = vld [vmem:[#allocation2 + $0x88] sm:$0xff]
      %v1047 = vld [vmem:[#allocation2 + $0x90] sm:$0xff]
      %v1048 = vld [vmem:[#allocation2 + $0x98] sm:$0xff]
      %v1049 = vld [vmem:[#allocation2 + $0xa0] sm:$0xff]
      %v1050 = vld [vmem:[#allocation2 + $0xa8] sm:$0xff]
      %v1051 = vld [vmem:[#allocation2 + $0xb0] sm:$0xff]
      %v1052 = vld [vmem:[#allocation2 + $0xb8] sm:$0xff]
      %v1053 = vld [vmem:[#allocation2 + $0xc0] sm:$0xff]
      %v1054 = vld [vmem:[#allocation2 + $0xc8] sm:$0xff]
      %v1055 = vld [vmem:[#allocation2 + $0xd0] sm:$0xff]
      %v1056 = vld [vmem:[#allocation2 + $0xd8] sm:$0xff]
      %v1057 = vld [vmem:[#allocation2 + $0xe0] sm:$0xff]
      %v1058 = vld [vmem:[#allocation2 + $0xe8] sm:$0xff]
      %v1059 = vld [vmem:[#allocation2 + $0xf0] sm:$0xff]
      %v1060 = vld [vmem:[#allocation2 + $0xf8] sm:$0xff]
      %v1061 = vld [vmem:[%s224 + $0x10] sm:$0xf]
      %v1062 = vld [vmem:[%s224 + $0x14] sm:$0xf]
      %v1063 = vld [vmem:[%s224 + $0x18] sm:$0xf]
      %v1064 = vld [vmem:[%s224 + $0x1c] sm:$0xf]
      %v1065 = vld [vmem:[%s224 + $0x20] sm:$0xf]
      %v1066 = vld [vmem:[%s224 + $0x24] sm:$0xf]
      %v1067 = vld [vmem:[%s224 + $0x28] sm:$0xf]
      %v1068 = vld [vmem:[%s224 + $0x2c] sm:$0xf]
      %v1069 = vld [vmem:[%s224 + $0x30] sm:$0xf]
      %v1070 = vld [vmem:[%s224 + $0x34] sm:$0xf]
      %v1071 = vld [vmem:[%s224 + $0x38] sm:$0xf]
      %v1072 = vld [vmem:[%s224 + $0x3c] sm:$0xf]
      %v1073 = vld [vmem:[%s224 + $0x40] sm:$0xf]
      %v1074 = vld [vmem:[%s224 + $0x44] sm:$0xf]
      %v1075 = vld [vmem:[%s224 + $0x48] sm:$0xf]
      %v1076 = vld [vmem:[%s224 + $0x4c] sm:$0xf]
      %v1077 = vld [vmem:[%s224 + $0x50] sm:$0xf]
      %v1078 = vld [vmem:[%s224 + $0x54] sm:$0xf]
      %v1079 = vld [vmem:[%s224 + $0x58] sm:$0xf]
      %v1080 = vld [vmem:[%s224 + $0x5c] sm:$0xf]
      %v1081 = vld [vmem:[%s224 + $0x60] sm:$0xf]
      %v1082 = vld [vmem:[%s224 + $0x64] sm:$0xf]
      %v1083 = vld [vmem:[%s224 + $0x68] sm:$0xf]
      %v1084 = vld [vmem:[%s224 + $0x6c] sm:$0xf]
      %v1085 = vld [vmem:[%s224 + $0x70] sm:$0xf]
      %v1086 = vld [vmem:[%s224 + $0x74] sm:$0xf]
      %v1087 = vld [vmem:[%s224 + $0x78] sm:$0xf]
      %v1088 = vld [vmem:[%s224 + $0x7c] sm:$0xf]
      %v1089 = vld [vmem:[%s224 + $0x80] sm:$0xf]
      %v1090 = vld [vmem:[%s224 + $0x84] sm:$0xf]
      %v1091 = vld [vmem:[%s224 + $0x88] sm:$0xf]
      %v1092 = vld [vmem:[%s224 + $0x8c] sm:$0xf]
      %s1093 = scalar_lea.vmem %s1, 16
      %v1094 = vld [vmem:[%s1093] sm:$0xf]
      %v1095 = vld [vmem:[%s1093 + $0x4] sm:$0x3]
      %v1128 = vunpack.c.l.b16 %v1061
      %v1129 = vunpack.c.l.b16 %v1062
      %v1130 = vunpack.c.l.b16 %v1063
      %v1131 = vunpack.c.l.b16 %v1064
      %v1132 = vunpack.c.l.b16 %v1065
      %v1133 = vunpack.c.l.b16 %v1066
      %v1134 = vunpack.c.l.b16 %v1067
      %v1135 = vunpack.c.l.b16 %v1068
      %v1136 = vunpack.c.l.b16 %v1069
      %v1137 = vunpack.c.l.b16 %v1070
      %v1138 = vunpack.c.l.b16 %v1071
      %v1139 = vunpack.c.l.b16 %v1072
      %v1140 = vunpack.c.l.b16 %v1073
      %v1141 = vunpack.c.l.b16 %v1074
      %v1142 = vunpack.c.l.b16 %v1075
      %v1143 = vunpack.c.l.b16 %v1076
      %v1144 = vunpack.c.l.b16 %v1077
      %v1145 = vunpack.c.l.b16 %v1078
      %v1146 = vunpack.c.l.b16 %v1079
      %v1147 = vunpack.c.l.b16 %v1080
      %v1148 = vunpack.c.l.b16 %v1081
      %v1149 = vunpack.c.l.b16 %v1082
      %v1150 = vunpack.c.l.b16 %v1083
      %v1151 = vunpack.c.l.b16 %v1084
      %v1152 = vunpack.c.l.b16 %v1085
      %v1153 = vunpack.c.l.b16 %v1086
      %v1154 = vunpack.c.l.b16 %v1087
      %v1155 = vunpack.c.l.b16 %v1088
      %v1156 = vunpack.c.l.b16 %v1089
      %v1157 = vunpack.c.l.b16 %v1090
      %v1158 = vunpack.c.l.b16 %v1091
      %v1159 = vunpack.c.l.b16 %v1092
      %v1160 = vpack.c.b16 %v1129, %v1128
      %v1161 = vpack.c.b16 %v1131, %v1130
      %v1162 = vpack.c.b16 %v1133, %v1132
      %v1163 = vpack.c.b16 %v1135, %v1134
      %v1164 = vpack.c.b16 %v1137, %v1136
      %v1165 = vpack.c.b16 %v1139, %v1138
      %v1166 = vpack.c.b16 %v1141, %v1140
      %v1167 = vpack.c.b16 %v1143, %v1142
      %v1168 = vpack.c.b16 %v1145, %v1144
      %v1169 = vpack.c.b16 %v1147, %v1146
      %v1170 = vpack.c.b16 %v1149, %v1148
      %v1171 = vpack.c.b16 %v1151, %v1150
      %v1172 = vpack.c.b16 %v1153, %v1152
      %v1173 = vpack.c.b16 %v1155, %v1154
      %v1174 = vpack.c.b16 %v1157, %v1156
      %v1175 = vpack.c.b16 %v1159, %v1158
      %v1178 = vunpack.c.l.b16 %v1094
      %v1179 = vunpack.c.l.b16 %v1095
      %v1180 = vpack.c.b16 %v1179, %v1178
      %v1182 = vsel %vm355, %v1160, 0
      %v1185 = vsel %vm355, %v1161, 0
      %v1188 = vsel %vm355, %v1162, 0
      %v1191 = vsel %vm355, %v1163, 0
      %v1194 = vsel %vm355, %v1164, 0
      %v1197 = vsel %vm355, %v1165, 0
      %v1200 = vsel %vm355, %v1166, 0
      %v1203 = vsel %vm355, %v1167, 0
      %v1206 = vsel %vm355, %v1168, 0
      %v1209 = vsel %vm355, %v1169, 0
      %v1212 = vsel %vm355, %v1170, 0
      %v1215 = vsel %vm355, %v1171, 0
      %v1218 = vsel %vm355, %v1172, 0
      %v1221 = vsel %vm355, %v1173, 0
      %v1224 = vsel %vm355, %v1174, 0
      %v1227 = vsel %vm355, %v1175, 0
      %v1230 = vsel %vm404, %v1180, 0
      %1232 = vmatprep.subr.bf16.mxu0 0
      %1233 = vmatpush1.bf16.msra.mxu0 %v1230
      %1234 = vmatprep.subr.bf16.mxu0 0
      %1235 = vmatpush1.bf16.msra.mxu0 0
      %1236 = vmatprep.subr.bf16.mxu0 0
      %1237 = vmatpush1.bf16.msra.mxu0 0
      %1238 = vmatprep.subr.bf16.mxu0 0
      %1239 = vmatpush1.bf16.msra.mxu0 0
      %1240 = vmatprep.subr.bf16.mxu0 0
      %1241 = vmatpush1.bf16.msra.mxu0 0
      %1242 = vmatprep.subr.bf16.mxu0 0
      %1243 = vmatpush1.bf16.msra.mxu0 0
      %1244 = vmatprep.subr.bf16.mxu0 0
      %1245 = vmatpush1.bf16.msra.mxu0 0
      %1246 = vmatprep.subr.bf16.mxu0 0
      %1247 = vmatpush1.bf16.msra.mxu0 0
      %1248 = vmatprep.subr.bf16.mxu0 0
      %1249 = vmatpush1.bf16.msra.mxu0 0
      %1250 = vmatprep.subr.bf16.mxu0 0
      %1251 = vmatpush1.bf16.msra.mxu0 0
      %1252 = vmatprep.subr.bf16.mxu0 0
      %1253 = vmatpush1.bf16.msra.mxu0 0
      %1254 = vmatprep.subr.bf16.mxu0 0
      %1255 = vmatpush1.bf16.msra.mxu0 0
      %1256 = vmatprep.subr.bf16.mxu0 0
      %1257 = vmatpush1.bf16.msra.mxu0 0
      %1258 = vmatprep.subr.bf16.mxu0 0
      %1259 = vmatpush1.bf16.msra.mxu0 0
      %1260 = vmatprep.subr.bf16.mxu0 0
      %1261 = vmatpush1.bf16.msra.mxu0 0
      %1262 = vmatprep.subr.bf16.mxu0 0
      %1263 = vmatpush1.bf16.msra.mxu0 0
      %1264 = vmatprep.mubr.bf16.mxu0 0
      %1265 = vmatmul.mubr.bf16.gmra.mrb[0].mxu0 %v1182
      %v1266 = vpop.f32.mrb[0].mxu0
      %v1267 = vadd.f32 0.0, %v1266
      %v1268 = vpop.f32.mrb[0].mxu0
      %v1269 = vpop.f32.mrb[0].mxu0
      %v1270 = vadd.f32 0.0, %v1269
      %v1271 = vpop.f32.mrb[0].mxu0
      %1272 = vmatprep.mubr.bf16.mxu0 0
      %1273 = vmatmul.mubr.bf16.gmra.mrb[0].mxu0 %v1185
      %v1274 = vpop.f32.mrb[0].mxu0
      %v1275 = vadd.f32 0.0, %v1274
      %v1276 = vpop.f32.mrb[0].mxu0
      %v1277 = vpop.f32.mrb[0].mxu0
      %v1278 = vadd.f32 0.0, %v1277
      %v1279 = vpop.f32.mrb[0].mxu0
      %1280 = vmatprep.mubr.bf16.mxu0 0
      %1281 = vmatmul.mubr.bf16.gmra.mrb[0].mxu0 %v1188
      %v1282 = vpop.f32.mrb[0].mxu0
      %v1283 = vadd.f32 0.0, %v1282
      %v1284 = vpop.f32.mrb[0].mxu0
      %v1285 = vpop.f32.mrb[0].mxu0
      %v1286 = vadd.f32 0.0, %v1285
      %v1287 = vpop.f32.mrb[0].mxu0
      %1288 = vmatprep.mubr.bf16.mxu0 0
      %1289 = vmatmul.mubr.bf16.gmra.mrb[0].mxu0 %v1191
      %v1290 = vpop.f32.mrb[0].mxu0
      %v1291 = vadd.f32 0.0, %v1290
      %v1292 = vpop.f32.mrb[0].mxu0
      %v1293 = vpop.f32.mrb[0].mxu0
      %v1294 = vadd.f32 0.0, %v1293
      %v1295 = vpop.f32.mrb[0].mxu0
      %1296 = vmatprep.mubr.bf16.mxu0 0
      %1297 = vmatmul.mubr.bf16.gmra.mrb[0].mxu0 %v1194
      %v1298 = vpop.f32.mrb[0].mxu0
      %v1299 = vadd.f32 0.0, %v1298
      %v1300 = vpop.f32.mrb[0].mxu0
      %v1301 = vpop.f32.mrb[0].mxu0
      %v1302 = vadd.f32 0.0, %v1301
      %v1303 = vpop.f32.mrb[0].mxu0
      %1304 = vmatprep.mubr.bf16.mxu0 0
      %1305 = vmatmul.mubr.bf16.gmra.mrb[0].mxu0 %v1197
      %v1306 = vpop.f32.mrb[0].mxu0
      %v1307 = vadd.f32 0.0, %v1306
      %v1308 = vpop.f32.mrb[0].mxu0
      %v1309 = vpop.f32.mrb[0].mxu0
      %v1310 = vadd.f32 0.0, %v1309
      %v1311 = vpop.f32.mrb[0].mxu0
      %1312 = vmatprep.mubr.bf16.mxu0 0
      %1313 = vmatmul.mubr.bf16.gmra.mrb[0].mxu0 %v1200
      %v1314 = vpop.f32.mrb[0].mxu0
      %v1315 = vadd.f32 0.0, %v1314
      %v1316 = vpop.f32.mrb[0].mxu0
      %v1317 = vpop.f32.mrb[0].mxu0
      %v1318 = vadd.f32 0.0, %v1317
      %v1319 = vpop.f32.mrb[0].mxu0
      %1320 = vmatprep.mubr.bf16.mxu0 0
      %1321 = vmatmul.mubr.bf16.gmra.mrb[0].mxu0 %v1203
      %v1322 = vpop.f32.mrb[0].mxu0
      %v1323 = vadd.f32 0.0, %v1322
      %v1324 = vpop.f32.mrb[0].mxu0
      %v1325 = vpop.f32.mrb[0].mxu0
      %v1326 = vadd.f32 0.0, %v1325
      %v1327 = vpop.f32.mrb[0].mxu0
      %1328 = vmatprep.mubr.bf16.mxu0 0
      %1329 = vmatmul.mubr.bf16.gmra.mrb[0].mxu0 %v1206
      %v1330 = vpop.f32.mrb[0].mxu0
      %v1331 = vadd.f32 0.0, %v1330
      %v1332 = vpop.f32.mrb[0].mxu0
      %v1333 = vpop.f32.mrb[0].mxu0
      %v1334 = vadd.f32 0.0, %v1333
      %v1335 = vpop.f32.mrb[0].mxu0
      %1336 = vmatprep.mubr.bf16.mxu0 0
      %1337 = vmatmul.mubr.bf16.gmra.mrb[0].mxu0 %v1209
      %v1338 = vpop.f32.mrb[0].mxu0
      %v1339 = vadd.f32 0.0, %v1338
      %v1340 = vpop.f32.mrb[0].mxu0
      %v1341 = vpop.f32.mrb[0].mxu0
      %v1342 = vadd.f32 0.0, %v1341
      %v1343 = vpop.f32.mrb[0].mxu0
      %1344 = vmatprep.mubr.bf16.mxu0 0
      %1345 = vmatmul.mubr.bf16.gmra.mrb[0].mxu0 %v1212
      %v1346 = vpop.f32.mrb[0].mxu0
      %v1347 = vadd.f32 0.0, %v1346
      %v1348 = vpop.f32.mrb[0].mxu0
      %v1349 = vpop.f32.mrb[0].mxu0
      %v1350 = vadd.f32 0.0, %v1349
      %v1351 = vpop.f32.mrb[0].mxu0
      %1352 = vmatprep.mubr.bf16.mxu0 0
      %1353 = vmatmul.mubr.bf16.gmra.mrb[0].mxu0 %v1215
      %v1354 = vpop.f32.mrb[0].mxu0
      %v1355 = vadd.f32 0.0, %v1354
      %v1356 = vpop.f32.mrb[0].mxu0
      %v1357 = vpop.f32.mrb[0].mxu0
      %v1358 = vadd.f32 0.0, %v1357
      %v1359 = vpop.f32.mrb[0].mxu0
      %1360 = vmatprep.mubr.bf16.mxu0 0
      %1361 = vmatmul.mubr.bf16.gmra.mrb[0].mxu0 %v1218
      %v1362 = vpop.f32.mrb[0].mxu0
      %v1363 = vadd.f32 0.0, %v1362
      %v1364 = vpop.f32.mrb[0].mxu0
      %v1365 = vpop.f32.mrb[0].mxu0
      %v1366 = vadd.f32 0.0, %v1365
      %v1367 = vpop.f32.mrb[0].mxu0
      %1368 = vmatprep.mubr.bf16.mxu0 0
      %1369 = vmatmul.mubr.bf16.gmra.mrb[0].mxu0 %v1221
      %v1370 = vpop.f32.mrb[0].mxu0
      %v1371 = vadd.f32 0.0, %v1370
      %v1372 = vpop.f32.mrb[0].mxu0
      %v1373 = vpop.f32.mrb[0].mxu0
      %v1374 = vadd.f32 0.0, %v1373
      %v1375 = vpop.f32.mrb[0].mxu0
      %1376 = vmatprep.mubr.bf16.mxu0 0
      %1377 = vmatmul.mubr.bf16.gmra.mrb[0].mxu0 %v1224
      %v1378 = vpop.f32.mrb[0].mxu0
      %v1379 = vadd.f32 0.0, %v1378
      %v1380 = vpop.f32.mrb[0].mxu0
      %v1381 = vpop.f32.mrb[0].mxu0
      %v1382 = vadd.f32 0.0, %v1381
      %v1383 = vpop.f32.mrb[0].mxu0
      %1384 = vmatprep.mubr.bf16.mxu0 0
      %1385 = vmatmul.mubr.bf16.gmra.mrb[0].mxu0 %v1227
      %v1386 = vpop.f32.mrb[0].mxu0
      %v1387 = vadd.f32 0.0, %v1386
      %v1388 = vpop.f32.mrb[0].mxu0
      %v1389 = vpop.f32.mrb[0].mxu0
      %v1390 = vadd.f32 0.0, %v1389
      %v1391 = vpop.f32.mrb[0].mxu0
      %1392 = vdwg.mxu0
      %v1393 = vadd.f32 %v1029, %v1267
      %v1394 = vadd.f32 %v1030, %v1270
      %v1395 = vadd.f32 %v1031, %v1275
      %v1396 = vadd.f32 %v1032, %v1278
      %v1397 = vadd.f32 %v1033, %v1283
      %v1398 = vadd.f32 %v1034, %v1286
      %v1399 = vadd.f32 %v1035, %v1291
      %v1400 = vadd.f32 %v1036, %v1294
      %v1401 = vadd.f32 %v1037, %v1299
      %v1402 = vadd.f32 %v1038, %v1302
      %v1403 = vadd.f32 %v1039, %v1307
      %v1404 = vadd.f32 %v1040, %v1310
      %v1405 = vadd.f32 %v1041, %v1315
      %v1406 = vadd.f32 %v1042, %v1318
      %v1407 = vadd.f32 %v1043, %v1323
      %v1408 = vadd.f32 %v1044, %v1326
      %v1409 = vadd.f32 %v1045, %v1331
      %v1410 = vadd.f32 %v1046, %v1334
      %v1411 = vadd.f32 %v1047, %v1339
      %v1412 = vadd.f32 %v1048, %v1342
      %v1413 = vadd.f32 %v1049, %v1347
      %v1414 = vadd.f32 %v1050, %v1350
      %v1415 = vadd.f32 %v1051, %v1355
      %v1416 = vadd.f32 %v1052, %v1358
      %v1417 = vadd.f32 %v1053, %v1363
      %v1418 = vadd.f32 %v1054, %v1366
      %v1419 = vadd.f32 %v1055, %v1371
      %v1420 = vadd.f32 %v1056, %v1374
      %v1421 = vadd.f32 %v1057, %v1379
      %v1422 = vadd.f32 %v1058, %v1382
      %v1423 = vadd.f32 %v1059, %v1387
      %v1424 = vadd.f32 %v1060, %v1390
      %1425 = vst [vmem:[#allocation2] sm:$0xff] %v1393
      %1426 = vst [vmem:[#allocation2 + $0x8] sm:$0xff] %v1394
      %1427 = vst [vmem:[#allocation2 + $0x10] sm:$0xff] %v1395
      %1428 = vst [vmem:[#allocation2 + $0x18] sm:$0xff] %v1396
      %1429 = vst [vmem:[#allocation2 + $0x20] sm:$0xff] %v1397
      %1430 = vst [vmem:[#allocation2 + $0x28] sm:$0xff] %v1398
      %1431 = vst [vmem:[#allocation2 + $0x30] sm:$0xff] %v1399
      %1432 = vst [vmem:[#allocation2 + $0x38] sm:$0xff] %v1400
      %1433 = vst [vmem:[#allocation2 + $0x40] sm:$0xff] %v1401
      %1434 = vst [vmem:[#allocation2 + $0x48] sm:$0xff] %v1402
      %1435 = vst [vmem:[#allocation2 + $0x50] sm:$0xff] %v1403
      %1436 = vst [vmem:[#allocation2 + $0x58] sm:$0xff] %v1404
      %1437 = vst [vmem:[#allocation2 + $0x60] sm:$0xff] %v1405
      %1438 = vst [vmem:[#allocation2 + $0x68] sm:$0xff] %v1406
      %1439 = vst [vmem:[#allocation2 + $0x70] sm:$0xff] %v1407
      %1440 = vst [vmem:[#allocation2 + $0x78] sm:$0xff] %v1408
      %1441 = vst [vmem:[#allocation2 + $0x80] sm:$0xff] %v1409
      %1442 = vst [vmem:[#allocation2 + $0x88] sm:$0xff] %v1410
      %1443 = vst [vmem:[#allocation2 + $0x90] sm:$0xff] %v1411
      %1444 = vst [vmem:[#allocation2 + $0x98] sm:$0xff] %v1412
      %1445 = vst [vmem:[#allocation2 + $0xa0] sm:$0xff] %v1413
      %1446 = vst [vmem:[#allocation2 + $0xa8] sm:$0xff] %v1414
      %1447 = vst [vmem:[#allocation2 + $0xb0] sm:$0xff] %v1415
      %1448 = vst [vmem:[#allocation2 + $0xb8] sm:$0xff] %v1416
      %1449 = vst [vmem:[#allocation2 + $0xc0] sm:$0xff] %v1417
      %1450 = vst [vmem:[#allocation2 + $0xc8] sm:$0xff] %v1418
      %1451 = vst [vmem:[#allocation2 + $0xd0] sm:$0xff] %v1419
      %1452 = vst [vmem:[#allocation2 + $0xd8] sm:$0xff] %v1420
      %1453 = vst [vmem:[#allocation2 + $0xe0] sm:$0xff] %v1421
      %1454 = vst [vmem:[#allocation2 + $0xe8] sm:$0xff] %v1422
      %1455 = vst [vmem:[#allocation2 + $0xf0] sm:$0xff] %v1423
      %1456 = vst [vmem:[#allocation2 + $0xf8] sm:$0xff] %v1424
      %v1457 = vld [vmem:[#allocation2] sm:$0xff]
      %v1458 = vld [vmem:[#allocation2 + $0x8] sm:$0xff]
      %v1459 = vld [vmem:[#allocation2 + $0x10] sm:$0xff]
      %v1460 = vld [vmem:[#allocation2 + $0x18] sm:$0xff]
      %v1461 = vld [vmem:[#allocation2 + $0x20] sm:$0xff]
      %v1462 = vld [vmem:[#allocation2 + $0x28] sm:$0xff]
      %v1463 = vld [vmem:[#allocation2 + $0x30] sm:$0xff]
      %v1464 = vld [vmem:[#allocation2 + $0x38] sm:$0xff]
      %v1465 = vld [vmem:[#allocation2 + $0x40] sm:$0xff]
      %v1466 = vld [vmem:[#allocation2 + $0x48] sm:$0xff]
      %v1467 = vld [vmem:[#allocation2 + $0x50] sm:$0xff]
      %v1468 = vld [vmem:[#allocation2 + $0x58] sm:$0xff]
      %v1469 = vld [vmem:[#allocation2 + $0x60] sm:$0xff]
      %v1470 = vld [vmem:[#allocation2 + $0x68] sm:$0xff]
      %v1471 = vld [vmem:[#allocation2 + $0x70] sm:$0xff]
      %v1472 = vld [vmem:[#allocation2 + $0x78] sm:$0xff]
      %v1473 = vld [vmem:[#allocation2 + $0x80] sm:$0xff]
      %v1474 = vld [vmem:[#allocation2 + $0x88] sm:$0xff]
      %v1475 = vld [vmem:[#allocation2 + $0x90] sm:$0xff]
      %v1476 = vld [vmem:[#allocation2 + $0x98] sm:$0xff]
      %v1477 = vld [vmem:[#allocation2 + $0xa0] sm:$0xff]
      %v1478 = vld [vmem:[#allocation2 + $0xa8] sm:$0xff]
      %v1479 = vld [vmem:[#allocation2 + $0xb0] sm:$0xff]
      %v1480 = vld [vmem:[#allocation2 + $0xb8] sm:$0xff]
      %v1481 = vld [vmem:[#allocation2 + $0xc0] sm:$0xff]
      %v1482 = vld [vmem:[#allocation2 + $0xc8] sm:$0xff]
      %v1483 = vld [vmem:[#allocation2 + $0xd0] sm:$0xff]
      %v1484 = vld [vmem:[#allocation2 + $0xd8] sm:$0xff]
      %v1485 = vld [vmem:[#allocation2 + $0xe0] sm:$0xff]
      %v1486 = vld [vmem:[#allocation2 + $0xe8] sm:$0xff]
      %v1487 = vld [vmem:[#allocation2 + $0xf0] sm:$0xff]
      %v1488 = vld [vmem:[#allocation2 + $0xf8] sm:$0xff]
      %v1489 = vld [vmem:[%s2] sm:$0x1]
      %v1491 = vlaneseq
      %v1492 = vshrl.u32 %v1491, 7
      %v1493 = vsub.s32 0, %v1492
      %v1494 = vrot.slane %v1489, %v1493
      %v1496 = vmul.f32 %v1457, %v1494
      %v1497 = vmul.f32 %v1458, %v1494
      %v1498 = vmul.f32 %v1459, %v1494
      %v1499 = vmul.f32 %v1460, %v1494
      %v1500 = vmul.f32 %v1461, %v1494
      %v1501 = vmul.f32 %v1462, %v1494
      %v1502 = vmul.f32 %v1463, %v1494
      %v1503 = vmul.f32 %v1464, %v1494
      %v1504 = vmul.f32 %v1465, %v1494
      %v1505 = vmul.f32 %v1466, %v1494
      %v1506 = vmul.f32 %v1467, %v1494
      %v1507 = vmul.f32 %v1468, %v1494
      %v1508 = vmul.f32 %v1469, %v1494
      %v1509 = vmul.f32 %v1470, %v1494
      %v1510 = vmul.f32 %v1471, %v1494
      %v1511 = vmul.f32 %v1472, %v1494
      %v1512 = vmul.f32 %v1473, %v1494
      %v1513 = vmul.f32 %v1474, %v1494
      %v1514 = vmul.f32 %v1475, %v1494
      %v1515 = vmul.f32 %v1476, %v1494
      %v1516 = vmul.f32 %v1477, %v1494
      %v1517 = vmul.f32 %v1478, %v1494
      %v1518 = vmul.f32 %v1479, %v1494
      %v1519 = vmul.f32 %v1480, %v1494
      %v1520 = vmul.f32 %v1481, %v1494
      %v1521 = vmul.f32 %v1482, %v1494
      %v1522 = vmul.f32 %v1483, %v1494
      %v1523 = vmul.f32 %v1484, %v1494
      %v1524 = vmul.f32 %v1485, %v1494
      %v1525 = vmul.f32 %v1486, %v1494
      %v1526 = vmul.f32 %v1487, %v1494
      %v1527 = vmul.f32 %v1488, %v1494
      %v1528 = vld [vmem:[%s3] sm:$0x1]
      %v1530 = vlaneseq
      %v1531 = vshrl.u32 %v1530, 7
      %v1532 = vsub.s32 0, %v1531
      %v1533 = vrot.slane %v1528, %v1532
      %v1535 = vadd.f32 %v1496, %v1533
      %v1536 = vadd.f32 %v1497, %v1533
      %v1537 = vadd.f32 %v1498, %v1533
      %v1538 = vadd.f32 %v1499, %v1533
      %v1539 = vadd.f32 %v1500, %v1533
      %v1540 = vadd.f32 %v1501, %v1533
      %v1541 = vadd.f32 %v1502, %v1533
      %v1542 = vadd.f32 %v1503, %v1533
      %v1543 = vadd.f32 %v1504, %v1533
      %v1544 = vadd.f32 %v1505, %v1533
      %v1545 = vadd.f32 %v1506, %v1533
      %v1546 = vadd.f32 %v1507, %v1533
      %v1547 = vadd.f32 %v1508, %v1533
      %v1548 = vadd.f32 %v1509, %v1533
      %v1549 = vadd.f32 %v1510, %v1533
      %v1550 = vadd.f32 %v1511, %v1533
      %v1551 = vadd.f32 %v1512, %v1533
      %v1552 = vadd.f32 %v1513, %v1533
      %v1553 = vadd.f32 %v1514, %v1533
      %v1554 = vadd.f32 %v1515, %v1533
      %v1555 = vadd.f32 %v1516, %v1533
      %v1556 = vadd.f32 %v1517, %v1533
      %v1557 = vadd.f32 %v1518, %v1533
      %v1558 = vadd.f32 %v1519, %v1533
      %v1559 = vadd.f32 %v1520, %v1533
      %v1560 = vadd.f32 %v1521, %v1533
      %v1561 = vadd.f32 %v1522, %v1533
      %v1562 = vadd.f32 %v1523, %v1533
      %v1563 = vadd.f32 %v1524, %v1533
      %v1564 = vadd.f32 %v1525, %v1533
      %v1565 = vadd.f32 %v1526, %v1533
      %v1566 = vadd.f32 %v1527, %v1533
      %v1567 = vmax.f32 %v1535, 0.0
      %v1568 = vmax.f32 %v1536, 0.0
      %v1569 = vmax.f32 %v1537, 0.0
      %v1570 = vmax.f32 %v1538, 0.0
      %v1571 = vmax.f32 %v1539, 0.0
      %v1572 = vmax.f32 %v1540, 0.0
      %v1573 = vmax.f32 %v1541, 0.0
      %v1574 = vmax.f32 %v1542, 0.0
      %v1575 = vmax.f32 %v1543, 0.0
      %v1576 = vmax.f32 %v1544, 0.0
      %v1577 = vmax.f32 %v1545, 0.0
      %v1578 = vmax.f32 %v1546, 0.0
      %v1579 = vmax.f32 %v1547, 0.0
      %v1580 = vmax.f32 %v1548, 0.0
      %v1581 = vmax.f32 %v1549, 0.0
      %v1582 = vmax.f32 %v1550, 0.0
      %v1583 = vmax.f32 %v1551, 0.0
      %v1584 = vmax.f32 %v1552, 0.0
      %v1585 = vmax.f32 %v1553, 0.0
      %v1586 = vmax.f32 %v1554, 0.0
      %v1587 = vmax.f32 %v1555, 0.0
      %v1588 = vmax.f32 %v1556, 0.0
      %v1589 = vmax.f32 %v1557, 0.0
      %v1590 = vmax.f32 %v1558, 0.0
      %v1591 = vmax.f32 %v1559, 0.0
      %v1592 = vmax.f32 %v1560, 0.0
      %v1593 = vmax.f32 %v1561, 0.0
      %v1594 = vmax.f32 %v1562, 0.0
      %v1595 = vmax.f32 %v1563, 0.0
      %v1596 = vmax.f32 %v1564, 0.0
      %v1597 = vmax.f32 %v1565, 0.0
      %v1598 = vmax.f32 %v1566, 0.0
      %1599 = vxpose.xlu0.b32.start [1/16] %v1567, 128
      %1600 = vxpose.xlu0.b32.cont [2/16] %v1568, 128
      %1601 = vxpose.xlu0.b32.cont [3/16] %v1569, 128
      %1602 = vxpose.xlu0.b32.cont [4/16] %v1570, 128
      %1603 = vxpose.xlu0.b32.cont [5/16] %v1571, 128
      %1604 = vxpose.xlu0.b32.cont [6/16] %v1572, 128
      %1605 = vxpose.xlu0.b32.cont [7/16] %v1573, 128
      %1606 = vxpose.xlu0.b32.cont [8/16] %v1574, 128
      %1607 = vxpose.xlu0.b32.cont [9/16] %v1575, 128
      %1608 = vxpose.xlu0.b32.cont [10/16] %v1576, 128
      %1609 = vxpose.xlu0.b32.cont [11/16] %v1577, 128
      %1610 = vxpose.xlu0.b32.cont [12/16] %v1578, 128
      %1611 = vxpose.xlu0.b32.cont [13/16] %v1579, 128
      %1612 = vxpose.xlu0.b32.cont [14/16] %v1580, 128
      %1613 = vxpose.xlu0.b32.cont [15/16] %v1581, 128
      %1614 = vxpose.xlu0.b32.end [16/16] %v1582, 128
      %v1615 = vpop.trf.xlu0
      %v1616 = vpop.trf.xlu0
      %v1617 = vpop.trf.xlu0
      %v1618 = vpop.trf.xlu0
      %v1619 = vpop.trf.xlu0
      %v1620 = vpop.trf.xlu0
      %v1621 = vpop.trf.xlu0
      %v1622 = vpop.trf.xlu0
      %v1623 = vpop.trf.xlu0
      %v1624 = vpop.trf.xlu0
      %v1625 = vpop.trf.xlu0
      %v1626 = vpop.trf.xlu0
      %v1627 = vpop.trf.xlu0
      %v1628 = vpop.trf.xlu0
      %v1629 = vpop.trf.xlu0
      %v1630 = vpop.trf.xlu0
      %1631 = vxpose.xlu0.b32.start [1/16] %v1583, 128
      %1632 = vxpose.xlu0.b32.cont [2/16] %v1584, 128
      %1633 = vxpose.xlu0.b32.cont [3/16] %v1585, 128
      %1634 = vxpose.xlu0.b32.cont [4/16] %v1586, 128
      %1635 = vxpose.xlu0.b32.cont [5/16] %v1587, 128
      %1636 = vxpose.xlu0.b32.cont [6/16] %v1588, 128
      %1637 = vxpose.xlu0.b32.cont [7/16] %v1589, 128
      %1638 = vxpose.xlu0.b32.cont [8/16] %v1590, 128
      %1639 = vxpose.xlu0.b32.cont [9/16] %v1591, 128
      %1640 = vxpose.xlu0.b32.cont [10/16] %v1592, 128
      %1641 = vxpose.xlu0.b32.cont [11/16] %v1593, 128
      %1642 = vxpose.xlu0.b32.cont [12/16] %v1594, 128
      %1643 = vxpose.xlu0.b32.cont [13/16] %v1595, 128
      %1644 = vxpose.xlu0.b32.cont [14/16] %v1596, 128
      %1645 = vxpose.xlu0.b32.cont [15/16] %v1597, 128
      %1646 = vxpose.xlu0.b32.end [16/16] %v1598, 128
      %v1647 = vpop.trf.xlu0
      %v1648 = vpop.trf.xlu0
      %v1649 = vpop.trf.xlu0
      %v1650 = vpop.trf.xlu0
      %v1651 = vpop.trf.xlu0
      %v1652 = vpop.trf.xlu0
      %v1653 = vpop.trf.xlu0
      %v1654 = vpop.trf.xlu0
      %v1655 = vpop.trf.xlu0
      %v1656 = vpop.trf.xlu0
      %v1657 = vpop.trf.xlu0
      %v1658 = vpop.trf.xlu0
      %v1659 = vpop.trf.xlu0
      %v1660 = vpop.trf.xlu0
      %v1661 = vpop.trf.xlu0
      %v1662 = vpop.trf.xlu0
      %1663 = vst [vmem:[%s233] sm:$0xff] %v1615
      %1664 = vst [vmem:[%s233 + $0x8] sm:$0xff] %v1647
      %s1665 = smul.u32 2, %s20
      %p1666 = scmp.lt.s32.totalorder %s19, 1
      %s1667 = scalar_select %p1666, %s19, 1
      %p1668 = scmp.lt.s32.totalorder %s1665, 1
      %s1669 = scalar_select %p1668, %s1665, 1
      %s1670 = smul.addr %s1667, 2
      %s1671 = sadd.s32 %s1669, %s1670
      %s1672 = smul.addr %s1671, 8
      %s1673 = scalar_lea.vmem %s4, %s1672
      // Predicated region
      $region37: #{conv_block_forward.3} parent=35 // pred_check
        %p1674 = pneg %p138
      $region38: #{conv_block_forward.3} parent=35 // pred_check_branch
        %1676 = sbr.rel (%p1674) target = $region40
      $region39: #{conv_block_forward.3} parent=35 // pred_region
        %s1677 = smul.u32 2, %s20
      $region40: #{conv_block_forward.3} parent=35 // pred_fallthru
        _
    $region36: #{conv_block_forward.3} parent=5 // pred_fallthru
      _
    %p1678 = scmp.le.s32.totalorder 2, %s10
    // Predicated region
    $region41: #{conv_block_forward.3} parent=5 // pred_check
      %p1679 = pneg %p1678
    $region42: #{conv_block_forward.3} parent=5 // pred_check_branch
      %1681 = sbr.rel (%p1679) target = $region44
    $region43: #{conv_block_forward.3} parent=5 // pred_region
      %s1682 = ssub.s32 %s10, 2
      // Predicated region
      $region45: #{conv_block_forward.3} parent=43 // pred_check
        %p1683 = pneg %p144
      $region46: #{conv_block_forward.3} parent=43 // pred_check_branch
        %1685 = sbr.rel (%p1683) target = $region48
      $region47: #{conv_block_forward.3} parent=43 // pred_region
        %s1686 = smul.u32 2, %s22
        %p1687 = scmp.lt.s32.totalorder %s21, 1
        %s1688 = scalar_select %p1687, %s21, 1
        %p1689 = scmp.lt.s32.totalorder %s1686, 1
        %s1690 = scalar_select %p1689, %s1686, 1
        %s1691 = smul.addr %s1688, 2
        %s1692 = sadd.s32 %s1690, %s1691
        %s1693 = smul.addr %s1692, 8
        %s1694 = scalar_lea.vmem %s4, %s1693
      $region48: #{conv_block_forward.3} parent=43 // pred_fallthru
        _
    $region44: #{conv_block_forward.3} parent=5 // pred_fallthru
      _
  $region6: #{conv_block_forward.3} parent=0 // loop_footer
    %s14 = sadd.s32 1, %s10
  $region7: #{conv_block_forward.3} parent=0 // loop_footer_branch
    %9 = sbr.rel target = $region3
  $region8: #{conv_block_forward.3} parent=0 // loop_exit
    _

</llo_original>
